<compile_context>
chip_gen: v5e
topology: v5e:2x2
jax: 0.10.0
libtpu: 0.0.40
codegen_flags: <defaults>
</compile_context>

<pallas_src>
import functools

import jax
import jax.numpy as jnp
from jax.experimental import pallas as pl
from jax.experimental.pallas import tpu as pltpu


def _skill_effect_kernel(
    tile_b, chunk, bf16_epi,                  # static
    pts_ref, tgt_ref,                         # data tiles
    wt1_ref, wt2_ref, bt2_ref,                # target encoder (bt1 folded into wt1)
    wp1_ref, wp2_ref, bp2_ref, wp3_ref, bp3_ref,   # point encoder (bp1 folded into wp1)
    wf1t_ref, wf1p_ref, bf1_ref, wf2_ref, bf2_ref,  # fusion net (concat folded, split weights)
    wh1_ref, bh1_ref, wh2_ref, bh2_ref,       # fused success/cost heads
    out_ref,                                  # [tile_b, 128] (col 0 = success, col 1 = cost)
    pmax_ref,                                 # scratch: running max-pool [tile_b, 256] bf16
):
    f32, bf16 = jnp.float32, jnp.bfloat16
    k = pl.program_id(1)
    k_last = pl.num_programs(1) - 1

    def bias_relu(x_f32, b_ref):
        # bias + ReLU epilogue; bf16 VALU on v6e/v7x, f32 on v5e (no bf16 VALU there).
        if bf16_epi:
            return jnp.maximum(x_f32.astype(bf16) + b_ref[...].astype(bf16), 0)
        return jnp.maximum(x_f32 + b_ref[...], 0.0).astype(bf16)

    # ---- point encoder on this (batch-tile x point-chunk) block -------------------
    p = pts_ref[...].reshape(tile_b * chunk, 8)               # bf16; lane 3 == 1.0 (bias lane)
    h = jnp.dot(p, wp1_ref[...], preferred_element_type=f32)  # bias folded into wp1 row 3
    if bf16_epi:
        h = jnp.maximum(h.astype(bf16), 0)
    else:
        h = jnp.maximum(h, 0.0).astype(bf16)
    h = bias_relu(jnp.dot(h, wp2_ref[...], preferred_element_type=f32), bp2_ref)
    h = bias_relu(jnp.dot(h, wp3_ref[...], preferred_element_type=f32), bp3_ref)
    # bf16 chunk-wise max-pool (monotone cast => identical to f32 pool + cast).
    chunk_max = jnp.max(h.reshape(tile_b, chunk, 256), axis=1)          # bf16 [tile_b, 256]

    @pl.when(k == 0)
    def _():
        pmax_ref[...] = jnp.zeros_like(pmax_ref)   # ReLU outputs >= 0, so 0-init is exact

    pmax_ref[...] = jnp.maximum(pmax_ref[...], chunk_max)

    # ---- tail: target encoder + fusion + fused heads (once per batch tile) --------
    @pl.when(k == k_last)
    def _():
        t = tgt_ref[...]                                               # bf16; lane 2 == 1.0
        t = jnp.dot(t, wt1_ref[...], preferred_element_type=f32)      # bias folded into wt1 row 2
        t = jnp.maximum(t, 0.0).astype(bf16)
        t = jnp.dot(t, wt2_ref[...], preferred_element_type=f32) + bt2_ref[...]
        t = jnp.maximum(t, 0.0).astype(bf16)                           # [tile_b, 64]

        pooled = pmax_ref[...]                                         # bf16 [tile_b, 256]
        f = (jnp.dot(t, wf1t_ref[...], preferred_element_type=f32)
             + jnp.dot(pooled, wf1p_ref[...], preferred_element_type=f32)
             + bf1_ref[...])
        f = jnp.maximum(f, 0.0).astype(bf16)          # Dropout(0.2): identity in eval
        s = jnp.dot(f, wf2_ref[...], preferred_element_type=f32) + bf2_ref[...]
        s = jnp.maximum(s, 0.0).astype(bf16)                           # shared [tile_b, 128]

        a = jnp.dot(s, wh1_ref[...], preferred_element_type=f32) + bh1_ref[...]
        a = jnp.maximum(a, 0.0).astype(bf16)                           # [tile_b, 128]
        o = jnp.dot(a, wh2_ref[...], preferred_element_type=f32) + bh2_ref[...]   # [tile_b, 128]
        out_ref[...] = jax.nn.sigmoid(o).astype(out_ref.dtype)


def _pack_params(p):
    """Pads / fuses the raw model parameters into the kernel's operand list."""
    bf16, f32 = jnp.bfloat16, jnp.float32
    # Layer-1 biases folded into the weights via the "ones" lane (target lane 2, points lane 3).
    wt1 = jnp.concatenate(
        [p["wt1"], p["bt1"], jnp.zeros((5, 32), f32)], axis=0).astype(bf16)      # [8, 32]
    wp1 = jnp.concatenate(
        [p["wp1"], p["bp1"], jnp.zeros((4, 64), f32)], axis=0).astype(bf16)      # [8, 64]
    # Fusion concat folded into split weights (target rows / pooled rows).
    wf1_t = p["wf1"][:64].astype(bf16)                                            # [64, 256]
    wf1_p = p["wf1"][64:].astype(bf16)                                            # [256, 256]
    # Fused heads: layer 1 side-by-side, layer 2 block-diagonal, lane-padded to 128.
    wh1 = jnp.concatenate([p["ws1"], p["wc1"]], axis=1).astype(bf16)              # [128, 128]
    bh1 = jnp.concatenate([p["bs1"], p["bc1"]], axis=1).astype(f32)               # [1, 128]
    z = jnp.zeros_like(p["ws2"])
    wh2 = jnp.concatenate(
        [jnp.concatenate([p["ws2"], z], axis=1),
         jnp.concatenate([jnp.zeros_like(p["wc2"]), p["wc2"]], axis=1)],
        axis=0)                                                                   # [128, 2]
    wh2 = jnp.pad(wh2, ((0, 0), (0, 126))).astype(bf16)                           # [128, 128]
    bh2 = jnp.pad(jnp.concatenate([p["bs2"], p["bc2"]], axis=1),
                  ((0, 0), (0, 126))).astype(f32)                                 # [1, 128]
    return [
        wt1, p["wt2"].astype(bf16), p["bt2"].astype(f32),
        wp1,
        p["wp2"].astype(bf16), p["bp2"].astype(f32),
        p["wp3"].astype(bf16), p["bp3"].astype(f32),
        wf1_t, wf1_p, p["bf1"].astype(f32),
        p["wf2"].astype(bf16), p["bf2"].astype(f32),
        wh1, bh1, wh2, bh2,
    ]


def _round_up(x, m):
    return -(-x // m) * m


def pointcloud_skill_effect_forward(target, points, params, *,
                                    batch_tile=None, point_chunk=None,
                                    bf16_epilogue=None):
    """Forward pass. target: [B,2] f32, points: [B,N,3] f32.

    Returns (success_prob [B,1], cost [B,1]) in float32.
    """
    B, tdim = target.shape
    Bp, N, c = points.shape
    assert tdim == 2 and c == 3 and Bp == B

    if bf16_epilogue is None:
        # bf16 bias/ReLU epilogue only where the VPU supports packed bf16 (v6e / v7x).
        try:
            kind = jax.devices()[0].device_kind.lower()
        except Exception:
            kind = ""
        bf16_epilogue = ("v6" in kind) or ("v7" in kind)

    # --- batch tile: cap by real batch; keep >= 2 parallel blocks when B >= 16 ------
    b8 = _round_up(B, 8)
    if batch_tile is None:
        tile_b = min(64, b8)
        if b8 >= 16:
            tile_b = min(tile_b, max(8, (b8 // 2) // 8 * 8))
    else:
        tile_b = max(8, _round_up(batch_tile, 8))
    tile_b = min(tile_b, b8)
    b_pad = _round_up(B, tile_b)

    # --- point chunk: ~4096 point-MLP rows per grid step, multiple of 8 -------------
    n8 = _round_up(N, 8)
    if point_chunk is None:
        chunk = max(8, min(n8, ((4096 // tile_b) // 8) * 8))
    else:
        chunk = min(n8, max(8, _round_up(point_chunk, 8)))
    n_pad = _round_up(N, chunk)

    # --- pad N by repeating the last point (max-pool invariant), pad batch w/ zeros --
    if n_pad != N:
        rep = jnp.broadcast_to(points[:, -1:, :], (B, n_pad - N, 3))
        points = jnp.concatenate([points, rep], axis=1)
    if b_pad != B:
        target = jnp.pad(target, ((0, b_pad - B), (0, 0)))
        points = jnp.pad(points, ((0, b_pad - B), (0, 0), (0, 0)))

    # --- lane-pad features; the first padded lane is the "ones" bias lane ------------
    tgt = jnp.concatenate([target, jnp.ones((b_pad, 1), target.dtype)], axis=1)
    tgt = jnp.pad(tgt, ((0, 0), (0, 5))).astype(jnp.bfloat16)                 # [b_pad, 8]
    pts = jnp.concatenate([points, jnp.ones((b_pad, n_pad, 1), points.dtype)], axis=2)
    pts = jnp.pad(pts, ((0, 0), (0, 0), (0, 4))).astype(jnp.bfloat16)         # [b_pad, n_pad, 8]

    packed = _pack_params(params)

    grid = (b_pad // tile_b, n_pad // chunk)
    pts_spec = pl.BlockSpec((tile_b, chunk, 8), lambda i, k: (i, k, 0))
    tgt_spec = pl.BlockSpec((tile_b, 8), lambda i, k: (i, 0))
    out_spec = pl.BlockSpec((tile_b, 128), lambda i, k: (i, 0))

    def _full(a):
        return pl.BlockSpec(a.shape, lambda i, k: (0,) * a.ndim)

    in_specs = [pts_spec, tgt_spec] + [_full(a) for a in packed]

    # --- advisory cost estimate for XLA's scheduler ----------------------------------
    flops = 2 * (
        b_pad * n_pad * (8 * 64 + 64 * 128 + 128 * 256)          # point MLP
        + b_pad * (8 * 32 + 32 * 64                              # target encoder
                   + 64 * 256 + 256 * 256 + 256 * 128            # fusion
                   + 128 * 128 + 128 * 128)                      # fused heads (lane-padded)
    )
    bytes_accessed = (
        pts.size * 2 + tgt.size * 2
        + sum(int(a.size) * a.dtype.itemsize for a in packed)
        + b_pad * 128 * 4
    )
    ce = pl.CostEstimate(flops=int(flops), transcendentals=int(b_pad * 128),
                         bytes_accessed=int(bytes_accessed))

    out = pl.pallas_call(
        functools.partial(_skill_effect_kernel, tile_b, chunk, bool(bf16_epilogue)),
        out_shape=jax.ShapeDtypeStruct((b_pad, 128), jnp.float32),
        grid_spec=pltpu.PrefetchScalarGridSpec(
            num_scalar_prefetch=0,
            grid=grid,
            in_specs=in_specs,
            out_specs=out_spec,
            scratch_shapes=[pltpu.VMEM((tile_b, 256), jnp.bfloat16)],
        ),
        compiler_params=pltpu.CompilerParams(
            dimension_semantics=("parallel", "arbitrary"),
            vmem_limit_bytes=32 * 1024 * 1024,
        ),
        cost_estimate=ce,
    )(pts, tgt, *packed)

    out = out[:B]
    return out[:, 0:1], out[:, 1:2]


def init_params(key, obs_dim=0):
    """Deterministic synthetic parameters matching the PyTorch module's shapes.

    Weights/biases are stored pre-transposed as [in, out] and snapped to
    bf16-representable values (the kernel folds first-layer biases into bf16 weights).
    """
    assert obs_dim == 0  # TODO(synk): obs_encoder (obs_dim > 0) not implemented
    ks = jax.random.split(key, 22)

    def linear(kw, kb, fan_in, fan_out):
        bound = 1.0 / jnp.sqrt(fan_in)
        w = jax.random.uniform(kw, (fan_in, fan_out), jnp.float32, -bound, bound)
        w = w.astype(jnp.bfloat16).astype(jnp.float32)   # bf16-exact
        b = jax.random.uniform(kb, (1, fan_out), jnp.float32, -bound, bound)
        b = b.astype(jnp.bfloat16).astype(jnp.float32)   # bf16-exact
        return w, b

    wt1, bt1 = linear(ks[0], ks[1], 2, 32)
    wt2, bt2 = linear(ks[2], ks[3], 32, 64)
    wp1, bp1 = linear(ks[4], ks[5], 3, 64)
    wp2, bp2 = linear(ks[6], ks[7], 64, 128)
    wp3, bp3 = linear(ks[8], ks[9], 128, 256)
    wf1, bf1 = linear(ks[10], ks[11], 320, 256)
    wf2, bf2 = linear(ks[12], ks[13], 256, 128)
    ws1, bs1 = linear(ks[14], ks[15], 128, 64)
    ws2, bs2 = linear(ks[16], ks[17], 64, 1)
    wc1, bc1 = linear(ks[18], ks[19], 128, 64)
    wc2, bc2 = linear(ks[20], ks[21], 64, 1)
    return dict(wt1=wt1, bt1=bt1, wt2=wt2, bt2=bt2,
                wp1=wp1, bp1=bp1, wp2=wp2, bp2=bp2, wp3=wp3, bp3=bp3,
                wf1=wf1, bf1=bf1, wf2=wf2, bf2=bf2,
                ws1=ws1, bs1=bs1, ws2=ws2, bs2=bs2,
                wc1=wc1, bc1=bc1, wc2=wc2, bc2=bc2)


def reference_forward(target, points, p):
    """Pure-JAX f32 reference (same math as the PyTorch module in eval mode)."""
    t = jnp.maximum(target @ p["wt1"] + p["bt1"], 0.0)
    t = jnp.maximum(t @ p["wt2"] + p["bt2"], 0.0)                      # [B, 64]
    B, N, _ = points.shape
    x = points.reshape(B * N, 3)
    h = jnp.maximum(x @ p["wp1"] + p["bp1"], 0.0)
    h = jnp.maximum(h @ p["wp2"] + p["bp2"], 0.0)
    h = jnp.maximum(h @ p["wp3"] + p["bp3"], 0.0)
    pooled = h.reshape(B, N, 256).max(axis=1)                          # [B, 256]
    fused = jnp.concatenate([t, pooled], axis=1)                       # [B, 320]
    f = jnp.maximum(fused @ p["wf1"] + p["bf1"], 0.0)
    s = jnp.maximum(f @ p["wf2"] + p["bf2"], 0.0)                      # [B, 128]
    su = jnp.maximum(s @ p["ws1"] + p["bs1"], 0.0)
    su = jax.nn.sigmoid(su @ p["ws2"] + p["bs2"])
    co = jnp.maximum(s @ p["wc1"] + p["bc1"], 0.0)
    co = jax.nn.sigmoid(co @ p["wc2"] + p["bc2"])
    return su, co


if __name__ == "__main__":
    # Small demo shapes (module default is 676 points); B and N are deliberately not
    # multiples of 8 and point_chunk=32 forces the multi-chunk running-max path, so
    # batch padding, N padding (repeat last point) and the 2-D grid are all exercised.
    batch, n_points = 6, 76
    key = jax.random.PRNGKey(0)
    kt, kp, kw = jax.random.split(key, 3)

    target = jax.random.normal(kt, (batch, 2), dtype=jnp.float32)
    points = jax.random.normal(kp, (batch, n_points, 3), dtype=jnp.float32)
    params = init_params(kw)

    succ, cost = pointcloud_skill_effect_forward(target, points, params, point_chunk=32)
    succ = jax.block_until_ready(succ)
    cost = jax.block_until_ready(cost)

    succ_ref, cost_ref = reference_forward(target, points, params)
    assert succ.shape == (batch, 1) and cost.shape == (batch, 1)
    # bf16 matmul inputs (f32 accumulation) -> loosened tolerance vs the f32 reference.
    assert jnp.allclose(succ, succ_ref, atol=2e-2, rtol=2e-2)
    assert jnp.allclose(cost, cost_ref, atol=2e-2, rtol=2e-2)

    print("KERNEL_OK")
</pallas_src>

<mosaic_0001>
module attributes {stable_mosaic.version = 11 : i64} {
  func.func @_skill_effect_kernel(%arg0: i32, %arg1: i32, %arg2: memref<8x32x8xbf16, #tpu.memory_space<vmem>>, %arg3: memref<8x8xbf16, #tpu.memory_space<vmem>>, %arg4: memref<8x32xbf16, #tpu.memory_space<vmem>>, %arg5: memref<32x64xbf16, #tpu.memory_space<vmem>>, %arg6: memref<1x64xf32, #tpu.memory_space<vmem>>, %arg7: memref<8x64xbf16, #tpu.memory_space<vmem>>, %arg8: memref<64x128xbf16, #tpu.memory_space<vmem>>, %arg9: memref<1x128xf32, #tpu.memory_space<vmem>>, %arg10: memref<128x256xbf16, #tpu.memory_space<vmem>>, %arg11: memref<1x256xf32, #tpu.memory_space<vmem>>, %arg12: memref<64x256xbf16, #tpu.memory_space<vmem>>, %arg13: memref<256x256xbf16, #tpu.memory_space<vmem>>, %arg14: memref<1x256xf32, #tpu.memory_space<vmem>>, %arg15: memref<256x128xbf16, #tpu.memory_space<vmem>>, %arg16: memref<1x128xf32, #tpu.memory_space<vmem>>, %arg17: memref<128x128xbf16, #tpu.memory_space<vmem>>, %arg18: memref<1x128xf32, #tpu.memory_space<vmem>>, %arg19: memref<128x128xbf16, #tpu.memory_space<vmem>>, %arg20: memref<1x128xf32, #tpu.memory_space<vmem>>, %arg21: memref<8x128xf32, #tpu.memory_space<vmem>>, %arg22: memref<8x256xbf16, #tpu.memory_space<vmem>>) attributes {dimension_semantics = [#tpu.dimension_semantics<parallel>, #tpu.dimension_semantics<arbitrary>], iteration_bounds = array<i64: 1, 3>, scalar_prefetch = 0 : i64, scratch_operands = 1 : i64, tpu.core_type = #tpu.core_type<tc>, window_params = [{transform_indices = @transform_0, window_bounds = array<i64: 8, 32, 8>}, {transform_indices = @transform_1, window_bounds = array<i64: 8, 8>}, {pipeline_mode = #tpu.pipeline_mode<synchronous>, transform_indices = @transform_2, window_bounds = array<i64: 8, 32>}, {pipeline_mode = #tpu.pipeline_mode<synchronous>, transform_indices = @transform_3, window_bounds = array<i64: 32, 64>}, {pipeline_mode = #tpu.pipeline_mode<synchronous>, transform_indices = @transform_4, window_bounds = array<i64: 1, 64>}, {pipeline_mode = #tpu.pipeline_mode<synchronous>, transform_indices = @transform_5, window_bounds = array<i64: 8, 64>}, {pipeline_mode = #tpu.pipeline_mode<synchronous>, transform_indices = @transform_6, window_bounds = array<i64: 64, 128>}, {pipeline_mode = #tpu.pipeline_mode<synchronous>, transform_indices = @transform_7, window_bounds = array<i64: 1, 128>}, {pipeline_mode = #tpu.pipeline_mode<synchronous>, transform_indices = @transform_8, window_bounds = array<i64: 128, 256>}, {pipeline_mode = #tpu.pipeline_mode<synchronous>, transform_indices = @transform_9, window_bounds = array<i64: 1, 256>}, {pipeline_mode = #tpu.pipeline_mode<synchronous>, transform_indices = @transform_10, window_bounds = array<i64: 64, 256>}, {pipeline_mode = #tpu.pipeline_mode<synchronous>, transform_indices = @transform_11, window_bounds = array<i64: 256, 256>}, {pipeline_mode = #tpu.pipeline_mode<synchronous>, transform_indices = @transform_12, window_bounds = array<i64: 1, 256>}, {pipeline_mode = #tpu.pipeline_mode<synchronous>, transform_indices = @transform_13, window_bounds = array<i64: 256, 128>}, {pipeline_mode = #tpu.pipeline_mode<synchronous>, transform_indices = @transform_14, window_bounds = array<i64: 1, 128>}, {pipeline_mode = #tpu.pipeline_mode<synchronous>, transform_indices = @transform_15, window_bounds = array<i64: 128, 128>}, {pipeline_mode = #tpu.pipeline_mode<synchronous>, transform_indices = @transform_16, window_bounds = array<i64: 1, 128>}, {pipeline_mode = #tpu.pipeline_mode<synchronous>, transform_indices = @transform_17, window_bounds = array<i64: 128, 128>}, {pipeline_mode = #tpu.pipeline_mode<synchronous>, transform_indices = @transform_18, window_bounds = array<i64: 1, 128>}, {transform_indices = @transform_19, window_bounds = array<i64: 8, 128>}]} {
    %c0 = arith.constant 0 : index
    %c0_0 = arith.constant 0 : index
    %c0_1 = arith.constant 0 : index
    %0 = vector.load %arg2[%c0, %c0_0, %c0_1] : memref<8x32x8xbf16, #tpu.memory_space<vmem>>, vector<8x32x8xbf16>
    %1 = vector.shape_cast %0 : vector<8x32x8xbf16> to vector<256x8xbf16>
    %c0_2 = arith.constant 0 : index
    %c0_3 = arith.constant 0 : index
    %2 = vector.load %arg7[%c0_2, %c0_3] : memref<8x64xbf16, #tpu.memory_space<vmem>>, vector<8x64xbf16>
    %cst = arith.constant dense<0.000000e+00> : vector<256x64xf32>
    %3 = tpu.matmul %1, %2, %cst {dimension_numbers = #tpu.dot_dimension_numbers<[1], [0], [0], [1], [0, 0, 1, 1], [], []>} : vector<256x8xbf16>, vector<8x64xbf16>, vector<256x64xf32> -> vector<256x64xf32>
    %cst_4 = arith.constant 0.000000e+00 : f32
    %4 = vector.broadcast %cst_4 : f32 to vector<256x64xf32>
    %5 = arith.maximumf %3, %4 : vector<256x64xf32>
    %6 = arith.truncf %5 : vector<256x64xf32> to vector<256x64xbf16>
    %c0_5 = arith.constant 0 : index
    %c0_6 = arith.constant 0 : index
    %7 = vector.load %arg8[%c0_5, %c0_6] : memref<64x128xbf16, #tpu.memory_space<vmem>>, vector<64x128xbf16>
    %cst_7 = arith.constant dense<0.000000e+00> : vector<256x128xf32>
    %8 = tpu.matmul %6, %7, %cst_7 {dimension_numbers = #tpu.dot_dimension_numbers<[1], [0], [0], [1], [0, 0, 1, 1], [], []>} : vector<256x64xbf16>, vector<64x128xbf16>, vector<256x128xf32> -> vector<256x128xf32>
    %c0_8 = arith.constant 0 : index
    %c0_9 = arith.constant 0 : index
    %9 = vector.load %arg9[%c0_8, %c0_9] : memref<1x128xf32, #tpu.memory_space<vmem>>, vector<1x128xf32>
    %10 = vector.broadcast %9 : vector<1x128xf32> to vector<256x128xf32>
    %11 = arith.addf %8, %10 : vector<256x128xf32>
    %cst_10 = arith.constant 0.000000e+00 : f32
    %12 = vector.broadcast %cst_10 : f32 to vector<256x128xf32>
    %13 = arith.maximumf %11, %12 : vector<256x128xf32>
    %14 = arith.truncf %13 : vector<256x128xf32> to vector<256x128xbf16>
    %c0_11 = arith.constant 0 : index
    %c0_12 = arith.constant 0 : index
    %15 = vector.load %arg10[%c0_11, %c0_12] : memref<128x256xbf16, #tpu.memory_space<vmem>>, vector<128x256xbf16>
    %cst_13 = arith.constant dense<0.000000e+00> : vector<256x256xf32>
    %16 = tpu.matmul %14, %15, %cst_13 {dimension_numbers = #tpu.dot_dimension_numbers<[1], [0], [0], [1], [0, 0, 1, 1], [], []>} : vector<256x128xbf16>, vector<128x256xbf16>, vector<256x256xf32> -> vector<256x256xf32>
    %c0_14 = arith.constant 0 : index
    %c0_15 = arith.constant 0 : index
    %17 = vector.load %arg11[%c0_14, %c0_15] : memref<1x256xf32, #tpu.memory_space<vmem>>, vector<1x256xf32>
    %18 = vector.broadcast %17 : vector<1x256xf32> to vector<256x256xf32>
    %19 = arith.addf %16, %18 : vector<256x256xf32>
    %cst_16 = arith.constant 0.000000e+00 : f32
    %20 = vector.broadcast %cst_16 : f32 to vector<256x256xf32>
    %21 = arith.maximumf %19, %20 : vector<256x256xf32>
    %22 = arith.truncf %21 : vector<256x256xf32> to vector<256x256xbf16>
    %23 = vector.shape_cast %22 : vector<256x256xbf16> to vector<8x32x256xbf16>
    %cst_17 = arith.constant dense<0xFF80> : vector<8x256xbf16>
    %24 = vector.multi_reduction <maximumf>, %23, %cst_17 [1] : vector<8x32x256xbf16> to vector<8x256xbf16>
    %c0_i32 = arith.constant 0 : i32
    %25 = arith.cmpi eq, %arg1, %c0_i32 : i32
    %26 = arith.extui %25 : i1 to i32
    %c0_i32_18 = arith.constant 0 : i32
    %27 = arith.cmpi ne, %26, %c0_i32_18 : i32
    scf.if %27 {
      %cst_24 = arith.constant 0.000000e+00 : bf16
      %34 = vector.broadcast %cst_24 : bf16 to vector<8x256xbf16>
      %c0_25 = arith.constant 0 : index
      %c0_26 = arith.constant 0 : index
      %35 = vector.load %arg22[%c0_25, %c0_26] : memref<8x256xbf16, #tpu.memory_space<vmem>>, vector<8x256xbf16>
      tpu.vector_store %arg22[%c0_25, %c0_26], %34 {strides = array<i32>} : memref<8x256xbf16, #tpu.memory_space<vmem>>, vector<8x256xbf16>,
    } else {
    }
    %c0_19 = arith.constant 0 : index
    %c0_20 = arith.constant 0 : index
    %28 = vector.load %arg22[%c0_19, %c0_20] : memref<8x256xbf16, #tpu.memory_space<vmem>>, vector<8x256xbf16>
    %29 = arith.maximumf %28, %24 : vector<8x256xbf16>
    %c0_21 = arith.constant 0 : index
    %c0_22 = arith.constant 0 : index
    %30 = vector.load %arg22[%c0_21, %c0_22] : memref<8x256xbf16, #tpu.memory_space<vmem>>, vector<8x256xbf16>
    tpu.vector_store %arg22[%c0_21, %c0_22], %29 {strides = array<i32>} : memref<8x256xbf16, #tpu.memory_space<vmem>>, vector<8x256xbf16>,
    %c2_i32 = arith.constant 2 : i32
    %31 = arith.cmpi eq, %arg1, %c2_i32 : i32
    %32 = arith.extui %31 : i1 to i32
    %c0_i32_23 = arith.constant 0 : i32
    %33 = arith.cmpi ne, %32, %c0_i32_23 : i32
    scf.if %33 {
      %c0_24 = arith.constant 0 : index
      %c0_25 = arith.constant 0 : index
      %34 = vector.load %arg3[%c0_24, %c0_25] : memref<8x8xbf16, #tpu.memory_space<vmem>>, vector<8x8xbf16>
      %c0_26 = arith.constant 0 : index
      %c0_27 = arith.constant 0 : index
      %35 = vector.load %arg4[%c0_26, %c0_27] : memref<8x32xbf16, #tpu.memory_space<vmem>>, vector<8x32xbf16>
      %cst_28 = arith.constant dense<0.000000e+00> : vector<8x32xf32>
      %36 = tpu.matmul %34, %35, %cst_28 {dimension_numbers = #tpu.dot_dimension_numbers<[1], [0], [0], [1], [0, 0, 1, 1], [], []>} : vector<8x8xbf16>, vector<8x32xbf16>, vector<8x32xf32> -> vector<8x32xf32>
      %cst_29 = arith.constant 0.000000e+00 : f32
      %37 = vector.broadcast %cst_29 : f32 to vector<8x32xf32>
      %38 = arith.maximumf %36, %37 : vector<8x32xf32>
      %39 = arith.truncf %38 : vector<8x32xf32> to vector<8x32xbf16>
      %c0_30 = arith.constant 0 : index
      %c0_31 = arith.constant 0 : index
      %40 = vector.load %arg5[%c0_30, %c0_31] : memref<32x64xbf16, #tpu.memory_space<vmem>>, vector<32x64xbf16>
      %cst_32 = arith.constant dense<0.000000e+00> : vector<8x64xf32>
      %41 = tpu.matmul %39, %40, %cst_32 {dimension_numbers = #tpu.dot_dimension_numbers<[1], [0], [0], [1], [0, 0, 1, 1], [], []>} : vector<8x32xbf16>, vector<32x64xbf16>, vector<8x64xf32> -> vector<8x64xf32>
      %c0_33 = arith.constant 0 : index
      %c0_34 = arith.constant 0 : index
      %42 = vector.load %arg6[%c0_33, %c0_34] : memref<1x64xf32, #tpu.memory_space<vmem>>, vector<1x64xf32>
      %43 = vector.broadcast %42 : vector<1x64xf32> to vector<8x64xf32>
      %44 = arith.addf %41, %43 : vector<8x64xf32>
      %cst_35 = arith.constant 0.000000e+00 : f32
      %45 = vector.broadcast %cst_35 : f32 to vector<8x64xf32>
      %46 = arith.maximumf %44, %45 : vector<8x64xf32>
      %47 = arith.truncf %46 : vector<8x64xf32> to vector<8x64xbf16>
      %c0_36 = arith.constant 0 : index
      %c0_37 = arith.constant 0 : index
      %48 = vector.load %arg22[%c0_36, %c0_37] : memref<8x256xbf16, #tpu.memory_space<vmem>>, vector<8x256xbf16>
      %c0_38 = arith.constant 0 : index
      %c0_39 = arith.constant 0 : index
      %49 = vector.load %arg12[%c0_38, %c0_39] : memref<64x256xbf16, #tpu.memory_space<vmem>>, vector<64x256xbf16>
      %cst_40 = arith.constant dense<0.000000e+00> : vector<8x256xf32>
      %50 = tpu.matmul %47, %49, %cst_40 {dimension_numbers = #tpu.dot_dimension_numbers<[1], [0], [0], [1], [0, 0, 1, 1], [], []>} : vector<8x64xbf16>, vector<64x256xbf16>, vector<8x256xf32> -> vector<8x256xf32>
      %c0_41 = arith.constant 0 : index
      %c0_42 = arith.constant 0 : index
      %51 = vector.load %arg13[%c0_41, %c0_42] : memref<256x256xbf16, #tpu.memory_space<vmem>>, vector<256x256xbf16>
      %cst_43 = arith.constant dense<0.000000e+00> : vector<8x256xf32>
      %52 = tpu.matmul %48, %51, %cst_43 {dimension_numbers = #tpu.dot_dimension_numbers<[1], [0], [0], [1], [0, 0, 1, 1], [], []>} : vector<8x256xbf16>, vector<256x256xbf16>, vector<8x256xf32> -> vector<8x256xf32>
      %53 = arith.addf %50, %52 : vector<8x256xf32>
      %c0_44 = arith.constant 0 : index
      %c0_45 = arith.constant 0 : index
      %54 = vector.load %arg14[%c0_44, %c0_45] : memref<1x256xf32, #tpu.memory_space<vmem>>, vector<1x256xf32>
      %55 = vector.broadcast %54 : vector<1x256xf32> to vector<8x256xf32>
      %56 = arith.addf %53, %55 : vector<8x256xf32>
      %cst_46 = arith.constant 0.000000e+00 : f32
      %57 = vector.broadcast %cst_46 : f32 to vector<8x256xf32>
      %58 = arith.maximumf %56, %57 : vector<8x256xf32>
      %59 = arith.truncf %58 : vector<8x256xf32> to vector<8x256xbf16>
      %c0_47 = arith.constant 0 : index
      %c0_48 = arith.constant 0 : index
      %60 = vector.load %arg15[%c0_47, %c0_48] : memref<256x128xbf16, #tpu.memory_space<vmem>>, vector<256x128xbf16>
      %cst_49 = arith.constant dense<0.000000e+00> : vector<8x128xf32>
      %61 = tpu.matmul %59, %60, %cst_49 {dimension_numbers = #tpu.dot_dimension_numbers<[1], [0], [0], [1], [0, 0, 1, 1], [], []>} : vector<8x256xbf16>, vector<256x128xbf16>, vector<8x128xf32> -> vector<8x128xf32>
      %c0_50 = arith.constant 0 : index
      %c0_51 = arith.constant 0 : index
      %62 = vector.load %arg16[%c0_50, %c0_51] : memref<1x128xf32, #tpu.memory_space<vmem>>, vector<1x128xf32>
      %63 = vector.broadcast %62 : vector<1x128xf32> to vector<8x128xf32>
      %64 = arith.addf %61, %63 : vector<8x128xf32>
      %cst_52 = arith.constant 0.000000e+00 : f32
      %65 = vector.broadcast %cst_52 : f32 to vector<8x128xf32>
      %66 = arith.maximumf %64, %65 : vector<8x128xf32>
      %67 = arith.truncf %66 : vector<8x128xf32> to vector<8x128xbf16>
      %c0_53 = arith.constant 0 : index
      %c0_54 = arith.constant 0 : index
      %68 = vector.load %arg17[%c0_53, %c0_54] : memref<128x128xbf16, #tpu.memory_space<vmem>>, vector<128x128xbf16>
      %cst_55 = arith.constant dense<0.000000e+00> : vector<8x128xf32>
      %69 = tpu.matmul %67, %68, %cst_55 {dimension_numbers = #tpu.dot_dimension_numbers<[1], [0], [0], [1], [0, 0, 1, 1], [], []>} : vector<8x128xbf16>, vector<128x128xbf16>, vector<8x128xf32> -> vector<8x128xf32>
      %c0_56 = arith.constant 0 : index
      %c0_57 = arith.constant 0 : index
      %70 = vector.load %arg18[%c0_56, %c0_57] : memref<1x128xf32, #tpu.memory_space<vmem>>, vector<1x128xf32>
      %71 = vector.broadcast %70 : vector<1x128xf32> to vector<8x128xf32>
      %72 = arith.addf %69, %71 : vector<8x128xf32>
      %cst_58 = arith.constant 0.000000e+00 : f32
      %73 = vector.broadcast %cst_58 : f32 to vector<8x128xf32>
      %74 = arith.maximumf %72, %73 : vector<8x128xf32>
      %75 = arith.truncf %74 : vector<8x128xf32> to vector<8x128xbf16>
      %c0_59 = arith.constant 0 : index
      %c0_60 = arith.constant 0 : index
      %76 = vector.load %arg19[%c0_59, %c0_60] : memref<128x128xbf16, #tpu.memory_space<vmem>>, vector<128x128xbf16>
      %cst_61 = arith.constant dense<0.000000e+00> : vector<8x128xf32>
      %77 = tpu.matmul %75, %76, %cst_61 {dimension_numbers = #tpu.dot_dimension_numbers<[1], [0], [0], [1], [0, 0, 1, 1], [], []>} : vector<8x128xbf16>, vector<128x128xbf16>, vector<8x128xf32> -> vector<8x128xf32>
      %c0_62 = arith.constant 0 : index
      %c0_63 = arith.constant 0 : index
      %78 = vector.load %arg20[%c0_62, %c0_63] : memref<1x128xf32, #tpu.memory_space<vmem>>, vector<1x128xf32>
      %79 = vector.broadcast %78 : vector<1x128xf32> to vector<8x128xf32>
      %80 = arith.addf %77, %79 : vector<8x128xf32>
      %81 = arith.negf %80 : vector<8x128xf32>
      %82 = math.exp %81 : vector<8x128xf32>
      %cst_64 = arith.constant 1.000000e+00 : f32
      %83 = vector.broadcast %cst_64 : f32 to vector<8x128xf32>
      %84 = arith.addf %83, %82 : vector<8x128xf32>
      %85 = arith.divf %83, %84 : vector<8x128xf32>
      %c0_65 = arith.constant 0 : index
      %c0_66 = arith.constant 0 : index
      %86 = vector.load %arg21[%c0_65, %c0_66] : memref<8x128xf32, #tpu.memory_space<vmem>>, vector<8x128xf32>
      tpu.vector_store %arg21[%c0_65, %c0_66], %85 {strides = array<i32>} : memref<8x128xf32, #tpu.memory_space<vmem>>, vector<8x128xf32>,
    } else {
    }
    return
  }
  func.func @transform_0(%arg0: i32, %arg1: i32) -> (i32, i32, i32) {
    %c0_i32 = arith.constant 0 : i32
    %c0_i32_0 = arith.constant 0 : i32
    return %arg0, %arg1, %c0_i32 : i32, i32, i32
  }
  func.func @transform_1(%arg0: i32, %arg1: i32) -> (i32, i32) {
    %c0_i32 = arith.constant 0 : i32
    %c0_i32_0 = arith.constant 0 : i32
    return %arg0, %c0_i32 : i32, i32
  }
  func.func @transform_2(%arg0: i32, %arg1: i32) -> (i32, i32) {
    %c0_i32 = arith.constant 0 : i32
    %c0_i32_0 = arith.constant 0 : i32
    %c0_i32_1 = arith.constant 0 : i32
    return %c0_i32, %c0_i32_0 : i32, i32
  }
  func.func @transform_3(%arg0: i32, %arg1: i32) -> (i32, i32) {
    %c0_i32 = arith.constant 0 : i32
    %c0_i32_0 = arith.constant 0 : i32
    %c0_i32_1 = arith.constant 0 : i32
    return %c0_i32, %c0_i32_0 : i32, i32
  }
  func.func @transform_4(%arg0: i32, %arg1: i32) -> (i32, i32) {
    %c0_i32 = arith.constant 0 : i32
    %c0_i32_0 = arith.constant 0 : i32
    %c0_i32_1 = arith.constant 0 : i32
    return %c0_i32, %c0_i32_0 : i32, i32
  }
  func.func @transform_5(%arg0: i32, %arg1: i32) -> (i32, i32) {
    %c0_i32 = arith.constant 0 : i32
    %c0_i32_0 = arith.constant 0 : i32
    %c0_i32_1 = arith.constant 0 : i32
    return %c0_i32, %c0_i32_0 : i32, i32
  }
  func.func @transform_6(%arg0: i32, %arg1: i32) -> (i32, i32) {
    %c0_i32 = arith.constant 0 : i32
    %c0_i32_0 = arith.constant 0 : i32
    %c0_i32_1 = arith.constant 0 : i32
    return %c0_i32, %c0_i32_0 : i32, i32
  }
  func.func @transform_7(%arg0: i32, %arg1: i32) -> (i32, i32) {
    %c0_i32 = arith.constant 0 : i32
    %c0_i32_0 = arith.constant 0 : i32
    %c0_i32_1 = arith.constant 0 : i32
    return %c0_i32, %c0_i32_0 : i32, i32
  }
  func.func @transform_8(%arg0: i32, %arg1: i32) -> (i32, i32) {
    %c0_i32 = arith.constant 0 : i32
    %c0_i32_0 = arith.constant 0 : i32
    %c0_i32_1 = arith.constant 0 : i32
    return %c0_i32, %c0_i32_0 : i32, i32
  }
  func.func @transform_9(%arg0: i32, %arg1: i32) -> (i32, i32) {
    %c0_i32 = arith.constant 0 : i32
    %c0_i32_0 = arith.constant 0 : i32
    %c0_i32_1 = arith.constant 0 : i32
    return %c0_i32, %c0_i32_0 : i32, i32
  }
  func.func @transform_10(%arg0: i32, %arg1: i32) -> (i32, i32) {
    %c0_i32 = arith.constant 0 : i32
    %c0_i32_0 = arith.constant 0 : i32
    %c0_i32_1 = arith.constant 0 : i32
    return %c0_i32, %c0_i32_0 : i32, i32
  }
  func.func @transform_11(%arg0: i32, %arg1: i32) -> (i32, i32) {
    %c0_i32 = arith.constant 0 : i32
    %c0_i32_0 = arith.constant 0 : i32
    %c0_i32_1 = arith.constant 0 : i32
    return %c0_i32, %c0_i32_0 : i32, i32
  }
  func.func @transform_12(%arg0: i32, %arg1: i32) -> (i32, i32) {
    %c0_i32 = arith.constant 0 : i32
    %c0_i32_0 = arith.constant 0 : i32
    %c0_i32_1 = arith.constant 0 : i32
    return %c0_i32, %c0_i32_0 : i32, i32
  }
  func.func @transform_13(%arg0: i32, %arg1: i32) -> (i32, i32) {
    %c0_i32 = arith.constant 0 : i32
    %c0_i32_0 = arith.constant 0 : i32
    %c0_i32_1 = arith.constant 0 : i32
    return %c0_i32, %c0_i32_0 : i32, i32
  }
  func.func @transform_14(%arg0: i32, %arg1: i32) -> (i32, i32) {
    %c0_i32 = arith.constant 0 : i32
    %c0_i32_0 = arith.constant 0 : i32
    %c0_i32_1 = arith.constant 0 : i32
    return %c0_i32, %c0_i32_0 : i32, i32
  }
  func.func @transform_15(%arg0: i32, %arg1: i32) -> (i32, i32) {
    %c0_i32 = arith.constant 0 : i32
    %c0_i32_0 = arith.constant 0 : i32
    %c0_i32_1 = arith.constant 0 : i32
    return %c0_i32, %c0_i32_0 : i32, i32
  }
  func.func @transform_16(%arg0: i32, %arg1: i32) -> (i32, i32) {
    %c0_i32 = arith.constant 0 : i32
    %c0_i32_0 = arith.constant 0 : i32
    %c0_i32_1 = arith.constant 0 : i32
    return %c0_i32, %c0_i32_0 : i32, i32
  }
  func.func @transform_17(%arg0: i32, %arg1: i32) -> (i32, i32) {
    %c0_i32 = arith.constant 0 : i32
    %c0_i32_0 = arith.constant 0 : i32
    %c0_i32_1 = arith.constant 0 : i32
    return %c0_i32, %c0_i32_0 : i32, i32
  }
  func.func @transform_18(%arg0: i32, %arg1: i32) -> (i32, i32) {
    %c0_i32 = arith.constant 0 : i32
    %c0_i32_0 = arith.constant 0 : i32
    %c0_i32_1 = arith.constant 0 : i32
    return %c0_i32, %c0_i32_0 : i32, i32
  }
  func.func @transform_19(%arg0: i32, %arg1: i32) -> (i32, i32) {
    %c0_i32 = arith.constant 0 : i32
    %c0_i32_0 = arith.constant 0 : i32
    return %arg0, %c0_i32 : i32, i32
  }
}

</mosaic_0001>

<llo_original>
// kernel: tpu_custom_call.1
$region0: #{tpu_custom_call.1}
  #allocation0 [shape = 'u32[]', space=smem, size = 0x4, offset = 0x4, fixed_abs, tag = 'smem constant byte address 0x4 - core index']
  #allocation1 [shape = 'u32[72,128]{1,0:T(1,128)}', space=vmem, size = 0x9000, scoped, tag = 'internal scratch']
  #allocation2 [shape = 'bf16[8,256]{1,0:T(8,128)(2,1)}', space=vmem, size = 0x1000, scoped, tag = 'scratch operand']
  %s0 = inlined_call_operand.vmem [shape: bf16[8,96,8], index: 0, kind: input, shape index: {}]
  %s1 = inlined_call_operand.vmem [shape: bf16[8,8], index: 1, kind: input, shape index: {}]
  %s2 = inlined_call_operand.vmem [shape: bf16[8,32], index: 2, kind: input, shape index: {}]
  %s3 = inlined_call_operand.hbm [shape: bf16[32,64], index: 3, kind: input, shape index: {}]
  %s4 = inlined_call_operand.hbm [shape: f32[1,64], index: 4, kind: input, shape index: {}]
  %s5 = inlined_call_operand.hbm [shape: bf16[8,64], index: 5, kind: input, shape index: {}]
  %s6 = inlined_call_operand.vmem [shape: bf16[64,128], index: 6, kind: input, shape index: {}]
  %s7 = inlined_call_operand.hbm [shape: f32[1,128], index: 7, kind: input, shape index: {}]
  %s8 = inlined_call_operand.vmem [shape: bf16[128,256], index: 8, kind: input, shape index: {}]
  %s9 = inlined_call_operand.vmem [shape: f32[1,256], index: 9, kind: input, shape index: {}]
  %s10 = inlined_call_operand.hbm [shape: bf16[64,256], index: 10, kind: input, shape index: {}]
  %s11 = inlined_call_operand.vmem [shape: bf16[256,256], index: 11, kind: input, shape index: {}]
  %s12 = inlined_call_operand.hbm [shape: f32[1,256], index: 12, kind: input, shape index: {}]
  %s13 = inlined_call_operand.hbm [shape: bf16[256,128], index: 13, kind: input, shape index: {}]
  %s14 = inlined_call_operand.hbm [shape: f32[1,128], index: 14, kind: input, shape index: {}]
  %s15 = inlined_call_operand.hbm [shape: bf16[128,128], index: 15, kind: input, shape index: {}]
  %s16 = inlined_call_operand.vmem [shape: f32[1,128], index: 16, kind: input, shape index: {}]
  %s17 = inlined_call_operand.hbm [shape: bf16[128,128], index: 17, kind: input, shape index: {}]
  %s18 = inlined_call_operand.vmem [shape: f32[1,128], index: 18, kind: input, shape index: {}]
  %s19 = inlined_call_operand.hbm [shape: f32[8,128], index: 19, kind: output, shape index: {}]
  %s20 = sld [smem:[#allocation0]]
  $region198: #{tpu_custom_call.1} parent=0
    _
  %s22 = ssub.s32 1, %s20
  %s23 = scalar_select 0, %s22, %s20
  $region1: #{tpu_custom_call.1} parent=0
    #allocation3 [shape = 'u8[131072]{0}', space=vmem, size = 0x20000, scoped, tag = 'input window, operand 0']
    #allocation4 [shape = 'u8[8192]{0}', space=vmem, size = 0x2000, scoped, tag = 'input window, operand 3, single buffered']
    #allocation5 [shape = 's32[2]{0}', space=sflag, size = 0x8, scoped, tag = 'scoped memory for tpu_custom_call.1']
    #allocation6 [shape = 's32[2]{0}', space=sflag, size = 0x8, scoped, tag = 'scoped memory for tpu_custom_call.1']
    #allocation7 [shape = 'u8[512]{0}', space=vmem, size = 0x400, scoped, tag = 'input window, operand 4, single buffered']
    #allocation8 [shape = 's32[1]{0}', space=sflag, size = 0x4, scoped, tag = 'scoped memory for tpu_custom_call.1']
    #allocation9 [shape = 'u8[2048]{0}', space=vmem, size = 0x800, scoped, tag = 'input window, operand 5, single buffered']
    #allocation10 [shape = 'u8[512]{0}', space=vmem, size = 0x400, scoped, tag = 'input window, operand 7, single buffered']
    #allocation11 [shape = 's32[1]{0}', space=sflag, size = 0x4, scoped, tag = 'scoped memory for tpu_custom_call.1']
    #allocation12 [shape = 'u8[32768]{0}', space=vmem, size = 0x8000, scoped, tag = 'input window, operand 10, single buffered']
    #allocation13 [shape = 'u8[1024]{0}', space=vmem, size = 0x400, scoped, tag = 'input window, operand 12, single buffered']
    #allocation14 [shape = 's32[1]{0}', space=sflag, size = 0x4, scoped, tag = 'scoped memory for tpu_custom_call.1']
    #allocation15 [shape = 'u8[65536]{0}', space=vmem, size = 0x10000, scoped, tag = 'input window, operand 13, single buffered']
    #allocation16 [shape = 'u8[512]{0}', space=vmem, size = 0x400, scoped, tag = 'input window, operand 14, single buffered']
    #allocation17 [shape = 's32[1]{0}', space=sflag, size = 0x4, scoped, tag = 'scoped memory for tpu_custom_call.1']
    #allocation18 [shape = 'u8[32768]{0}', space=vmem, size = 0x8000, scoped, tag = 'input window, operand 15, single buffered']
    #allocation19 [shape = 'u8[32768]{0}', space=vmem, size = 0x8000, scoped, tag = 'input window, operand 17, single buffered']
    #allocation20 [shape = 's32[1]{0}', space=sflag, size = 0x4, scoped, tag = 'scoped memory for tpu_custom_call.1']
    #allocation21 [shape = 'u8[4096]{0}', space=vmem, size = 0x1000, scoped, tag = 'output window, operand 0, single buffered']
    %24 = vsyncpa [#allocation5], 0
    %25 = vsyncpa [#allocation8], 0
    %26 = vsyncpa [#allocation11], 0
    %27 = vsyncpa [#allocation14], 0
    %28 = vsyncpa [#allocation17], 0
    %29 = vsyncpa [#allocation20], 0
    %30 = vsyncpa [#allocation6], 0
    loop: start=0, step=1, limit=5
    $region2: #{tpu_custom_call.1} parent=1 // loop_pre_header
      _
    $region3: #{tpu_custom_call.1} parent=1 // loop_header
      %s32 = sphi 0, %s36
      %p33 = scmp.ge.s32.totalorder %s32, 5
      %s39 = sphi 0, %s51
      %s40 = sphi 0, %s47
      %s41 = sphi 0, %s39
      %s42 = sphi 0, %s40
      %s43 = sphi 0, %s41
      %s44 = sphi 0, %s42
      %s56 = sphi 0, %s58
      %s59 = sphi 0, %s56
      %s60 = sphi 0, %s59
      %s76 = sphi 0, %s60
      %s82 = sphi 0, %s84
      %s85 = sphi 0, %s82
      %s86 = sphi 0, %s85
      %s102 = sphi 0, %s86
      %s106 = sphi 0, %s106
      %s108 = sphi 0, %s106
      %s109 = sphi 0, %s108
      %s123 = sphi 0, %s109
      %s127 = sphi 0, %s127
      %s129 = sphi 0, %s127
      %s130 = sphi 0, %s129
      %s144 = sphi 0, %s130
      %s148 = sphi 0, %s148
      %s150 = sphi 0, %s148
      %s151 = sphi 0, %s150
      %s165 = sphi 0, %s151
      %s169 = sphi 0, %s169
      %s171 = sphi 0, %s169
      %s172 = sphi 0, %s171
      %s186 = sphi 0, %s172
      %s190 = sphi 0, %s190
      %s192 = sphi 0, %s190
      %s193 = sphi 0, %s192
      %s207 = sphi 0, %s193
      %s211 = sphi 0, %s211
      %s213 = sphi 0, %s211
      %s214 = sphi 0, %s213
      %s228 = sphi 0, %s214
      %s232 = sphi 0, %s232
      %s234 = sphi 0, %s232
      %s235 = sphi 0, %s234
      %s249 = sphi 0, %s235
      %s253 = sphi 0, %s253
      %s255 = sphi 0, %s253
      %s256 = sphi 0, %s255
      %s270 = sphi 0, %s256
      %s274 = sphi 0, %s274
      %s276 = sphi 0, %s274
      %s277 = sphi 0, %s276
      %s291 = sphi 0, %s277
      %s295 = sphi 0, %s295
      %s297 = sphi 0, %s295
      %s298 = sphi 0, %s297
      %s312 = sphi 0, %s298
      %s316 = sphi 0, %s316
      %s318 = sphi 0, %s316
      %s319 = sphi 0, %s318
      %s333 = sphi 0, %s319
      %s337 = sphi 0, %s337
      %s339 = sphi 0, %s337
      %s340 = sphi 0, %s339
      %s354 = sphi 0, %s340
      %s358 = sphi 0, %s358
      %s360 = sphi 0, %s358
      %s361 = sphi 0, %s360
      %s375 = sphi 0, %s361
      %s379 = sphi 0, %s379
      %s381 = sphi 0, %s379
      %s382 = sphi 0, %s381
      %s396 = sphi 0, %s382
      %s400 = sphi 0, %s400
      %s402 = sphi 0, %s400
      %s403 = sphi 0, %s402
      %s417 = sphi 0, %s403
      %s421 = sphi 0, %s421
      %s423 = sphi 0, %s421
      %s424 = sphi 0, %s423
      %s438 = sphi 0, %s424
      %s442 = sphi 0, %s442
      %s444 = sphi 0, %s442
      %s445 = sphi 0, %s444
      %s459 = sphi 0, %s445
      %s465 = sphi 0, %s467
      %s468 = sphi 0, %s465
      %s469 = sphi 0, %s468
      %s485 = sphi 0, %s469
    $region4: #{tpu_custom_call.1} parent=1 // loop_header_branch
      %35 = sbr.rel (%p33) target = $region8
    $region5: #{tpu_custom_call.1} parent=1 // loop_body
      %s37 = ssub.s32 %s32, 1
      %s38 = ssub.s32 %s32, 2
      %s45 = sadd.s32 1, %s40
      %p46 = scmp.ge.s32.totalorder %s45, 3
      %s47 = scalar_select %p46, 0, %s45
      %s48 = sadd.s32 1, %s39
      %s49 = scalar_select %p46, %s48, %s39
      %p50 = scmp.ge.s32.totalorder %s49, 1
      %s51 = scalar_select %p50, 0, %s49
      %s52 = ssub.s32 %s39, %s51
      %s53 = ssub.s32 %s40, %s47
      %s54 = sor.u32 %s52, %s53
      %p55 = scmp.eq.s32.totalorder %s54, 0
      %s57 = sadd.s32 %s56, 1
      %s58 = scalar_select %p55, %s56, %s57
      %p61 = pneg %p55
      %p62 = scmp.eq.s32.totalorder %s32, 2
      %p63 = por %p61, %p62
      %p64 = scmp.ne.s32.totalorder %s56, %s59
      %p65 = scmp.eq.s32.totalorder %s32, 0
      %p66 = por %p64, %p65
      %p67 = scmp.ne.s32.totalorder %s56, %s59
      %p68 = scmp.eq.s32.totalorder %s37, 2
      %p69 = por %p67, %p68
      %p70 = scmp.ne.s32.totalorder %s59, %s60
      %p71 = scmp.eq.s32.totalorder %s37, 0
      %p72 = por %p70, %p71
      %p73 = scmp.ne.s32.totalorder %s59, %s60
      %p74 = scmp.eq.s32.totalorder %s38, 2
      %p75 = por %p73, %p74
      %p77 = scmp.ne.s32.totalorder %s60, %s76
      %p78 = scmp.eq.s32.totalorder %s38, 0
      %p79 = por %p77, %p78
      %s80 = ssub.s32 %s39, %s51
      %p81 = scmp.eq.s32.totalorder %s80, 0
      %s83 = sadd.s32 %s82, 1
      %s84 = scalar_select %p81, %s82, %s83
      %p87 = pneg %p81
      %p88 = scmp.eq.s32.totalorder %s32, 2
      %p89 = por %p87, %p88
      %p90 = scmp.ne.s32.totalorder %s82, %s85
      %p91 = scmp.eq.s32.totalorder %s32, 0
      %p92 = por %p90, %p91
      %p93 = scmp.ne.s32.totalorder %s82, %s85
      %p94 = scmp.eq.s32.totalorder %s37, 2
      %p95 = por %p93, %p94
      %p96 = scmp.ne.s32.totalorder %s85, %s86
      %p97 = scmp.eq.s32.totalorder %s37, 0
      %p98 = por %p96, %p97
      %p99 = scmp.ne.s32.totalorder %s85, %s86
      %p100 = scmp.eq.s32.totalorder %s38, 2
      %p101 = por %p99, %p100
      %p103 = scmp.ne.s32.totalorder %s86, %s102
      %p104 = scmp.eq.s32.totalorder %s38, 0
      %p105 = por %p103, %p104
      %s107 = sadd.s32 %s106, 1
      %p110 = scmp.eq.s32.totalorder %s32, 2
      %p111 = scmp.ne.s32.totalorder %s106, %s108
      %p112 = scmp.eq.s32.totalorder %s32, 0
      %p113 = por %p111, %p112
      %p114 = scmp.ne.s32.totalorder %s106, %s108
      %p115 = scmp.eq.s32.totalorder %s37, 2
      %p116 = por %p114, %p115
      %p117 = scmp.ne.s32.totalorder %s108, %s109
      %p118 = scmp.eq.s32.totalorder %s37, 0
      %p119 = por %p117, %p118
      %p120 = scmp.ne.s32.totalorder %s108, %s109
      %p121 = scmp.eq.s32.totalorder %s38, 2
      %p122 = por %p120, %p121
      %p124 = scmp.ne.s32.totalorder %s109, %s123
      %p125 = scmp.eq.s32.totalorder %s38, 0
      %p126 = por %p124, %p125
      %s128 = sadd.s32 %s127, 1
      %p131 = scmp.eq.s32.totalorder %s32, 2
      %p132 = scmp.ne.s32.totalorder %s127, %s129
      %p133 = scmp.eq.s32.totalorder %s32, 0
      %p134 = por %p132, %p133
      %p135 = scmp.ne.s32.totalorder %s127, %s129
      %p136 = scmp.eq.s32.totalorder %s37, 2
      %p137 = por %p135, %p136
      %p138 = scmp.ne.s32.totalorder %s129, %s130
      %p139 = scmp.eq.s32.totalorder %s37, 0
      %p140 = por %p138, %p139
      %p141 = scmp.ne.s32.totalorder %s129, %s130
      %p142 = scmp.eq.s32.totalorder %s38, 2
      %p143 = por %p141, %p142
      %p145 = scmp.ne.s32.totalorder %s130, %s144
      %p146 = scmp.eq.s32.totalorder %s38, 0
      %p147 = por %p145, %p146
      %s149 = sadd.s32 %s148, 1
      %p152 = scmp.eq.s32.totalorder %s32, 2
      %p153 = scmp.ne.s32.totalorder %s148, %s150
      %p154 = scmp.eq.s32.totalorder %s32, 0
      %p155 = por %p153, %p154
      %p156 = scmp.ne.s32.totalorder %s148, %s150
      %p157 = scmp.eq.s32.totalorder %s37, 2
      %p158 = por %p156, %p157
      %p159 = scmp.ne.s32.totalorder %s150, %s151
      %p160 = scmp.eq.s32.totalorder %s37, 0
      %p161 = por %p159, %p160
      %p162 = scmp.ne.s32.totalorder %s150, %s151
      %p163 = scmp.eq.s32.totalorder %s38, 2
      %p164 = por %p162, %p163
      %p166 = scmp.ne.s32.totalorder %s151, %s165
      %p167 = scmp.eq.s32.totalorder %s38, 0
      %p168 = por %p166, %p167
      %s170 = sadd.s32 %s169, 1
      %p173 = scmp.eq.s32.totalorder %s32, 2
      %p174 = scmp.ne.s32.totalorder %s169, %s171
      %p175 = scmp.eq.s32.totalorder %s32, 0
      %p176 = por %p174, %p175
      %p177 = scmp.ne.s32.totalorder %s169, %s171
      %p178 = scmp.eq.s32.totalorder %s37, 2
      %p179 = por %p177, %p178
      %p180 = scmp.ne.s32.totalorder %s171, %s172
      %p181 = scmp.eq.s32.totalorder %s37, 0
      %p182 = por %p180, %p181
      %p183 = scmp.ne.s32.totalorder %s171, %s172
      %p184 = scmp.eq.s32.totalorder %s38, 2
      %p185 = por %p183, %p184
      %p187 = scmp.ne.s32.totalorder %s172, %s186
      %p188 = scmp.eq.s32.totalorder %s38, 0
      %p189 = por %p187, %p188
      %s191 = sadd.s32 %s190, 1
      %p194 = scmp.eq.s32.totalorder %s32, 2
      %p195 = scmp.ne.s32.totalorder %s190, %s192
      %p196 = scmp.eq.s32.totalorder %s32, 0
      %p197 = por %p195, %p196
      %p198 = scmp.ne.s32.totalorder %s190, %s192
      %p199 = scmp.eq.s32.totalorder %s37, 2
      %p200 = por %p198, %p199
      %p201 = scmp.ne.s32.totalorder %s192, %s193
      %p202 = scmp.eq.s32.totalorder %s37, 0
      %p203 = por %p201, %p202
      %p204 = scmp.ne.s32.totalorder %s192, %s193
      %p205 = scmp.eq.s32.totalorder %s38, 2
      %p206 = por %p204, %p205
      %p208 = scmp.ne.s32.totalorder %s193, %s207
      %p209 = scmp.eq.s32.totalorder %s38, 0
      %p210 = por %p208, %p209
      %s212 = sadd.s32 %s211, 1
      %p215 = scmp.eq.s32.totalorder %s32, 2
      %p216 = scmp.ne.s32.totalorder %s211, %s213
      %p217 = scmp.eq.s32.totalorder %s32, 0
      %p218 = por %p216, %p217
      %p219 = scmp.ne.s32.totalorder %s211, %s213
      %p220 = scmp.eq.s32.totalorder %s37, 2
      %p221 = por %p219, %p220
      %p222 = scmp.ne.s32.totalorder %s213, %s214
      %p223 = scmp.eq.s32.totalorder %s37, 0
      %p224 = por %p222, %p223
      %p225 = scmp.ne.s32.totalorder %s213, %s214
      %p226 = scmp.eq.s32.totalorder %s38, 2
      %p227 = por %p225, %p226
      %p229 = scmp.ne.s32.totalorder %s214, %s228
      %p230 = scmp.eq.s32.totalorder %s38, 0
      %p231 = por %p229, %p230
      %s233 = sadd.s32 %s232, 1
      %p236 = scmp.eq.s32.totalorder %s32, 2
      %p237 = scmp.ne.s32.totalorder %s232, %s234
      %p238 = scmp.eq.s32.totalorder %s32, 0
      %p239 = por %p237, %p238
      %p240 = scmp.ne.s32.totalorder %s232, %s234
      %p241 = scmp.eq.s32.totalorder %s37, 2
      %p242 = por %p240, %p241
      %p243 = scmp.ne.s32.totalorder %s234, %s235
      %p244 = scmp.eq.s32.totalorder %s37, 0
      %p245 = por %p243, %p244
      %p246 = scmp.ne.s32.totalorder %s234, %s235
      %p247 = scmp.eq.s32.totalorder %s38, 2
      %p248 = por %p246, %p247
      %p250 = scmp.ne.s32.totalorder %s235, %s249
      %p251 = scmp.eq.s32.totalorder %s38, 0
      %p252 = por %p250, %p251
      %s254 = sadd.s32 %s253, 1
      %p257 = scmp.eq.s32.totalorder %s32, 2
      %p258 = scmp.ne.s32.totalorder %s253, %s255
      %p259 = scmp.eq.s32.totalorder %s32, 0
      %p260 = por %p258, %p259
      %p261 = scmp.ne.s32.totalorder %s253, %s255
      %p262 = scmp.eq.s32.totalorder %s37, 2
      %p263 = por %p261, %p262
      %p264 = scmp.ne.s32.totalorder %s255, %s256
      %p265 = scmp.eq.s32.totalorder %s37, 0
      %p266 = por %p264, %p265
      %p267 = scmp.ne.s32.totalorder %s255, %s256
      %p268 = scmp.eq.s32.totalorder %s38, 2
      %p269 = por %p267, %p268
      %p271 = scmp.ne.s32.totalorder %s256, %s270
      %p272 = scmp.eq.s32.totalorder %s38, 0
      %p273 = por %p271, %p272
      %s275 = sadd.s32 %s274, 1
      %p278 = scmp.eq.s32.totalorder %s32, 2
      %p279 = scmp.ne.s32.totalorder %s274, %s276
      %p280 = scmp.eq.s32.totalorder %s32, 0
      %p281 = por %p279, %p280
      %p282 = scmp.ne.s32.totalorder %s274, %s276
      %p283 = scmp.eq.s32.totalorder %s37, 2
      %p284 = por %p282, %p283
      %p285 = scmp.ne.s32.totalorder %s276, %s277
      %p286 = scmp.eq.s32.totalorder %s37, 0
      %p287 = por %p285, %p286
      %p288 = scmp.ne.s32.totalorder %s276, %s277
      %p289 = scmp.eq.s32.totalorder %s38, 2
      %p290 = por %p288, %p289
      %p292 = scmp.ne.s32.totalorder %s277, %s291
      %p293 = scmp.eq.s32.totalorder %s38, 0
      %p294 = por %p292, %p293
      %s296 = sadd.s32 %s295, 1
      %p299 = scmp.eq.s32.totalorder %s32, 2
      %p300 = scmp.ne.s32.totalorder %s295, %s297
      %p301 = scmp.eq.s32.totalorder %s32, 0
      %p302 = por %p300, %p301
      %p303 = scmp.ne.s32.totalorder %s295, %s297
      %p304 = scmp.eq.s32.totalorder %s37, 2
      %p305 = por %p303, %p304
      %p306 = scmp.ne.s32.totalorder %s297, %s298
      %p307 = scmp.eq.s32.totalorder %s37, 0
      %p308 = por %p306, %p307
      %p309 = scmp.ne.s32.totalorder %s297, %s298
      %p310 = scmp.eq.s32.totalorder %s38, 2
      %p311 = por %p309, %p310
      %p313 = scmp.ne.s32.totalorder %s298, %s312
      %p314 = scmp.eq.s32.totalorder %s38, 0
      %p315 = por %p313, %p314
      %s317 = sadd.s32 %s316, 1
      %p320 = scmp.eq.s32.totalorder %s32, 2
      %p321 = scmp.ne.s32.totalorder %s316, %s318
      %p322 = scmp.eq.s32.totalorder %s32, 0
      %p323 = por %p321, %p322
      %p324 = scmp.ne.s32.totalorder %s316, %s318
      %p325 = scmp.eq.s32.totalorder %s37, 2
      %p326 = por %p324, %p325
      %p327 = scmp.ne.s32.totalorder %s318, %s319
      %p328 = scmp.eq.s32.totalorder %s37, 0
      %p329 = por %p327, %p328
      %p330 = scmp.ne.s32.totalorder %s318, %s319
      %p331 = scmp.eq.s32.totalorder %s38, 2
      %p332 = por %p330, %p331
      %p334 = scmp.ne.s32.totalorder %s319, %s333
      %p335 = scmp.eq.s32.totalorder %s38, 0
      %p336 = por %p334, %p335
      %s338 = sadd.s32 %s337, 1
      %p341 = scmp.eq.s32.totalorder %s32, 2
      %p342 = scmp.ne.s32.totalorder %s337, %s339
      %p343 = scmp.eq.s32.totalorder %s32, 0
      %p344 = por %p342, %p343
      %p345 = scmp.ne.s32.totalorder %s337, %s339
      %p346 = scmp.eq.s32.totalorder %s37, 2
      %p347 = por %p345, %p346
      %p348 = scmp.ne.s32.totalorder %s339, %s340
      %p349 = scmp.eq.s32.totalorder %s37, 0
      %p350 = por %p348, %p349
      %p351 = scmp.ne.s32.totalorder %s339, %s340
      %p352 = scmp.eq.s32.totalorder %s38, 2
      %p353 = por %p351, %p352
      %p355 = scmp.ne.s32.totalorder %s340, %s354
      %p356 = scmp.eq.s32.totalorder %s38, 0
      %p357 = por %p355, %p356
      %s359 = sadd.s32 %s358, 1
      %p362 = scmp.eq.s32.totalorder %s32, 2
      %p363 = scmp.ne.s32.totalorder %s358, %s360
      %p364 = scmp.eq.s32.totalorder %s32, 0
      %p365 = por %p363, %p364
      %p366 = scmp.ne.s32.totalorder %s358, %s360
      %p367 = scmp.eq.s32.totalorder %s37, 2
      %p368 = por %p366, %p367
      %p369 = scmp.ne.s32.totalorder %s360, %s361
      %p370 = scmp.eq.s32.totalorder %s37, 0
      %p371 = por %p369, %p370
      %p372 = scmp.ne.s32.totalorder %s360, %s361
      %p373 = scmp.eq.s32.totalorder %s38, 2
      %p374 = por %p372, %p373
      %p376 = scmp.ne.s32.totalorder %s361, %s375
      %p377 = scmp.eq.s32.totalorder %s38, 0
      %p378 = por %p376, %p377
      %s380 = sadd.s32 %s379, 1
      %p383 = scmp.eq.s32.totalorder %s32, 2
      %p384 = scmp.ne.s32.totalorder %s379, %s381
      %p385 = scmp.eq.s32.totalorder %s32, 0
      %p386 = por %p384, %p385
      %p387 = scmp.ne.s32.totalorder %s379, %s381
      %p388 = scmp.eq.s32.totalorder %s37, 2
      %p389 = por %p387, %p388
      %p390 = scmp.ne.s32.totalorder %s381, %s382
      %p391 = scmp.eq.s32.totalorder %s37, 0
      %p392 = por %p390, %p391
      %p393 = scmp.ne.s32.totalorder %s381, %s382
      %p394 = scmp.eq.s32.totalorder %s38, 2
      %p395 = por %p393, %p394
      %p397 = scmp.ne.s32.totalorder %s382, %s396
      %p398 = scmp.eq.s32.totalorder %s38, 0
      %p399 = por %p397, %p398
      %s401 = sadd.s32 %s400, 1
      %p404 = scmp.eq.s32.totalorder %s32, 2
      %p405 = scmp.ne.s32.totalorder %s400, %s402
      %p406 = scmp.eq.s32.totalorder %s32, 0
      %p407 = por %p405, %p406
      %p408 = scmp.ne.s32.totalorder %s400, %s402
      %p409 = scmp.eq.s32.totalorder %s37, 2
      %p410 = por %p408, %p409
      %p411 = scmp.ne.s32.totalorder %s402, %s403
      %p412 = scmp.eq.s32.totalorder %s37, 0
      %p413 = por %p411, %p412
      %p414 = scmp.ne.s32.totalorder %s402, %s403
      %p415 = scmp.eq.s32.totalorder %s38, 2
      %p416 = por %p414, %p415
      %p418 = scmp.ne.s32.totalorder %s403, %s417
      %p419 = scmp.eq.s32.totalorder %s38, 0
      %p420 = por %p418, %p419
      %s422 = sadd.s32 %s421, 1
      %p425 = scmp.eq.s32.totalorder %s32, 2
      %p426 = scmp.ne.s32.totalorder %s421, %s423
      %p427 = scmp.eq.s32.totalorder %s32, 0
      %p428 = por %p426, %p427
      %p429 = scmp.ne.s32.totalorder %s421, %s423
      %p430 = scmp.eq.s32.totalorder %s37, 2
      %p431 = por %p429, %p430
      %p432 = scmp.ne.s32.totalorder %s423, %s424
      %p433 = scmp.eq.s32.totalorder %s37, 0
      %p434 = por %p432, %p433
      %p435 = scmp.ne.s32.totalorder %s423, %s424
      %p436 = scmp.eq.s32.totalorder %s38, 2
      %p437 = por %p435, %p436
      %p439 = scmp.ne.s32.totalorder %s424, %s438
      %p440 = scmp.eq.s32.totalorder %s38, 0
      %p441 = por %p439, %p440
      %s443 = sadd.s32 %s442, 1
      %p446 = scmp.eq.s32.totalorder %s32, 2
      %p447 = scmp.ne.s32.totalorder %s442, %s444
      %p448 = scmp.eq.s32.totalorder %s32, 0
      %p449 = por %p447, %p448
      %p450 = scmp.ne.s32.totalorder %s442, %s444
      %p451 = scmp.eq.s32.totalorder %s37, 2
      %p452 = por %p450, %p451
      %p453 = scmp.ne.s32.totalorder %s444, %s445
      %p454 = scmp.eq.s32.totalorder %s37, 0
      %p455 = por %p453, %p454
      %p456 = scmp.ne.s32.totalorder %s444, %s445
      %p457 = scmp.eq.s32.totalorder %s38, 2
      %p458 = por %p456, %p457
      %p460 = scmp.ne.s32.totalorder %s445, %s459
      %p461 = scmp.eq.s32.totalorder %s38, 0
      %p462 = por %p460, %p461
      %s463 = ssub.s32 %s39, %s51
      %p464 = scmp.eq.s32.totalorder %s463, 0
      %s466 = sadd.s32 %s465, 1
      %s467 = scalar_select %p464, %s465, %s466
      %p470 = pneg %p464
      %p471 = scmp.eq.s32.totalorder %s32, 2
      %p472 = por %p470, %p471
      %p473 = scmp.ne.s32.totalorder %s465, %s468
      %p474 = scmp.eq.s32.totalorder %s32, 0
      %p475 = por %p473, %p474
      %p476 = scmp.ne.s32.totalorder %s465, %s468
      %p477 = scmp.eq.s32.totalorder %s37, 2
      %p478 = por %p476, %p477
      %p479 = scmp.ne.s32.totalorder %s468, %s469
      %p480 = scmp.eq.s32.totalorder %s37, 0
      %p481 = por %p479, %p480
      %p482 = scmp.ne.s32.totalorder %s468, %s469
      %p483 = scmp.eq.s32.totalorder %s38, 2
      %p484 = por %p482, %p483
      %p486 = scmp.ne.s32.totalorder %s469, %s485
      %p487 = scmp.eq.s32.totalorder %s38, 0
      %p488 = por %p486, %p487
      %p489 = scmp.le.s32.totalorder 1, %s32
      %p490 = scmp.lt.s32.totalorder %s32, 4
      %p491 = pnand %p489, %p490
      %p492 = pneg %p491
      // Predicated region
      $region9: #{tpu_custom_call.1} parent=5 // pred_check
        _
      $region10: #{tpu_custom_call.1} parent=5 // pred_check_branch
        %494 = sbr.rel (%p491) target = $region12
      $region11: #{tpu_custom_call.1} parent=5 // pred_region
        %s495 = ssub.s32 %s32, 1
        // Predicated region
        $region13: #{tpu_custom_call.1} parent=11 // pred_check
          %p496 = pneg %p98
        $region14: #{tpu_custom_call.1} parent=11 // pred_check_branch
          %498 = sbr.rel (%p496) target = $region16
        $region15: #{tpu_custom_call.1} parent=11 // pred_region
          %p499 = scmp.lt.s32.totalorder %s41, 0
          %s500 = scalar_select %p499, %s41, 0
          %s501 = smul.addr %s500, 4
          %s502 = scalar_lea.vmem %s1, %s501
        $region16: #{tpu_custom_call.1} parent=11 // pred_fallthru
          _
        // Predicated region
        $region17: #{tpu_custom_call.1} parent=11 // pred_check
          %p503 = pneg %p119
        $region18: #{tpu_custom_call.1} parent=11 // pred_check_branch
          %505 = sbr.rel (%p503) target = $region20
        $region19: #{tpu_custom_call.1} parent=11 // pred_region
          _
        $region20: #{tpu_custom_call.1} parent=11 // pred_fallthru
          _
        // Predicated region
        $region21: #{tpu_custom_call.1} parent=11 // pred_check
          %p506 = pneg %p140
        $region22: #{tpu_custom_call.1} parent=11 // pred_check_branch
          %508 = sbr.rel (%p506) target = $region24
        $region23: #{tpu_custom_call.1} parent=11 // pred_region
          %510 = vsyncadd [#allocation5], 0
          %s511 = sshll.u32 %s3, 4
          %s512 = int_to_ptr.hbm [resolvable:$true] %s511
          %s513 = sshll.u32 [#allocation4], 4
          %s514 = int_to_ptr.vmem [resolvable:$true] %s513
          %519 = dma.hbm_to_vmem [thread:$0]  %s512, 256, %s514, [#allocation5], 64, 64, 4
        $region24: #{tpu_custom_call.1} parent=11 // pred_fallthru
          _
        // Predicated region
        $region25: #{tpu_custom_call.1} parent=11 // pred_check
          %p520 = pneg %p161
        $region26: #{tpu_custom_call.1} parent=11 // pred_check_branch
          %522 = sbr.rel (%p520) target = $region28
        $region27: #{tpu_custom_call.1} parent=11 // pred_region
          %524 = vsyncadd [#allocation8], 0
          %s526 = sshll.u32 %s4, 4
          %s527 = int_to_ptr.hbm [resolvable:$true] %s526
          %s528 = sshll.u32 [#allocation7], 4
          %s529 = int_to_ptr.vmem [resolvable:$true] %s528
          %531 = dma.hbm_to_vmem [thread:$0]  %s527, 16, %s529, [#allocation8]
        $region28: #{tpu_custom_call.1} parent=11 // pred_fallthru
          _
        // Predicated region
        $region29: #{tpu_custom_call.1} parent=11 // pred_check
          %p532 = pneg %p182
        $region30: #{tpu_custom_call.1} parent=11 // pred_check_branch
          %534 = sbr.rel (%p532) target = $region32
        $region31: #{tpu_custom_call.1} parent=11 // pred_region
          %536 = vsyncadd [#allocation8], 0
          %s538 = sshll.u32 %s5, 4
          %s539 = int_to_ptr.hbm [resolvable:$true] %s538
          %s540 = sshll.u32 [#allocation9], 4
          %s541 = int_to_ptr.vmem [resolvable:$true] %s540
          %543 = dma.hbm_to_vmem [thread:$0]  %s539, 64, %s541, [#allocation8]
        $region32: #{tpu_custom_call.1} parent=11 // pred_fallthru
          _
        // Predicated region
        $region33: #{tpu_custom_call.1} parent=11 // pred_check
          %p544 = pneg %p203
        $region34: #{tpu_custom_call.1} parent=11 // pred_check_branch
          %546 = sbr.rel (%p544) target = $region36
        $region35: #{tpu_custom_call.1} parent=11 // pred_region
          _
        $region36: #{tpu_custom_call.1} parent=11 // pred_fallthru
          _
        // Predicated region
        $region37: #{tpu_custom_call.1} parent=11 // pred_check
          %p547 = pneg %p224
        $region38: #{tpu_custom_call.1} parent=11 // pred_check_branch
          %549 = sbr.rel (%p547) target = $region40
        $region39: #{tpu_custom_call.1} parent=11 // pred_region
          %551 = vsyncadd [#allocation11], 0
          %s553 = sshll.u32 %s7, 4
          %s554 = int_to_ptr.hbm [resolvable:$true] %s553
          %s555 = sshll.u32 [#allocation10], 4
          %s556 = int_to_ptr.vmem [resolvable:$true] %s555
          %558 = dma.hbm_to_vmem [thread:$0]  %s554, 16, %s556, [#allocation11]
        $region40: #{tpu_custom_call.1} parent=11 // pred_fallthru
          _
        // Predicated region
        $region41: #{tpu_custom_call.1} parent=11 // pred_check
          %p559 = pneg %p245
        $region42: #{tpu_custom_call.1} parent=11 // pred_check_branch
          %561 = sbr.rel (%p559) target = $region44
        $region43: #{tpu_custom_call.1} parent=11 // pred_region
          _
        $region44: #{tpu_custom_call.1} parent=11 // pred_fallthru
          _
        // Predicated region
        $region45: #{tpu_custom_call.1} parent=11 // pred_check
          %p562 = pneg %p266
        $region46: #{tpu_custom_call.1} parent=11 // pred_check_branch
          %564 = sbr.rel (%p562) target = $region48
        $region47: #{tpu_custom_call.1} parent=11 // pred_region
          _
        $region48: #{tpu_custom_call.1} parent=11 // pred_fallthru
          _
        // Predicated region
        $region49: #{tpu_custom_call.1} parent=11 // pred_check
          %p565 = pneg %p287
        $region50: #{tpu_custom_call.1} parent=11 // pred_check_branch
          %567 = sbr.rel (%p565) target = $region52
        $region51: #{tpu_custom_call.1} parent=11 // pred_region
          %569 = vsyncadd [#allocation11], 0
          %s570 = sshll.u32 %s10, 4
          %s571 = int_to_ptr.hbm [resolvable:$true] %s570
          %s572 = sshll.u32 [#allocation12], 4
          %s573 = int_to_ptr.vmem [resolvable:$true] %s572
          %578 = dma.hbm_to_vmem [thread:$0]  %s571, 1024, %s573, [#allocation11], 128, 128, 8
        $region52: #{tpu_custom_call.1} parent=11 // pred_fallthru
          _
        // Predicated region
        $region53: #{tpu_custom_call.1} parent=11 // pred_check
          %p579 = pneg %p308
        $region54: #{tpu_custom_call.1} parent=11 // pred_check_branch
          %581 = sbr.rel (%p579) target = $region56
        $region55: #{tpu_custom_call.1} parent=11 // pred_region
          _
        $region56: #{tpu_custom_call.1} parent=11 // pred_fallthru
          _
        // Predicated region
        $region57: #{tpu_custom_call.1} parent=11 // pred_check
          %p582 = pneg %p329
        $region58: #{tpu_custom_call.1} parent=11 // pred_check_branch
          %584 = sbr.rel (%p582) target = $region60
        $region59: #{tpu_custom_call.1} parent=11 // pred_region
          %586 = vsyncadd [#allocation14], 0
          %s588 = sshll.u32 %s12, 4
          %s589 = int_to_ptr.hbm [resolvable:$true] %s588
          %s590 = sshll.u32 [#allocation13], 4
          %s591 = int_to_ptr.vmem [resolvable:$true] %s590
          %593 = dma.hbm_to_vmem [thread:$0]  %s589, 32, %s591, [#allocation14]
        $region60: #{tpu_custom_call.1} parent=11 // pred_fallthru
          _
        // Predicated region
        $region61: #{tpu_custom_call.1} parent=11 // pred_check
          %p594 = pneg %p350
        $region62: #{tpu_custom_call.1} parent=11 // pred_check_branch
          %596 = sbr.rel (%p594) target = $region64
        $region63: #{tpu_custom_call.1} parent=11 // pred_region
          %598 = vsyncadd [#allocation14], 0
          %s599 = sshll.u32 %s13, 4
          %s600 = int_to_ptr.hbm [resolvable:$true] %s599
          %s601 = sshll.u32 [#allocation15], 4
          %s602 = int_to_ptr.vmem [resolvable:$true] %s601
          %607 = dma.hbm_to_vmem [thread:$0]  %s600, 2048, %s602, [#allocation14], 64, 64, 4
        $region64: #{tpu_custom_call.1} parent=11 // pred_fallthru
          _
        // Predicated region
        $region65: #{tpu_custom_call.1} parent=11 // pred_check
          %p608 = pneg %p371
        $region66: #{tpu_custom_call.1} parent=11 // pred_check_branch
          %610 = sbr.rel (%p608) target = $region68
        $region67: #{tpu_custom_call.1} parent=11 // pred_region
          %612 = vsyncadd [#allocation17], 0
          %s614 = sshll.u32 %s14, 4
          %s615 = int_to_ptr.hbm [resolvable:$true] %s614
          %s616 = sshll.u32 [#allocation16], 4
          %s617 = int_to_ptr.vmem [resolvable:$true] %s616
          %619 = dma.hbm_to_vmem [thread:$0]  %s615, 16, %s617, [#allocation17]
        $region68: #{tpu_custom_call.1} parent=11 // pred_fallthru
          _
        // Predicated region
        $region69: #{tpu_custom_call.1} parent=11 // pred_check
          %p620 = pneg %p392
        $region70: #{tpu_custom_call.1} parent=11 // pred_check_branch
          %622 = sbr.rel (%p620) target = $region72
        $region71: #{tpu_custom_call.1} parent=11 // pred_region
          %624 = vsyncadd [#allocation17], 0
          %s625 = sshll.u32 %s15, 4
          %s626 = int_to_ptr.hbm [resolvable:$true] %s625
          %s627 = sshll.u32 [#allocation18], 4
          %s628 = int_to_ptr.vmem [resolvable:$true] %s627
          %633 = dma.hbm_to_vmem [thread:$0]  %s626, 1024, %s628, [#allocation17], 64, 64, 4
        $region72: #{tpu_custom_call.1} parent=11 // pred_fallthru
          _
        // Predicated region
        $region73: #{tpu_custom_call.1} parent=11 // pred_check
          %p634 = pneg %p413
        $region74: #{tpu_custom_call.1} parent=11 // pred_check_branch
          %636 = sbr.rel (%p634) target = $region76
        $region75: #{tpu_custom_call.1} parent=11 // pred_region
          _
        $region76: #{tpu_custom_call.1} parent=11 // pred_fallthru
          _
        // Predicated region
        $region77: #{tpu_custom_call.1} parent=11 // pred_check
          %p637 = pneg %p434
        $region78: #{tpu_custom_call.1} parent=11 // pred_check_branch
          %639 = sbr.rel (%p637) target = $region80
        $region79: #{tpu_custom_call.1} parent=11 // pred_region
          %641 = vsyncadd [#allocation20], 0
          %s642 = sshll.u32 %s17, 4
          %s643 = int_to_ptr.hbm [resolvable:$true] %s642
          %s644 = sshll.u32 [#allocation19], 4
          %s645 = int_to_ptr.vmem [resolvable:$true] %s644
          %650 = dma.hbm_to_vmem [thread:$0]  %s643, 1024, %s645, [#allocation20], 64, 64, 4
        $region80: #{tpu_custom_call.1} parent=11 // pred_fallthru
          _
        // Predicated region
        $region81: #{tpu_custom_call.1} parent=11 // pred_check
          %p651 = pneg %p455
        $region82: #{tpu_custom_call.1} parent=11 // pred_check_branch
          %653 = sbr.rel (%p651) target = $region84
        $region83: #{tpu_custom_call.1} parent=11 // pred_region
          _
        $region84: #{tpu_custom_call.1} parent=11 // pred_fallthru
          _
      $region12: #{tpu_custom_call.1} parent=5 // pred_fallthru
        _
      %p654 = scmp.lt.s32.totalorder %s32, 3
      // Predicated region
      $region85: #{tpu_custom_call.1} parent=5 // pred_check
        %p655 = pneg %p654
      $region86: #{tpu_custom_call.1} parent=5 // pred_check_branch
        %657 = sbr.rel (%p655) target = $region88
      $region87: #{tpu_custom_call.1} parent=5 // pred_region
        // Predicated region
        $region89: #{tpu_custom_call.1} parent=87 // pred_check
          %p658 = pneg %p66
        $region90: #{tpu_custom_call.1} parent=87 // pred_check_branch
          %660 = sbr.rel (%p658) target = $region92
        $region91: #{tpu_custom_call.1} parent=87 // pred_region
          %s661 = sand.u32 %s56, 1
          %s662 = sand.u32 %s56, 1
          %s663 = smul.addr %s662, 128
          %s664 = scalar_lea.vmem [#allocation3], %s663
          %s665 = smul.u32 8, %s39
          %s666 = smul.u32 4, %s40
          %s667 = smul.addr %s665, 12
          %s668 = sadd.s32 %s666, %s667
          %s669 = smul.addr %s668, 4
          %s670 = scalar_lea.vmem %s0, %s669
          // Predicated region
          $region93: #{tpu_custom_call.1} parent=91 // pred_check
            _
          $region94: #{tpu_custom_call.1} parent=91 // pred_check_branch
            %672 = sbr.rel (0) target = $region96
          $region95: #{tpu_custom_call.1} parent=91 // pred_region
            // Predicated region
            $region97: #{tpu_custom_call.1} parent=95 // pred_check
              _
            $region98: #{tpu_custom_call.1} parent=95 // pred_check_branch
              %674 = sbr.rel target = $region100
            $region99: #{tpu_custom_call.1} parent=95 // pred_region
              // Predicated region
              $region112: #{tpu_custom_call.1} parent=99 // pred_check
                _
              $region113: #{tpu_custom_call.1} parent=99 // pred_check_branch
                %752 = sbr.rel (0) target = $region115
              $region114: #{tpu_custom_call.1} parent=99 // pred_region
                loop: start=0, step=1, limit=1
                $region116: #{tpu_custom_call.1} parent=114 // loop_pre_header
                  _
                $region117: #{tpu_custom_call.1} parent=114 // loop_header
                  %s754 = sphi 0, %s758
                  %p755 = scmp.ge.s32.totalorder %s754, 1
                  %s759 = sphi %s670, %s670
                  %s760 = sphi %s664, %s664
                $region118: #{tpu_custom_call.1} parent=114 // loop_header_branch
                  %757 = sbr.rel (%p755) target = $region122
                $region119: #{tpu_custom_call.1} parent=114 // loop_body
                  _
                $region120: #{tpu_custom_call.1} parent=114 // loop_footer
                  %s758 = sadd.s32 1, %s754
                $region121: #{tpu_custom_call.1} parent=114 // loop_footer_branch
                  %753 = sbr.rel target = $region117
                $region122: #{tpu_custom_call.1} parent=114 // loop_exit
                  _
                %s762 = ssub.s32 16, 1
                loop: start=0, step=1, limit=1
                $region123: #{tpu_custom_call.1} parent=114 // loop_pre_header
                  _
                $region124: #{tpu_custom_call.1} parent=114 // loop_header
                  %s764 = sphi 0, %s768
                  %p765 = scmp.ge.s32.totalorder %s764, 1
                  %s769 = sphi %s670, %s670
                  %s770 = sphi %s664, %s664
                $region125: #{tpu_custom_call.1} parent=114 // loop_header_branch
                  %767 = sbr.rel (%p765) target = $region129
                $region126: #{tpu_custom_call.1} parent=114 // loop_body
                  %v771 = vld [vmem:[%s769] sm:%s762]
                  %772 = vst [vmem:[%s770] sm:%s762] %v771
                  %v773 = vld [vmem:[%s769 + $0x4] sm:%s762]
                  %774 = vst [vmem:[%s770 + $0x4] sm:%s762] %v773
                  %v775 = vld [vmem:[%s769 + $0x8] sm:%s762]
                  %776 = vst [vmem:[%s770 + $0x8] sm:%s762] %v775
                  %v777 = vld [vmem:[%s769 + $0xc] sm:%s762]
                  %778 = vst [vmem:[%s770 + $0xc] sm:%s762] %v777
                  %v779 = vld [vmem:[%s769 + $0x30] sm:%s762]
                  %780 = vst [vmem:[%s770 + $0x10] sm:%s762] %v779
                  %v781 = vld [vmem:[%s769 + $0x34] sm:%s762]
                  %782 = vst [vmem:[%s770 + $0x14] sm:%s762] %v781
                  %v783 = vld [vmem:[%s769 + $0x38] sm:%s762]
                  %784 = vst [vmem:[%s770 + $0x18] sm:%s762] %v783
                  %v785 = vld [vmem:[%s769 + $0x3c] sm:%s762]
                  %786 = vst [vmem:[%s770 + $0x1c] sm:%s762] %v785
                  %v787 = vld [vmem:[%s769 + $0x60] sm:%s762]
                  %788 = vst [vmem:[%s770 + $0x20] sm:%s762] %v787
                  %v789 = vld [vmem:[%s769 + $0x64] sm:%s762]
                  %790 = vst [vmem:[%s770 + $0x24] sm:%s762] %v789
                  %v791 = vld [vmem:[%s769 + $0x68] sm:%s762]
                  %792 = vst [vmem:[%s770 + $0x28] sm:%s762] %v791
                  %v793 = vld [vmem:[%s769 + $0x6c] sm:%s762]
                  %794 = vst [vmem:[%s770 + $0x2c] sm:%s762] %v793
                  %v795 = vld [vmem:[%s769 + $0x90] sm:%s762]
                  %796 = vst [vmem:[%s770 + $0x30] sm:%s762] %v795
                  %v797 = vld [vmem:[%s769 + $0x94] sm:%s762]
                  %798 = vst [vmem:[%s770 + $0x34] sm:%s762] %v797
                  %v799 = vld [vmem:[%s769 + $0x98] sm:%s762]
                  %800 = vst [vmem:[%s770 + $0x38] sm:%s762] %v799
                  %v801 = vld [vmem:[%s769 + $0x9c] sm:%s762]
                  %802 = vst [vmem:[%s770 + $0x3c] sm:%s762] %v801
                  %v803 = vld [vmem:[%s769 + $0xc0] sm:%s762]
                  %804 = vst [vmem:[%s770 + $0x40] sm:%s762] %v803
                  %v805 = vld [vmem:[%s769 + $0xc4] sm:%s762]
                  %806 = vst [vmem:[%s770 + $0x44] sm:%s762] %v805
                  %v807 = vld [vmem:[%s769 + $0xc8] sm:%s762]
                  %808 = vst [vmem:[%s770 + $0x48] sm:%s762] %v807
                  %v809 = vld [vmem:[%s769 + $0xcc] sm:%s762]
                  %810 = vst [vmem:[%s770 + $0x4c] sm:%s762] %v809
                  %v811 = vld [vmem:[%s769 + $0xf0] sm:%s762]
                  %812 = vst [vmem:[%s770 + $0x50] sm:%s762] %v811
                  %v813 = vld [vmem:[%s769 + $0xf4] sm:%s762]
                  %814 = vst [vmem:[%s770 + $0x54] sm:%s762] %v813
                  %v815 = vld [vmem:[%s769 + $0xf8] sm:%s762]
                  %816 = vst [vmem:[%s770 + $0x58] sm:%s762] %v815
                  %v817 = vld [vmem:[%s769 + $0xfc] sm:%s762]
                  %818 = vst [vmem:[%s770 + $0x5c] sm:%s762] %v817
                  %v819 = vld [vmem:[%s769 + $0x120] sm:%s762]
                  %820 = vst [vmem:[%s770 + $0x60] sm:%s762] %v819
                  %v821 = vld [vmem:[%s769 + $0x124] sm:%s762]
                  %822 = vst [vmem:[%s770 + $0x64] sm:%s762] %v821
                  %v823 = vld [vmem:[%s769 + $0x128] sm:%s762]
                  %824 = vst [vmem:[%s770 + $0x68] sm:%s762] %v823
                  %v825 = vld [vmem:[%s769 + $0x12c] sm:%s762]
                  %826 = vst [vmem:[%s770 + $0x6c] sm:%s762] %v825
                  %v827 = vld [vmem:[%s769 + $0x150] sm:%s762]
                  %828 = vst [vmem:[%s770 + $0x70] sm:%s762] %v827
                  %v829 = vld [vmem:[%s769 + $0x154] sm:%s762]
                  %830 = vst [vmem:[%s770 + $0x74] sm:%s762] %v829
                  %v831 = vld [vmem:[%s769 + $0x158] sm:%s762]
                  %832 = vst [vmem:[%s770 + $0x78] sm:%s762] %v831
                  %v833 = vld [vmem:[%s769 + $0x15c] sm:%s762]
                  %834 = vst [vmem:[%s770 + $0x7c] sm:%s762] %v833
                $region127: #{tpu_custom_call.1} parent=114 // loop_footer
                  %s768 = sadd.s32 1, %s764
                $region128: #{tpu_custom_call.1} parent=114 // loop_footer_branch
                  %763 = sbr.rel target = $region124
                $region129: #{tpu_custom_call.1} parent=114 // loop_exit
                  _
              $region115: #{tpu_custom_call.1} parent=99 // pred_fallthru
                _
            $region100: #{tpu_custom_call.1} parent=95 // pred_fallthru
              _
            // Predicated region
            $region101: #{tpu_custom_call.1} parent=95 // pred_check
              _
            $region102: #{tpu_custom_call.1} parent=95 // pred_check_branch
              %676 = sbr.rel (0) target = $region104
            $region103: #{tpu_custom_call.1} parent=95 // pred_region
              %s678 = ssub.s32 16, 1
              loop: start=0, step=1, limit=1
              $region105: #{tpu_custom_call.1} parent=103 // loop_pre_header
                _
              $region106: #{tpu_custom_call.1} parent=103 // loop_header
                %s680 = sphi 0, %s684
                %p681 = scmp.ge.s32.totalorder %s680, 1
                %s685 = sphi %s670, %s670
                %s686 = sphi %s664, %s664
              $region107: #{tpu_custom_call.1} parent=103 // loop_header_branch
                %683 = sbr.rel (%p681) target = $region111
              $region108: #{tpu_custom_call.1} parent=103 // loop_body
                %v687 = vld [vmem:[%s685] sm:%s678]
                %688 = vst [vmem:[%s686] sm:%s678] %v687
                %v689 = vld [vmem:[%s685 + $0x4] sm:%s678]
                %690 = vst [vmem:[%s686 + $0x4] sm:%s678] %v689
                %v691 = vld [vmem:[%s685 + $0x8] sm:%s678]
                %692 = vst [vmem:[%s686 + $0x8] sm:%s678] %v691
                %v693 = vld [vmem:[%s685 + $0xc] sm:%s678]
                %694 = vst [vmem:[%s686 + $0xc] sm:%s678] %v693
                %v695 = vld [vmem:[%s685 + $0x30] sm:%s678]
                %696 = vst [vmem:[%s686 + $0x10] sm:%s678] %v695
                %v697 = vld [vmem:[%s685 + $0x34] sm:%s678]
                %698 = vst [vmem:[%s686 + $0x14] sm:%s678] %v697
                %v699 = vld [vmem:[%s685 + $0x38] sm:%s678]
                %700 = vst [vmem:[%s686 + $0x18] sm:%s678] %v699
                %v701 = vld [vmem:[%s685 + $0x3c] sm:%s678]
                %702 = vst [vmem:[%s686 + $0x1c] sm:%s678] %v701
                %v703 = vld [vmem:[%s685 + $0x60] sm:%s678]
                %704 = vst [vmem:[%s686 + $0x20] sm:%s678] %v703
                %v705 = vld [vmem:[%s685 + $0x64] sm:%s678]
                %706 = vst [vmem:[%s686 + $0x24] sm:%s678] %v705
                %v707 = vld [vmem:[%s685 + $0x68] sm:%s678]
                %708 = vst [vmem:[%s686 + $0x28] sm:%s678] %v707
                %v709 = vld [vmem:[%s685 + $0x6c] sm:%s678]
                %710 = vst [vmem:[%s686 + $0x2c] sm:%s678] %v709
                %v711 = vld [vmem:[%s685 + $0x90] sm:%s678]
                %712 = vst [vmem:[%s686 + $0x30] sm:%s678] %v711
                %v713 = vld [vmem:[%s685 + $0x94] sm:%s678]
                %714 = vst [vmem:[%s686 + $0x34] sm:%s678] %v713
                %v715 = vld [vmem:[%s685 + $0x98] sm:%s678]
                %716 = vst [vmem:[%s686 + $0x38] sm:%s678] %v715
                %v717 = vld [vmem:[%s685 + $0x9c] sm:%s678]
                %718 = vst [vmem:[%s686 + $0x3c] sm:%s678] %v717
                %v719 = vld [vmem:[%s685 + $0xc0] sm:%s678]
                %720 = vst [vmem:[%s686 + $0x40] sm:%s678] %v719
                %v721 = vld [vmem:[%s685 + $0xc4] sm:%s678]
                %722 = vst [vmem:[%s686 + $0x44] sm:%s678] %v721
                %v723 = vld [vmem:[%s685 + $0xc8] sm:%s678]
                %724 = vst [vmem:[%s686 + $0x48] sm:%s678] %v723
                %v725 = vld [vmem:[%s685 + $0xcc] sm:%s678]
                %726 = vst [vmem:[%s686 + $0x4c] sm:%s678] %v725
                %v727 = vld [vmem:[%s685 + $0xf0] sm:%s678]
                %728 = vst [vmem:[%s686 + $0x50] sm:%s678] %v727
                %v729 = vld [vmem:[%s685 + $0xf4] sm:%s678]
                %730 = vst [vmem:[%s686 + $0x54] sm:%s678] %v729
                %v731 = vld [vmem:[%s685 + $0xf8] sm:%s678]
                %732 = vst [vmem:[%s686 + $0x58] sm:%s678] %v731
                %v733 = vld [vmem:[%s685 + $0xfc] sm:%s678]
                %734 = vst [vmem:[%s686 + $0x5c] sm:%s678] %v733
                %v735 = vld [vmem:[%s685 + $0x120] sm:%s678]
                %736 = vst [vmem:[%s686 + $0x60] sm:%s678] %v735
                %v737 = vld [vmem:[%s685 + $0x124] sm:%s678]
                %738 = vst [vmem:[%s686 + $0x64] sm:%s678] %v737
                %v739 = vld [vmem:[%s685 + $0x128] sm:%s678]
                %740 = vst [vmem:[%s686 + $0x68] sm:%s678] %v739
                %v741 = vld [vmem:[%s685 + $0x12c] sm:%s678]
                %742 = vst [vmem:[%s686 + $0x6c] sm:%s678] %v741
                %v743 = vld [vmem:[%s685 + $0x150] sm:%s678]
                %744 = vst [vmem:[%s686 + $0x70] sm:%s678] %v743
                %v745 = vld [vmem:[%s685 + $0x154] sm:%s678]
                %746 = vst [vmem:[%s686 + $0x74] sm:%s678] %v745
                %v747 = vld [vmem:[%s685 + $0x158] sm:%s678]
                %748 = vst [vmem:[%s686 + $0x78] sm:%s678] %v747
                %v749 = vld [vmem:[%s685 + $0x15c] sm:%s678]
                %750 = vst [vmem:[%s686 + $0x7c] sm:%s678] %v749
              $region109: #{tpu_custom_call.1} parent=103 // loop_footer
                %s684 = sadd.s32 1, %s680
              $region110: #{tpu_custom_call.1} parent=103 // loop_footer_branch
                %679 = sbr.rel target = $region106
              $region111: #{tpu_custom_call.1} parent=103 // loop_exit
                _
            $region104: #{tpu_custom_call.1} parent=95 // pred_fallthru
              _
          $region96: #{tpu_custom_call.1} parent=91 // pred_fallthru
            _
          %835 = vnop
        $region92: #{tpu_custom_call.1} parent=87 // pred_fallthru
          _
      $region88: #{tpu_custom_call.1} parent=5 // pred_fallthru
        _
      %p836 = scmp.le.s32.totalorder 1, %s32
      %p837 = scmp.lt.s32.totalorder %s32, 4
      %p838 = pnand %p836, %p837
      %p839 = pneg %p838
      // Predicated region
      $region130: #{tpu_custom_call.1} parent=5 // pred_check
        _
      $region131: #{tpu_custom_call.1} parent=5 // pred_check_branch
        %841 = sbr.rel (%p838) target = $region133
      $region132: #{tpu_custom_call.1} parent=5 // pred_region
        %s842 = ssub.s32 %s32, 1
        %s843 = sand.u32 %s59, 1
        %s844 = sand.u32 %s59, 1
        %s845 = smul.addr %s844, 128
        %s846 = scalar_lea.vmem [#allocation3], %s845
        // Predicated region
        $region134: #{tpu_custom_call.1} parent=132 // pred_check
          %p847 = pneg %p72
        $region135: #{tpu_custom_call.1} parent=132 // pred_check_branch
          %849 = sbr.rel (%p847) target = $region137
        $region136: #{tpu_custom_call.1} parent=132 // pred_region
          _
        $region137: #{tpu_custom_call.1} parent=132 // pred_fallthru
          _
        // Predicated region
        $region138: #{tpu_custom_call.1} parent=132 // pred_check
          %p850 = pneg %p140
        $region139: #{tpu_custom_call.1} parent=132 // pred_check_branch
          %852 = sbr.rel (%p850) target = $region141
        $region140: #{tpu_custom_call.1} parent=132 // pred_region
          %854 = dma.done [#allocation5], 256
        $region141: #{tpu_custom_call.1} parent=132 // pred_fallthru
          _
        // Predicated region
        $region142: #{tpu_custom_call.1} parent=132 // pred_check
          %p855 = pneg %p161
        $region143: #{tpu_custom_call.1} parent=132 // pred_check_branch
          %857 = sbr.rel (%p855) target = $region145
        $region144: #{tpu_custom_call.1} parent=132 // pred_region
          %859 = dma.done [#allocation8], 16
        $region145: #{tpu_custom_call.1} parent=132 // pred_fallthru
          _
        // Predicated region
        $region146: #{tpu_custom_call.1} parent=132 // pred_check
          %p860 = pneg %p182
        $region147: #{tpu_custom_call.1} parent=132 // pred_check_branch
          %862 = sbr.rel (%p860) target = $region149
        $region148: #{tpu_custom_call.1} parent=132 // pred_region
          %864 = dma.done [#allocation8], 64
        $region149: #{tpu_custom_call.1} parent=132 // pred_fallthru
          _
        // Predicated region
        $region150: #{tpu_custom_call.1} parent=132 // pred_check
          %p865 = pneg %p224
        $region151: #{tpu_custom_call.1} parent=132 // pred_check_branch
          %867 = sbr.rel (%p865) target = $region153
        $region152: #{tpu_custom_call.1} parent=132 // pred_region
          %869 = dma.done [#allocation11], 16
        $region153: #{tpu_custom_call.1} parent=132 // pred_fallthru
          _
        // Predicated region
        $region154: #{tpu_custom_call.1} parent=132 // pred_check
          %p870 = pneg %p287
        $region155: #{tpu_custom_call.1} parent=132 // pred_check_branch
          %872 = sbr.rel (%p870) target = $region157
        $region156: #{tpu_custom_call.1} parent=132 // pred_region
          %874 = dma.done [#allocation11], 1024
        $region157: #{tpu_custom_call.1} parent=132 // pred_fallthru
          _
        // Predicated region
        $region158: #{tpu_custom_call.1} parent=132 // pred_check
          %p875 = pneg %p329
        $region159: #{tpu_custom_call.1} parent=132 // pred_check_branch
          %877 = sbr.rel (%p875) target = $region161
        $region160: #{tpu_custom_call.1} parent=132 // pred_region
          %879 = dma.done [#allocation14], 32
        $region161: #{tpu_custom_call.1} parent=132 // pred_fallthru
          _
        // Predicated region
        $region162: #{tpu_custom_call.1} parent=132 // pred_check
          %p880 = pneg %p350
        $region163: #{tpu_custom_call.1} parent=132 // pred_check_branch
          %882 = sbr.rel (%p880) target = $region165
        $region164: #{tpu_custom_call.1} parent=132 // pred_region
          %884 = dma.done [#allocation14], 2048
        $region165: #{tpu_custom_call.1} parent=132 // pred_fallthru
          _
        // Predicated region
        $region166: #{tpu_custom_call.1} parent=132 // pred_check
          %p885 = pneg %p371
        $region167: #{tpu_custom_call.1} parent=132 // pred_check_branch
          %887 = sbr.rel (%p885) target = $region169
        $region168: #{tpu_custom_call.1} parent=132 // pred_region
          %889 = dma.done [#allocation17], 16
        $region169: #{tpu_custom_call.1} parent=132 // pred_fallthru
          _
        // Predicated region
        $region170: #{tpu_custom_call.1} parent=132 // pred_check
          %p890 = pneg %p392
        $region171: #{tpu_custom_call.1} parent=132 // pred_check_branch
          %892 = sbr.rel (%p890) target = $region173
        $region172: #{tpu_custom_call.1} parent=132 // pred_region
          %894 = dma.done [#allocation17], 1024
        $region173: #{tpu_custom_call.1} parent=132 // pred_fallthru
          _
        // Predicated region
        $region174: #{tpu_custom_call.1} parent=132 // pred_check
          %p895 = pneg %p434
        $region175: #{tpu_custom_call.1} parent=132 // pred_check_branch
          %897 = sbr.rel (%p895) target = $region177
        $region176: #{tpu_custom_call.1} parent=132 // pred_region
          %899 = dma.done [#allocation20], 1024
        $region177: #{tpu_custom_call.1} parent=132 // pred_fallthru
          _
        %s900 = sand.u32 %s59, 1
        %s901 = sand.u32 %s59, 1
        %s902 = smul.addr %s901, 128
        %s903 = scalar_lea.vmem [#allocation3], %s902
        %p904 = pneg %p72
        %p905 = pneg %p69
        %p906 = scmp.lt.s32.totalorder %s41, 0
        %s907 = scalar_select %p906, %s41, 0
        %s908 = smul.addr %s907, 4
        %s909 = scalar_lea.vmem %s1, %s908
        %p910 = pneg %p98
        %p911 = pneg %p95
        %p912 = pneg %p119
        %p913 = pneg %p116
        %p914 = pneg %p140
        %p915 = pneg %p137
        %p916 = pneg %p161
        %p917 = pneg %p158
        %p918 = pneg %p182
        %p919 = pneg %p179
        %p920 = pneg %p203
        %p921 = pneg %p200
        %p922 = pneg %p224
        %p923 = pneg %p221
        %p924 = pneg %p245
        %p925 = pneg %p242
        %p926 = pneg %p266
        %p927 = pneg %p263
        %p928 = pneg %p287
        %p929 = pneg %p284
        %p930 = pneg %p308
        %p931 = pneg %p305
        %p932 = pneg %p329
        %p933 = pneg %p326
        %p934 = pneg %p350
        %p935 = pneg %p347
        %p936 = pneg %p371
        %p937 = pneg %p368
        %p938 = pneg %p392
        %p939 = pneg %p389
        %p940 = pneg %p413
        %p941 = pneg %p410
        %p942 = pneg %p434
        %p943 = pneg %p431
        %p944 = pneg %p455
        %p945 = pneg %p452
        %p946 = pneg %p481
        %p947 = pneg %p478
        %s948 = smul.u32 8, %s41
        %s949 = smul.u32 4, %s42
        %p950 = scmp.lt.s32.totalorder %s41, 0
        %s951 = scalar_select %p950, %s41, 0
        %s952 = smul.addr %s951, 4
        %s953 = scalar_lea.vmem %s1, %s952
        %v955 = vld [vmem:[%s846] sm:$0xf]
        %v956 = vld [vmem:[%s846 + $0x4] sm:$0xf]
        %v957 = vld [vmem:[%s846 + $0x8] sm:$0xf]
        %v958 = vld [vmem:[%s846 + $0xc] sm:$0xf]
        %v959 = vld [vmem:[%s846 + $0x10] sm:$0xf]
        %v960 = vld [vmem:[%s846 + $0x14] sm:$0xf]
        %v961 = vld [vmem:[%s846 + $0x18] sm:$0xf]
        %v962 = vld [vmem:[%s846 + $0x1c] sm:$0xf]
        %v963 = vld [vmem:[%s846 + $0x20] sm:$0xf]
        %v964 = vld [vmem:[%s846 + $0x24] sm:$0xf]
        %v965 = vld [vmem:[%s846 + $0x28] sm:$0xf]
        %v966 = vld [vmem:[%s846 + $0x2c] sm:$0xf]
        %v967 = vld [vmem:[%s846 + $0x30] sm:$0xf]
        %v968 = vld [vmem:[%s846 + $0x34] sm:$0xf]
        %v969 = vld [vmem:[%s846 + $0x38] sm:$0xf]
        %v970 = vld [vmem:[%s846 + $0x3c] sm:$0xf]
        %v971 = vld [vmem:[%s846 + $0x40] sm:$0xf]
        %v972 = vld [vmem:[%s846 + $0x44] sm:$0xf]
        %v973 = vld [vmem:[%s846 + $0x48] sm:$0xf]
        %v974 = vld [vmem:[%s846 + $0x4c] sm:$0xf]
        %v975 = vld [vmem:[%s846 + $0x50] sm:$0xf]
        %v976 = vld [vmem:[%s846 + $0x54] sm:$0xf]
        %v977 = vld [vmem:[%s846 + $0x58] sm:$0xf]
        %v978 = vld [vmem:[%s846 + $0x5c] sm:$0xf]
        %v979 = vld [vmem:[%s846 + $0x60] sm:$0xf]
        %v980 = vld [vmem:[%s846 + $0x64] sm:$0xf]
        %v981 = vld [vmem:[%s846 + $0x68] sm:$0xf]
        %v982 = vld [vmem:[%s846 + $0x6c] sm:$0xf]
        %v983 = vld [vmem:[%s846 + $0x70] sm:$0xf]
        %v984 = vld [vmem:[%s846 + $0x74] sm:$0xf]
        %v985 = vld [vmem:[%s846 + $0x78] sm:$0xf]
        %v986 = vld [vmem:[%s846 + $0x7c] sm:$0xf]
        %v987 = vld [vmem:[#allocation9] sm:$0xf]
        %v1020 = vunpack.c.l.b16 %v955
        %v1021 = vunpack.c.l.b16 %v956
        %v1022 = vunpack.c.l.b16 %v957
        %v1023 = vunpack.c.l.b16 %v958
        %v1024 = vunpack.c.l.b16 %v959
        %v1025 = vunpack.c.l.b16 %v960
        %v1026 = vunpack.c.l.b16 %v961
        %v1027 = vunpack.c.l.b16 %v962
        %v1028 = vunpack.c.l.b16 %v963
        %v1029 = vunpack.c.l.b16 %v964
        %v1030 = vunpack.c.l.b16 %v965
        %v1031 = vunpack.c.l.b16 %v966
        %v1032 = vunpack.c.l.b16 %v967
        %v1033 = vunpack.c.l.b16 %v968
        %v1034 = vunpack.c.l.b16 %v969
        %v1035 = vunpack.c.l.b16 %v970
        %v1036 = vunpack.c.l.b16 %v971
        %v1037 = vunpack.c.l.b16 %v972
        %v1038 = vunpack.c.l.b16 %v973
        %v1039 = vunpack.c.l.b16 %v974
        %v1040 = vunpack.c.l.b16 %v975
        %v1041 = vunpack.c.l.b16 %v976
        %v1042 = vunpack.c.l.b16 %v977
        %v1043 = vunpack.c.l.b16 %v978
        %v1044 = vunpack.c.l.b16 %v979
        %v1045 = vunpack.c.l.b16 %v980
        %v1046 = vunpack.c.l.b16 %v981
        %v1047 = vunpack.c.l.b16 %v982
        %v1048 = vunpack.c.l.b16 %v983
        %v1049 = vunpack.c.l.b16 %v984
        %v1050 = vunpack.c.l.b16 %v985
        %v1051 = vunpack.c.l.b16 %v986
        %v1052 = vpack.c.b16 %v1021, %v1020
        %v1053 = vpack.c.b16 %v1023, %v1022
        %v1054 = vpack.c.b16 %v1025, %v1024
        %v1055 = vpack.c.b16 %v1027, %v1026
        %v1056 = vpack.c.b16 %v1029, %v1028
        %v1057 = vpack.c.b16 %v1031, %v1030
        %v1058 = vpack.c.b16 %v1033, %v1032
        %v1059 = vpack.c.b16 %v1035, %v1034
        %v1060 = vpack.c.b16 %v1037, %v1036
        %v1061 = vpack.c.b16 %v1039, %v1038
        %v1062 = vpack.c.b16 %v1041, %v1040
        %v1063 = vpack.c.b16 %v1043, %v1042
        %v1064 = vpack.c.b16 %v1045, %v1044
        %v1065 = vpack.c.b16 %v1047, %v1046
        %v1066 = vpack.c.b16 %v1049, %v1048
        %v1067 = vpack.c.b16 %v1051, %v1050
        %vm1068 = vcmask 64512
        %v1070 = vsel %vm1068, %v1052, 0
        %v1073 = vsel %vm1068, %v1053, 0
        %v1076 = vsel %vm1068, %v1054, 0
        %v1079 = vsel %vm1068, %v1055, 0
        %v1082 = vsel %vm1068, %v1056, 0
        %v1085 = vsel %vm1068, %v1057, 0
        %v1088 = vsel %vm1068, %v1058, 0
        %v1091 = vsel %vm1068, %v1059, 0
        %v1094 = vsel %vm1068, %v1060, 0
        %v1097 = vsel %vm1068, %v1061, 0
        %v1100 = vsel %vm1068, %v1062, 0
        %v1103 = vsel %vm1068, %v1063, 0
        %v1106 = vsel %vm1068, %v1064, 0
        %v1109 = vsel %vm1068, %v1065, 0
        %v1112 = vsel %vm1068, %v1066, 0
        %v1115 = vsel %vm1068, %v1067, 0
        %vm1117 = vcmask 1043456
        %v1119 = vsel %vm1117, %v987, 0
        %1121 = vmatpush.bf16.msra.mxu0 0
        %1122 = vmatpush.bf16.msra.mxu0 0
        %1123 = vmatpush.bf16.msra.mxu0 0
        %1124 = vmatpush.bf16.msra.mxu0 0
        %1125 = vmatpush.bf16.msra.mxu0 0
        %1126 = vmatpush.bf16.msra.mxu0 0
        %1127 = vmatpush.bf16.msra.mxu0 0
        %1128 = vmatpush.bf16.msra.mxu0 %v1119
        %1129 = vmatmul.bf16.gmra.mxu0 %v1070
        %v1130 = vpop.f32.mrf.mxu0
        %v1131 = vadd.f32 0.0, %v1130
        %v1132 = vpop.f32.mrf.mxu0
        %v1133 = vadd.f32 0.0, %v1132
        %1134 = vmatmul.bf16.gmra.mxu0 %v1073
        %v1135 = vpop.f32.mrf.mxu0
        %v1136 = vadd.f32 0.0, %v1135
        %v1137 = vpop.f32.mrf.mxu0
        %v1138 = vadd.f32 0.0, %v1137
        %1139 = vmatmul.bf16.gmra.mxu0 %v1076
        %v1140 = vpop.f32.mrf.mxu0
        %v1141 = vadd.f32 0.0, %v1140
        %v1142 = vpop.f32.mrf.mxu0
        %v1143 = vadd.f32 0.0, %v1142
        %1144 = vmatmul.bf16.gmra.mxu0 %v1079
        %v1145 = vpop.f32.mrf.mxu0
        %v1146 = vadd.f32 0.0, %v1145
        %v1147 = vpop.f32.mrf.mxu0
        %v1148 = vadd.f32 0.0, %v1147
        %1149 = vmatmul.bf16.gmra.mxu0 %v1082
        %v1150 = vpop.f32.mrf.mxu0
        %v1151 = vadd.f32 0.0, %v1150
        %v1152 = vpop.f32.mrf.mxu0
        %v1153 = vadd.f32 0.0, %v1152
        %1154 = vmatmul.bf16.gmra.mxu0 %v1085
        %v1155 = vpop.f32.mrf.mxu0
        %v1156 = vadd.f32 0.0, %v1155
        %v1157 = vpop.f32.mrf.mxu0
        %v1158 = vadd.f32 0.0, %v1157
        %1159 = vmatmul.bf16.gmra.mxu0 %v1088
        %v1160 = vpop.f32.mrf.mxu0
        %v1161 = vadd.f32 0.0, %v1160
        %v1162 = vpop.f32.mrf.mxu0
        %v1163 = vadd.f32 0.0, %v1162
        %1164 = vmatmul.bf16.gmra.mxu0 %v1091
        %v1165 = vpop.f32.mrf.mxu0
        %v1166 = vadd.f32 0.0, %v1165
        %v1167 = vpop.f32.mrf.mxu0
        %v1168 = vadd.f32 0.0, %v1167
        %1169 = vmatmul.bf16.gmra.mxu0 %v1094
        %v1170 = vpop.f32.mrf.mxu0
        %v1171 = vadd.f32 0.0, %v1170
        %v1172 = vpop.f32.mrf.mxu0
        %v1173 = vadd.f32 0.0, %v1172
        %1174 = vmatmul.bf16.gmra.mxu0 %v1097
        %v1175 = vpop.f32.mrf.mxu0
        %v1176 = vadd.f32 0.0, %v1175
        %v1177 = vpop.f32.mrf.mxu0
        %v1178 = vadd.f32 0.0, %v1177
        %1179 = vmatmul.bf16.gmra.mxu0 %v1100
        %v1180 = vpop.f32.mrf.mxu0
        %v1181 = vadd.f32 0.0, %v1180
        %v1182 = vpop.f32.mrf.mxu0
        %v1183 = vadd.f32 0.0, %v1182
        %1184 = vmatmul.bf16.gmra.mxu0 %v1103
        %v1185 = vpop.f32.mrf.mxu0
        %v1186 = vadd.f32 0.0, %v1185
        %v1187 = vpop.f32.mrf.mxu0
        %v1188 = vadd.f32 0.0, %v1187
        %1189 = vmatmul.bf16.gmra.mxu0 %v1106
        %v1190 = vpop.f32.mrf.mxu0
        %v1191 = vadd.f32 0.0, %v1190
        %v1192 = vpop.f32.mrf.mxu0
        %v1193 = vadd.f32 0.0, %v1192
        %1194 = vmatmul.bf16.gmra.mxu0 %v1109
        %v1195 = vpop.f32.mrf.mxu0
        %v1196 = vadd.f32 0.0, %v1195
        %v1197 = vpop.f32.mrf.mxu0
        %v1198 = vadd.f32 0.0, %v1197
        %1199 = vmatmul.bf16.gmra.mxu0 %v1112
        %v1200 = vpop.f32.mrf.mxu0
        %v1201 = vadd.f32 0.0, %v1200
        %v1202 = vpop.f32.mrf.mxu0
        %v1203 = vadd.f32 0.0, %v1202
        %1204 = vmatmul.bf16.gmra.mxu0 %v1115
        %v1205 = vpop.f32.mrf.mxu0
        %v1206 = vadd.f32 0.0, %v1205
        %v1207 = vpop.f32.mrf.mxu0
        %v1208 = vadd.f32 0.0, %v1207
        %1209 = vdwg.mxu0
        %v1210 = vmax.f32 %v1131, 0.0
        %v1211 = vmax.f32 %v1133, 0.0
        %v1212 = vmax.f32 %v1136, 0.0
        %v1213 = vmax.f32 %v1138, 0.0
        %v1214 = vmax.f32 %v1141, 0.0
        %v1215 = vmax.f32 %v1143, 0.0
        %v1216 = vmax.f32 %v1146, 0.0
        %v1217 = vmax.f32 %v1148, 0.0
        %v1218 = vmax.f32 %v1151, 0.0
        %v1219 = vmax.f32 %v1153, 0.0
        %v1220 = vmax.f32 %v1156, 0.0
        %v1221 = vmax.f32 %v1158, 0.0
        %v1222 = vmax.f32 %v1161, 0.0
        %v1223 = vmax.f32 %v1163, 0.0
        %v1224 = vmax.f32 %v1166, 0.0
        %v1225 = vmax.f32 %v1168, 0.0
        %v1226 = vmax.f32 %v1171, 0.0
        %v1227 = vmax.f32 %v1173, 0.0
        %v1228 = vmax.f32 %v1176, 0.0
        %v1229 = vmax.f32 %v1178, 0.0
        %v1230 = vmax.f32 %v1181, 0.0
        %v1231 = vmax.f32 %v1183, 0.0
        %v1232 = vmax.f32 %v1186, 0.0
        %v1233 = vmax.f32 %v1188, 0.0
        %v1234 = vmax.f32 %v1191, 0.0
        %v1235 = vmax.f32 %v1193, 0.0
        %v1236 = vmax.f32 %v1196, 0.0
        %v1237 = vmax.f32 %v1198, 0.0
        %v1238 = vmax.f32 %v1201, 0.0
        %v1239 = vmax.f32 %v1203, 0.0
        %v1240 = vmax.f32 %v1206, 0.0
        %v1241 = vmax.f32 %v1208, 0.0
        %v1242 = vpack.c.bf16 %v1211, %v1210
        %v1243 = vpack.c.bf16 %v1213, %v1212
        %v1244 = vpack.c.bf16 %v1215, %v1214
        %v1245 = vpack.c.bf16 %v1217, %v1216
        %v1246 = vpack.c.bf16 %v1219, %v1218
        %v1247 = vpack.c.bf16 %v1221, %v1220
        %v1248 = vpack.c.bf16 %v1223, %v1222
        %v1249 = vpack.c.bf16 %v1225, %v1224
        %v1250 = vpack.c.bf16 %v1227, %v1226
        %v1251 = vpack.c.bf16 %v1229, %v1228
        %v1252 = vpack.c.bf16 %v1231, %v1230
        %v1253 = vpack.c.bf16 %v1233, %v1232
        %v1254 = vpack.c.bf16 %v1235, %v1234
        %v1255 = vpack.c.bf16 %v1237, %v1236
        %v1256 = vpack.c.bf16 %v1239, %v1238
        %v1257 = vpack.c.bf16 %v1241, %v1240
        %v1258 = vld [vmem:[%s6] sm:$0xf]
        %v1259 = vld [vmem:[%s6 + $0x4] sm:$0xf]
        %v1260 = vld [vmem:[%s6 + $0x8] sm:$0xf]
        %v1261 = vld [vmem:[%s6 + $0xc] sm:$0xf]
        %v1262 = vld [vmem:[%s6 + $0x10] sm:$0xf]
        %v1263 = vld [vmem:[%s6 + $0x14] sm:$0xf]
        %v1264 = vld [vmem:[%s6 + $0x18] sm:$0xf]
        %v1265 = vld [vmem:[%s6 + $0x1c] sm:$0xf]
        %v1266 = vld [vmem:[#allocation10] sm:$0x1]
        %v1268 = vperm.slane %v1266, 0
        %v1278 = vunpack.c.l.b16 %v1258
        %v1279 = vunpack.c.l.b16 %v1259
        %v1280 = vunpack.c.l.b16 %v1260
        %v1281 = vunpack.c.l.b16 %v1261
        %v1282 = vunpack.c.l.b16 %v1262
        %v1283 = vunpack.c.l.b16 %v1263
        %v1284 = vunpack.c.l.b16 %v1264
        %v1285 = vunpack.c.l.b16 %v1265
        %v1286 = vpack.c.b16 %v1279, %v1278
        %v1287 = vpack.c.b16 %v1281, %v1280
        %v1288 = vpack.c.b16 %v1283, %v1282
        %v1289 = vpack.c.b16 %v1285, %v1284
        %vm1294 = vcmask 523264
        %v1296 = vsel %vm1294, %v1242, 0
        %v1299 = vsel %vm1294, %v1243, 0
        %v1302 = vsel %vm1294, %v1244, 0
        %v1305 = vsel %vm1294, %v1245, 0
        %v1308 = vsel %vm1294, %v1246, 0
        %v1311 = vsel %vm1294, %v1247, 0
        %v1314 = vsel %vm1294, %v1248, 0
        %v1317 = vsel %vm1294, %v1249, 0
        %v1320 = vsel %vm1294, %v1250, 0
        %v1323 = vsel %vm1294, %v1251, 0
        %v1326 = vsel %vm1294, %v1252, 0
        %v1329 = vsel %vm1294, %v1253, 0
        %v1332 = vsel %vm1294, %v1254, 0
        %v1335 = vsel %vm1294, %v1255, 0
        %v1338 = vsel %vm1294, %v1256, 0
        %v1341 = vsel %vm1294, %v1257, 0
        %1343 = vmatpush.bf16.msra.mxu0 0
        %1344 = vmatpush.bf16.msra.mxu0 0
        %1345 = vmatpush.bf16.msra.mxu0 0
        %1346 = vmatpush.bf16.msra.mxu0 0
        %1347 = vmatpush.bf16.msra.mxu0 %v1289
        %1348 = vmatpush.bf16.msra.mxu0 %v1288
        %1349 = vmatpush.bf16.msra.mxu0 %v1287
        %1350 = vmatpush.bf16.msra.mxu0 %v1286
        %1351 = vmatmul.bf16.gmra.mxu0 %v1296
        %v1352 = vpop.f32.mrf.mxu0
        %v1353 = vadd.f32 %v1268, %v1352
        %v1354 = vpop.f32.mrf.mxu0
        %v1355 = vadd.f32 %v1268, %v1354
        %1356 = vmatmul.bf16.gmra.mxu0 %v1299
        %v1357 = vpop.f32.mrf.mxu0
        %v1358 = vadd.f32 %v1268, %v1357
        %v1359 = vpop.f32.mrf.mxu0
        %v1360 = vadd.f32 %v1268, %v1359
        %1361 = vmatmul.bf16.gmra.mxu0 %v1302
        %v1362 = vpop.f32.mrf.mxu0
        %v1363 = vadd.f32 %v1268, %v1362
        %v1364 = vpop.f32.mrf.mxu0
        %v1365 = vadd.f32 %v1268, %v1364
        %1366 = vmatmul.bf16.gmra.mxu0 %v1305
        %v1367 = vpop.f32.mrf.mxu0
        %v1368 = vadd.f32 %v1268, %v1367
        %v1369 = vpop.f32.mrf.mxu0
        %v1370 = vadd.f32 %v1268, %v1369
        %1371 = vmatmul.bf16.gmra.mxu0 %v1308
        %v1372 = vpop.f32.mrf.mxu0
        %v1373 = vadd.f32 %v1268, %v1372
        %v1374 = vpop.f32.mrf.mxu0
        %v1375 = vadd.f32 %v1268, %v1374
        %1376 = vmatmul.bf16.gmra.mxu0 %v1311
        %v1377 = vpop.f32.mrf.mxu0
        %v1378 = vadd.f32 %v1268, %v1377
        %v1379 = vpop.f32.mrf.mxu0
        %v1380 = vadd.f32 %v1268, %v1379
        %1381 = vmatmul.bf16.gmra.mxu0 %v1314
        %v1382 = vpop.f32.mrf.mxu0
        %v1383 = vadd.f32 %v1268, %v1382
        %v1384 = vpop.f32.mrf.mxu0
        %v1385 = vadd.f32 %v1268, %v1384
        %1386 = vmatmul.bf16.gmra.mxu0 %v1317
        %v1387 = vpop.f32.mrf.mxu0
        %v1388 = vadd.f32 %v1268, %v1387
        %v1389 = vpop.f32.mrf.mxu0
        %v1390 = vadd.f32 %v1268, %v1389
        %1391 = vmatmul.bf16.gmra.mxu0 %v1320
        %v1392 = vpop.f32.mrf.mxu0
        %v1393 = vadd.f32 %v1268, %v1392
        %v1394 = vpop.f32.mrf.mxu0
        %v1395 = vadd.f32 %v1268, %v1394
        %1396 = vmatmul.bf16.gmra.mxu0 %v1323
        %v1397 = vpop.f32.mrf.mxu0
        %v1398 = vadd.f32 %v1268, %v1397
        %v1399 = vpop.f32.mrf.mxu0
        %v1400 = vadd.f32 %v1268, %v1399
        %1401 = vmatmul.bf16.gmra.mxu0 %v1326
        %v1402 = vpop.f32.mrf.mxu0
        %v1403 = vadd.f32 %v1268, %v1402
        %v1404 = vpop.f32.mrf.mxu0
        %v1405 = vadd.f32 %v1268, %v1404
        %1406 = vmatmul.bf16.gmra.mxu0 %v1329
        %v1407 = vpop.f32.mrf.mxu0
        %v1408 = vadd.f32 %v1268, %v1407
        %v1409 = vpop.f32.mrf.mxu0
        %v1410 = vadd.f32 %v1268, %v1409
        %1411 = vmatmul.bf16.gmra.mxu0 %v1332
        %v1412 = vpop.f32.mrf.mxu0
        %v1413 = vadd.f32 %v1268, %v1412
        %v1414 = vpop.f32.mrf.mxu0
        %v1415 = vadd.f32 %v1268, %v1414
        %1416 = vmatmul.bf16.gmra.mxu0 %v1335
        %v1417 = vpop.f32.mrf.mxu0
        %v1418 = vadd.f32 %v1268, %v1417
        %v1419 = vpop.f32.mrf.mxu0
        %v1420 = vadd.f32 %v1268, %v1419
        %1421 = vmatmul.bf16.gmra.mxu0 %v1338
        %v1422 = vpop.f32.mrf.mxu0
        %v1423 = vadd.f32 %v1268, %v1422
        %v1424 = vpop.f32.mrf.mxu0
        %v1425 = vadd.f32 %v1268, %v1424
        %1426 = vmatmul.bf16.gmra.mxu0 %v1341
        %v1427 = vpop.f32.mrf.mxu0
        %v1428 = vadd.f32 %v1268, %v1427
        %v1429 = vpop.f32.mrf.mxu0
        %v1430 = vadd.f32 %v1268, %v1429
        %1431 = vdwg.mxu0
        %v1432 = vmax.f32 %v1353, 0.0
        %v1433 = vmax.f32 %v1355, 0.0
        %v1434 = vmax.f32 %v1358, 0.0
        %v1435 = vmax.f32 %v1360, 0.0
        %v1436 = vmax.f32 %v1363, 0.0
        %v1437 = vmax.f32 %v1365, 0.0
        %v1438 = vmax.f32 %v1368, 0.0
        %v1439 = vmax.f32 %v1370, 0.0
        %v1440 = vmax.f32 %v1373, 0.0
        %v1441 = vmax.f32 %v1375, 0.0
        %v1442 = vmax.f32 %v1378, 0.0
        %v1443 = vmax.f32 %v1380, 0.0
        %v1444 = vmax.f32 %v1383, 0.0
        %v1445 = vmax.f32 %v1385, 0.0
        %v1446 = vmax.f32 %v1388, 0.0
        %v1447 = vmax.f32 %v1390, 0.0
        %v1448 = vmax.f32 %v1393, 0.0
        %v1449 = vmax.f32 %v1395, 0.0
        %v1450 = vmax.f32 %v1398, 0.0
        %v1451 = vmax.f32 %v1400, 0.0
        %v1452 = vmax.f32 %v1403, 0.0
        %v1453 = vmax.f32 %v1405, 0.0
        %v1454 = vmax.f32 %v1408, 0.0
        %v1455 = vmax.f32 %v1410, 0.0
        %v1456 = vmax.f32 %v1413, 0.0
        %v1457 = vmax.f32 %v1415, 0.0
        %v1458 = vmax.f32 %v1418, 0.0
        %v1459 = vmax.f32 %v1420, 0.0
        %v1460 = vmax.f32 %v1423, 0.0
        %v1461 = vmax.f32 %v1425, 0.0
        %v1462 = vmax.f32 %v1428, 0.0
        %v1463 = vmax.f32 %v1430, 0.0
        %v1464 = vpack.c.bf16 %v1433, %v1432
        %v1465 = vpack.c.bf16 %v1435, %v1434
        %v1466 = vpack.c.bf16 %v1437, %v1436
        %v1467 = vpack.c.bf16 %v1439, %v1438
        %v1468 = vpack.c.bf16 %v1441, %v1440
        %v1469 = vpack.c.bf16 %v1443, %v1442
        %v1470 = vpack.c.bf16 %v1445, %v1444
        %v1471 = vpack.c.bf16 %v1447, %v1446
        %v1472 = vpack.c.bf16 %v1449, %v1448
        %v1473 = vpack.c.bf16 %v1451, %v1450
        %v1474 = vpack.c.bf16 %v1453, %v1452
        %v1475 = vpack.c.bf16 %v1455, %v1454
        %v1476 = vpack.c.bf16 %v1457, %v1456
        %v1477 = vpack.c.bf16 %v1459, %v1458
        %v1478 = vpack.c.bf16 %v1461, %v1460
        %v1479 = vpack.c.bf16 %v1463, %v1462
        %v1480 = vld [vmem:[%s8] sm:$0xff]
        %v1481 = vld [vmem:[%s8 + $0x8] sm:$0xff]
        %v1482 = vld [vmem:[%s8 + $0x10] sm:$0xff]
        %v1483 = vld [vmem:[%s8 + $0x18] sm:$0xff]
        %v1484 = vld [vmem:[%s8 + $0x20] sm:$0xff]
        %v1485 = vld [vmem:[%s8 + $0x28] sm:$0xff]
        %v1486 = vld [vmem:[%s8 + $0x30] sm:$0xff]
        %v1487 = vld [vmem:[%s8 + $0x38] sm:$0xff]
        %v1488 = vld [vmem:[%s8 + $0x40] sm:$0xff]
        %v1489 = vld [vmem:[%s8 + $0x48] sm:$0xff]
        %v1490 = vld [vmem:[%s8 + $0x50] sm:$0xff]
        %v1491 = vld [vmem:[%s8 + $0x58] sm:$0xff]
        %v1492 = vld [vmem:[%s8 + $0x60] sm:$0xff]
        %v1493 = vld [vmem:[%s8 + $0x68] sm:$0xff]
        %v1494 = vld [vmem:[%s8 + $0x70] sm:$0xff]
        %v1495 = vld [vmem:[%s8 + $0x78] sm:$0xff]
        %v1496 = vld [vmem:[%s9] sm:$0x3]
        %v1498 = vperm.slane %v1496, 0
        %v1499 = vperm.slane %v1496, 1
        %v1518 = vunpack.c.l.b16 %v1480
        %v1519 = vunpack.c.h.b16 %v1480
        %v1520 = vunpack.c.l.b16 %v1481
        %v1521 = vunpack.c.h.b16 %v1481
        %v1522 = vunpack.c.l.b16 %v1482
        %v1523 = vunpack.c.h.b16 %v1482
        %v1524 = vunpack.c.l.b16 %v1483
        %v1525 = vunpack.c.h.b16 %v1483
        %v1526 = vunpack.c.l.b16 %v1484
        %v1527 = vunpack.c.h.b16 %v1484
        %v1528 = vunpack.c.l.b16 %v1485
        %v1529 = vunpack.c.h.b16 %v1485
        %v1530 = vunpack.c.l.b16 %v1486
        %v1531 = vunpack.c.h.b16 %v1486
        %v1532 = vunpack.c.l.b16 %v1487
        %v1533 = vunpack.c.h.b16 %v1487
        %v1534 = vunpack.c.l.b16 %v1488
        %v1535 = vunpack.c.h.b16 %v1488
        %v1536 = vunpack.c.l.b16 %v1489
        %v1537 = vunpack.c.h.b16 %v1489
        %v1538 = vunpack.c.l.b16 %v1490
        %v1539 = vunpack.c.h.b16 %v1490
        %v1540 = vunpack.c.l.b16 %v1491
        %v1541 = vunpack.c.h.b16 %v1491
        %v1542 = vunpack.c.l.b16 %v1492
        %v1543 = vunpack.c.h.b16 %v1492
        %v1544 = vunpack.c.l.b16 %v1493
        %v1545 = vunpack.c.h.b16 %v1493
        %v1546 = vunpack.c.l.b16 %v1494
        %v1547 = vunpack.c.h.b16 %v1494
        %v1548 = vunpack.c.l.b16 %v1495
        %v1549 = vunpack.c.h.b16 %v1495
        %v1550 = vpack.c.b16 %v1520, %v1518
        %v1551 = vpack.c.b16 %v1521, %v1519
        %v1552 = vpack.c.b16 %v1524, %v1522
        %v1553 = vpack.c.b16 %v1525, %v1523
        %v1554 = vpack.c.b16 %v1528, %v1526
        %v1555 = vpack.c.b16 %v1529, %v1527
        %v1556 = vpack.c.b16 %v1532, %v1530
        %v1557 = vpack.c.b16 %v1533, %v1531
        %v1558 = vpack.c.b16 %v1536, %v1534
        %v1559 = vpack.c.b16 %v1537, %v1535
        %v1560 = vpack.c.b16 %v1540, %v1538
        %v1561 = vpack.c.b16 %v1541, %v1539
        %v1562 = vpack.c.b16 %v1544, %v1542
        %v1563 = vpack.c.b16 %v1545, %v1543
        %v1564 = vpack.c.b16 %v1548, %v1546
        %v1565 = vpack.c.b16 %v1549, %v1547
        %1582 = vmatpush.bf16.msra.mxu0 %v1564
        %1583 = vmatpush.bf16.msra.mxu0 %v1562
        %1584 = vmatpush.bf16.msra.mxu0 %v1560
        %1585 = vmatpush.bf16.msra.mxu0 %v1558
        %1586 = vmatpush.bf16.msra.mxu0 %v1556
        %1587 = vmatpush.bf16.msra.mxu0 %v1554
        %1588 = vmatpush.bf16.msra.mxu0 %v1552
        %1589 = vmatpush.bf16.msra.mxu0 %v1550
        %1590 = vmatmul.bf16.gmra.mxu0 %v1464
        %v1591 = vpop.f32.mrf.mxu0
        %v1592 = vadd.f32 %v1498, %v1591
        %v1593 = vpop.f32.mrf.mxu0
        %v1594 = vadd.f32 %v1498, %v1593
        %1595 = vmatmul.bf16.gmra.mxu0 %v1465
        %v1596 = vpop.f32.mrf.mxu0
        %v1597 = vadd.f32 %v1498, %v1596
        %v1598 = vpop.f32.mrf.mxu0
        %v1599 = vadd.f32 %v1498, %v1598
        %1600 = vmatmul.bf16.gmra.mxu0 %v1466
        %v1601 = vpop.f32.mrf.mxu0
        %v1602 = vadd.f32 %v1498, %v1601
        %v1603 = vpop.f32.mrf.mxu0
        %v1604 = vadd.f32 %v1498, %v1603
        %1605 = vmatmul.bf16.gmra.mxu0 %v1467
        %v1606 = vpop.f32.mrf.mxu0
        %v1607 = vadd.f32 %v1498, %v1606
        %v1608 = vpop.f32.mrf.mxu0
        %v1609 = vadd.f32 %v1498, %v1608
        %1610 = vmatmul.bf16.gmra.mxu0 %v1468
        %v1611 = vpop.f32.mrf.mxu0
        %v1612 = vadd.f32 %v1498, %v1611
        %v1613 = vpop.f32.mrf.mxu0
        %v1614 = vadd.f32 %v1498, %v1613
        %1615 = vmatmul.bf16.gmra.mxu0 %v1469
        %v1616 = vpop.f32.mrf.mxu0
        %v1617 = vadd.f32 %v1498, %v1616
        %v1618 = vpop.f32.mrf.mxu0
        %v1619 = vadd.f32 %v1498, %v1618
        %1620 = vmatmul.bf16.gmra.mxu0 %v1470
        %v1621 = vpop.f32.mrf.mxu0
        %v1622 = vadd.f32 %v1498, %v1621
        %v1623 = vpop.f32.mrf.mxu0
        %v1624 = vadd.f32 %v1498, %v1623
        %1625 = vmatmul.bf16.gmra.mxu0 %v1471
        %v1626 = vpop.f32.mrf.mxu0
        %v1627 = vadd.f32 %v1498, %v1626
        %v1628 = vpop.f32.mrf.mxu0
        %v1629 = vadd.f32 %v1498, %v1628
        %1630 = vmatmul.bf16.gmra.mxu0 %v1472
        %v1631 = vpop.f32.mrf.mxu0
        %v1632 = vadd.f32 %v1498, %v1631
        %v1633 = vpop.f32.mrf.mxu0
        %v1634 = vadd.f32 %v1498, %v1633
        %1635 = vmatmul.bf16.gmra.mxu0 %v1473
        %v1636 = vpop.f32.mrf.mxu0
        %v1637 = vadd.f32 %v1498, %v1636
        %v1638 = vpop.f32.mrf.mxu0
        %v1639 = vadd.f32 %v1498, %v1638
        %1640 = vmatmul.bf16.gmra.mxu0 %v1474
        %v1641 = vpop.f32.mrf.mxu0
        %v1642 = vadd.f32 %v1498, %v1641
        %v1643 = vpop.f32.mrf.mxu0
        %v1644 = vadd.f32 %v1498, %v1643
        %1645 = vmatmul.bf16.gmra.mxu0 %v1475
        %v1646 = vpop.f32.mrf.mxu0
        %v1647 = vadd.f32 %v1498, %v1646
        %v1648 = vpop.f32.mrf.mxu0
        %v1649 = vadd.f32 %v1498, %v1648
        %1650 = vmatmul.bf16.gmra.mxu0 %v1476
        %v1651 = vpop.f32.mrf.mxu0
        %v1652 = vadd.f32 %v1498, %v1651
        %v1653 = vpop.f32.mrf.mxu0
        %v1654 = vadd.f32 %v1498, %v1653
        %1655 = vmatmul.bf16.gmra.mxu0 %v1477
        %v1656 = vpop.f32.mrf.mxu0
        %v1657 = vadd.f32 %v1498, %v1656
        %v1658 = vpop.f32.mrf.mxu0
        %v1659 = vadd.f32 %v1498, %v1658
        %1660 = vmatmul.bf16.gmra.mxu0 %v1478
        %v1661 = vpop.f32.mrf.mxu0
        %v1662 = vadd.f32 %v1498, %v1661
        %v1663 = vpop.f32.mrf.mxu0
        %v1664 = vadd.f32 %v1498, %v1663
        %1665 = vmatmul.bf16.gmra.mxu0 %v1479
        %v1666 = vpop.f32.mrf.mxu0
        %v1667 = vadd.f32 %v1498, %v1666
        %v1668 = vpop.f32.mrf.mxu0
        %v1669 = vadd.f32 %v1498, %v1668
        %1670 = vdwg.mxu0
        %1671 = vmatpush.bf16.msra.mxu0 %v1565
        %1672 = vmatpush.bf16.msra.mxu0 %v1563
        %1673 = vmatpush.bf16.msra.mxu0 %v1561
        %1674 = vmatpush.bf16.msra.mxu0 %v1559
        %1675 = vmatpush.bf16.msra.mxu0 %v1557
        %1676 = vmatpush.bf16.msra.mxu0 %v1555
        %1677 = vmatpush.bf16.msra.mxu0 %v1553
        %1678 = vmatpush.bf16.msra.mxu0 %v1551
        %1679 = vmatmul.bf16.gmra.mxu0 %v1464
        %v1680 = vpop.f32.mrf.mxu0
        %v1681 = vadd.f32 %v1499, %v1680
        %v1682 = vpop.f32.mrf.mxu0
        %v1683 = vadd.f32 %v1499, %v1682
        %1684 = vmatmul.bf16.gmra.mxu0 %v1465
        %v1685 = vpop.f32.mrf.mxu0
        %v1686 = vadd.f32 %v1499, %v1685
        %v1687 = vpop.f32.mrf.mxu0
        %v1688 = vadd.f32 %v1499, %v1687
        %1689 = vmatmul.bf16.gmra.mxu0 %v1466
        %v1690 = vpop.f32.mrf.mxu0
        %v1691 = vadd.f32 %v1499, %v1690
        %v1692 = vpop.f32.mrf.mxu0
        %v1693 = vadd.f32 %v1499, %v1692
        %1694 = vmatmul.bf16.gmra.mxu0 %v1467
        %v1695 = vpop.f32.mrf.mxu0
        %v1696 = vadd.f32 %v1499, %v1695
        %v1697 = vpop.f32.mrf.mxu0
        %v1698 = vadd.f32 %v1499, %v1697
        %1699 = vmatmul.bf16.gmra.mxu0 %v1468
        %v1700 = vpop.f32.mrf.mxu0
        %v1701 = vadd.f32 %v1499, %v1700
        %v1702 = vpop.f32.mrf.mxu0
        %v1703 = vadd.f32 %v1499, %v1702
        %1704 = vmatmul.bf16.gmra.mxu0 %v1469
        %v1705 = vpop.f32.mrf.mxu0
        %v1706 = vadd.f32 %v1499, %v1705
        %v1707 = vpop.f32.mrf.mxu0
        %v1708 = vadd.f32 %v1499, %v1707
        %1709 = vmatmul.bf16.gmra.mxu0 %v1470
        %v1710 = vpop.f32.mrf.mxu0
        %v1711 = vadd.f32 %v1499, %v1710
        %v1712 = vpop.f32.mrf.mxu0
        %v1713 = vadd.f32 %v1499, %v1712
        %1714 = vmatmul.bf16.gmra.mxu0 %v1471
        %v1715 = vpop.f32.mrf.mxu0
        %v1716 = vadd.f32 %v1499, %v1715
        %v1717 = vpop.f32.mrf.mxu0
        %v1718 = vadd.f32 %v1499, %v1717
        %1719 = vmatmul.bf16.gmra.mxu0 %v1472
        %v1720 = vpop.f32.mrf.mxu0
        %v1721 = vadd.f32 %v1499, %v1720
        %v1722 = vpop.f32.mrf.mxu0
        %v1723 = vadd.f32 %v1499, %v1722
        %1724 = vmatmul.bf16.gmra.mxu0 %v1473
        %v1725 = vpop.f32.mrf.mxu0
        %v1726 = vadd.f32 %v1499, %v1725
        %v1727 = vpop.f32.mrf.mxu0
        %v1728 = vadd.f32 %v1499, %v1727
        %1729 = vmatmul.bf16.gmra.mxu0 %v1474
        %v1730 = vpop.f32.mrf.mxu0
        %v1731 = vadd.f32 %v1499, %v1730
        %v1732 = vpop.f32.mrf.mxu0
        %v1733 = vadd.f32 %v1499, %v1732
        %1734 = vmatmul.bf16.gmra.mxu0 %v1475
        %v1735 = vpop.f32.mrf.mxu0
        %v1736 = vadd.f32 %v1499, %v1735
        %v1737 = vpop.f32.mrf.mxu0
        %v1738 = vadd.f32 %v1499, %v1737
        %1739 = vmatmul.bf16.gmra.mxu0 %v1476
        %v1740 = vpop.f32.mrf.mxu0
        %v1741 = vadd.f32 %v1499, %v1740
        %v1742 = vpop.f32.mrf.mxu0
        %v1743 = vadd.f32 %v1499, %v1742
        %1744 = vmatmul.bf16.gmra.mxu0 %v1477
        %v1745 = vpop.f32.mrf.mxu0
        %v1746 = vadd.f32 %v1499, %v1745
        %v1747 = vpop.f32.mrf.mxu0
        %v1748 = vadd.f32 %v1499, %v1747
        %1749 = vmatmul.bf16.gmra.mxu0 %v1478
        %v1750 = vpop.f32.mrf.mxu0
        %v1751 = vadd.f32 %v1499, %v1750
        %v1752 = vpop.f32.mrf.mxu0
        %v1753 = vadd.f32 %v1499, %v1752
        %1754 = vmatmul.bf16.gmra.mxu0 %v1479
        %v1755 = vpop.f32.mrf.mxu0
        %v1756 = vadd.f32 %v1499, %v1755
        %v1757 = vpop.f32.mrf.mxu0
        %v1758 = vadd.f32 %v1499, %v1757
        %1759 = vdwg.mxu0
        %v1760 = vmax.f32 %v1592, 0.0
        %v1761 = vmax.f32 %v1681, 0.0
        %v1762 = vmax.f32 %v1594, 0.0
        %v1763 = vmax.f32 %v1683, 0.0
        %v1764 = vmax.f32 %v1597, 0.0
        %v1765 = vmax.f32 %v1686, 0.0
        %v1766 = vmax.f32 %v1599, 0.0
        %v1767 = vmax.f32 %v1688, 0.0
        %v1768 = vmax.f32 %v1602, 0.0
        %v1769 = vmax.f32 %v1691, 0.0
        %v1770 = vmax.f32 %v1604, 0.0
        %v1771 = vmax.f32 %v1693, 0.0
        %v1772 = vmax.f32 %v1607, 0.0
        %v1773 = vmax.f32 %v1696, 0.0
        %v1774 = vmax.f32 %v1609, 0.0
        %v1775 = vmax.f32 %v1698, 0.0
        %v1776 = vmax.f32 %v1612, 0.0
        %v1777 = vmax.f32 %v1701, 0.0
        %v1778 = vmax.f32 %v1614, 0.0
        %v1779 = vmax.f32 %v1703, 0.0
        %v1780 = vmax.f32 %v1617, 0.0
        %v1781 = vmax.f32 %v1706, 0.0
        %v1782 = vmax.f32 %v1619, 0.0
        %v1783 = vmax.f32 %v1708, 0.0
        %v1784 = vmax.f32 %v1622, 0.0
        %v1785 = vmax.f32 %v1711, 0.0
        %v1786 = vmax.f32 %v1624, 0.0
        %v1787 = vmax.f32 %v1713, 0.0
        %v1788 = vmax.f32 %v1627, 0.0
        %v1789 = vmax.f32 %v1716, 0.0
        %v1790 = vmax.f32 %v1629, 0.0
        %v1791 = vmax.f32 %v1718, 0.0
        %v1792 = vmax.f32 %v1632, 0.0
        %v1793 = vmax.f32 %v1721, 0.0
        %v1794 = vmax.f32 %v1634, 0.0
        %v1795 = vmax.f32 %v1723, 0.0
        %v1796 = vmax.f32 %v1637, 0.0
        %v1797 = vmax.f32 %v1726, 0.0
        %v1798 = vmax.f32 %v1639, 0.0
        %v1799 = vmax.f32 %v1728, 0.0
        %v1800 = vmax.f32 %v1642, 0.0
        %v1801 = vmax.f32 %v1731, 0.0
        %v1802 = vmax.f32 %v1644, 0.0
        %v1803 = vmax.f32 %v1733, 0.0
        %v1804 = vmax.f32 %v1647, 0.0
        %v1805 = vmax.f32 %v1736, 0.0
        %v1806 = vmax.f32 %v1649, 0.0
        %v1807 = vmax.f32 %v1738, 0.0
        %v1808 = vmax.f32 %v1652, 0.0
        %v1809 = vmax.f32 %v1741, 0.0
        %v1810 = vmax.f32 %v1654, 0.0
        %v1811 = vmax.f32 %v1743, 0.0
        %v1812 = vmax.f32 %v1657, 0.0
        %v1813 = vmax.f32 %v1746, 0.0
        %v1814 = vmax.f32 %v1659, 0.0
        %v1815 = vmax.f32 %v1748, 0.0
        %v1816 = vmax.f32 %v1662, 0.0
        %v1817 = vmax.f32 %v1751, 0.0
        %v1818 = vmax.f32 %v1664, 0.0
        %v1819 = vmax.f32 %v1753, 0.0
        %v1820 = vmax.f32 %v1667, 0.0
        %v1821 = vmax.f32 %v1756, 0.0
        %v1822 = vmax.f32 %v1669, 0.0
        %v1823 = vmax.f32 %v1758, 0.0
        %v1824 = vpack.c.bf16 %v1761, %v1760
        %v1825 = vpack.c.bf16 %v1763, %v1762
        %v1826 = vpack.c.bf16 %v1765, %v1764
        %v1827 = vpack.c.bf16 %v1767, %v1766
        %v1828 = vpack.c.bf16 %v1769, %v1768
        %v1829 = vpack.c.bf16 %v1771, %v1770
        %v1830 = vpack.c.bf16 %v1773, %v1772
        %v1831 = vpack.c.bf16 %v1775, %v1774
        %v1832 = vpack.c.bf16 %v1777, %v1776
        %v1833 = vpack.c.bf16 %v1779, %v1778
        %v1834 = vpack.c.bf16 %v1781, %v1780
        %v1835 = vpack.c.bf16 %v1783, %v1782
        %v1836 = vpack.c.bf16 %v1785, %v1784
        %v1837 = vpack.c.bf16 %v1787, %v1786
        %v1838 = vpack.c.bf16 %v1789, %v1788
        %v1839 = vpack.c.bf16 %v1791, %v1790
        %v1840 = vpack.c.bf16 %v1793, %v1792
        %v1841 = vpack.c.bf16 %v1795, %v1794
        %v1842 = vpack.c.bf16 %v1797, %v1796
        %v1843 = vpack.c.bf16 %v1799, %v1798
        %v1844 = vpack.c.bf16 %v1801, %v1800
        %v1845 = vpack.c.bf16 %v1803, %v1802
        %v1846 = vpack.c.bf16 %v1805, %v1804
        %v1847 = vpack.c.bf16 %v1807, %v1806
        %v1848 = vpack.c.bf16 %v1809, %v1808
        %v1849 = vpack.c.bf16 %v1811, %v1810
        %v1850 = vpack.c.bf16 %v1813, %v1812
        %v1851 = vpack.c.bf16 %v1815, %v1814
        %v1852 = vpack.c.bf16 %v1817, %v1816
        %v1853 = vpack.c.bf16 %v1819, %v1818
        %v1854 = vpack.c.bf16 %v1821, %v1820
        %v1855 = vpack.c.bf16 %v1823, %v1822
        %v1856 = vunpack.c.l.bf16 %v1824
        %v1857 = vunpack.c.h.bf16 %v1824
        %v1858 = vunpack.c.l.bf16 %v1825
        %v1859 = vunpack.c.h.bf16 %v1825
        %v1860 = vunpack.c.l.bf16 %v1826
        %v1861 = vunpack.c.h.bf16 %v1826
        %v1862 = vunpack.c.l.bf16 %v1827
        %v1863 = vunpack.c.h.bf16 %v1827
        %v1864 = vunpack.c.l.bf16 %v1828
        %v1865 = vunpack.c.h.bf16 %v1828
        %v1866 = vunpack.c.l.bf16 %v1829
        %v1867 = vunpack.c.h.bf16 %v1829
        %v1868 = vunpack.c.l.bf16 %v1830
        %v1869 = vunpack.c.h.bf16 %v1830
        %v1870 = vunpack.c.l.bf16 %v1831
        %v1871 = vunpack.c.h.bf16 %v1831
        %v1872 = vunpack.c.l.bf16 %v1832
        %v1873 = vunpack.c.h.bf16 %v1832
        %v1874 = vunpack.c.l.bf16 %v1833
        %v1875 = vunpack.c.h.bf16 %v1833
        %v1876 = vunpack.c.l.bf16 %v1834
        %v1877 = vunpack.c.h.bf16 %v1834
        %v1878 = vunpack.c.l.bf16 %v1835
        %v1879 = vunpack.c.h.bf16 %v1835
        %v1880 = vunpack.c.l.bf16 %v1836
        %v1881 = vunpack.c.h.bf16 %v1836
        %v1882 = vunpack.c.l.bf16 %v1837
        %v1883 = vunpack.c.h.bf16 %v1837
        %v1884 = vunpack.c.l.bf16 %v1838
        %v1885 = vunpack.c.h.bf16 %v1838
        %v1886 = vunpack.c.l.bf16 %v1839
        %v1887 = vunpack.c.h.bf16 %v1839
        %v1888 = vunpack.c.l.bf16 %v1840
        %v1889 = vunpack.c.h.bf16 %v1840
        %v1890 = vunpack.c.l.bf16 %v1841
        %v1891 = vunpack.c.h.bf16 %v1841
        %v1892 = vunpack.c.l.bf16 %v1842
        %v1893 = vunpack.c.h.bf16 %v1842
        %v1894 = vunpack.c.l.bf16 %v1843
        %v1895 = vunpack.c.h.bf16 %v1843
        %v1896 = vunpack.c.l.bf16 %v1844
        %v1897 = vunpack.c.h.bf16 %v1844
        %v1898 = vunpack.c.l.bf16 %v1845
        %v1899 = vunpack.c.h.bf16 %v1845
        %v1900 = vunpack.c.l.bf16 %v1846
        %v1901 = vunpack.c.h.bf16 %v1846
        %v1902 = vunpack.c.l.bf16 %v1847
        %v1903 = vunpack.c.h.bf16 %v1847
        %v1904 = vunpack.c.l.bf16 %v1848
        %v1905 = vunpack.c.h.bf16 %v1848
        %v1906 = vunpack.c.l.bf16 %v1849
        %v1907 = vunpack.c.h.bf16 %v1849
        %v1908 = vunpack.c.l.bf16 %v1850
        %v1909 = vunpack.c.h.bf16 %v1850
        %v1910 = vunpack.c.l.bf16 %v1851
        %v1911 = vunpack.c.h.bf16 %v1851
        %v1912 = vunpack.c.l.bf16 %v1852
        %v1913 = vunpack.c.h.bf16 %v1852
        %v1914 = vunpack.c.l.bf16 %v1853
        %v1915 = vunpack.c.h.bf16 %v1853
        %v1916 = vunpack.c.l.bf16 %v1854
        %v1917 = vunpack.c.h.bf16 %v1854
        %v1918 = vunpack.c.l.bf16 %v1855
        %v1919 = vunpack.c.h.bf16 %v1855
        %v1920 = vmax.f32 %v1856, %v1858
        %v1921 = vmax.f32 %v1920, %v1860
        %v1922 = vmax.f32 %v1921, %v1862
        %v1923 = vrot.slane %v1922, 4
        %v1924 = vmax.f32 %v1922, %v1923
        %v1925 = vrot.slane %v1924, 2
        %v1926 = vmax.f32 %v1924, %v1925
        %v1927 = vrot.slane %v1926, 1
        %v1928 = vmax.f32 %v1926, %v1927
        %v1929 = vmax.f32 %v1857, %v1859
        %v1930 = vmax.f32 %v1929, %v1861
        %v1931 = vmax.f32 %v1930, %v1863
        %v1932 = vrot.slane %v1931, 4
        %v1933 = vmax.f32 %v1931, %v1932
        %v1934 = vrot.slane %v1933, 2
        %v1935 = vmax.f32 %v1933, %v1934
        %v1936 = vrot.slane %v1935, 1
        %v1937 = vmax.f32 %v1935, %v1936
        %v1938 = vmax.f32 %v1864, %v1866
        %v1939 = vmax.f32 %v1938, %v1868
        %v1940 = vmax.f32 %v1939, %v1870
        %v1941 = vrot.slane %v1940, 4
        %v1942 = vmax.f32 %v1940, %v1941
        %v1943 = vrot.slane %v1942, 2
        %v1944 = vmax.f32 %v1942, %v1943
        %v1945 = vrot.slane %v1944, 1
        %v1946 = vmax.f32 %v1944, %v1945
        %v1947 = vmax.f32 %v1865, %v1867
        %v1948 = vmax.f32 %v1947, %v1869
        %v1949 = vmax.f32 %v1948, %v1871
        %v1950 = vrot.slane %v1949, 4
        %v1951 = vmax.f32 %v1949, %v1950
        %v1952 = vrot.slane %v1951, 2
        %v1953 = vmax.f32 %v1951, %v1952
        %v1954 = vrot.slane %v1953, 1
        %v1955 = vmax.f32 %v1953, %v1954
        %v1956 = vmax.f32 %v1872, %v1874
        %v1957 = vmax.f32 %v1956, %v1876
        %v1958 = vmax.f32 %v1957, %v1878
        %v1959 = vrot.slane %v1958, 4
        %v1960 = vmax.f32 %v1958, %v1959
        %v1961 = vrot.slane %v1960, 2
        %v1962 = vmax.f32 %v1960, %v1961
        %v1963 = vrot.slane %v1962, 1
        %v1964 = vmax.f32 %v1962, %v1963
        %v1965 = vmax.f32 %v1873, %v1875
        %v1966 = vmax.f32 %v1965, %v1877
        %v1967 = vmax.f32 %v1966, %v1879
        %v1968 = vrot.slane %v1967, 4
        %v1969 = vmax.f32 %v1967, %v1968
        %v1970 = vrot.slane %v1969, 2
        %v1971 = vmax.f32 %v1969, %v1970
        %v1972 = vrot.slane %v1971, 1
        %v1973 = vmax.f32 %v1971, %v1972
        %v1974 = vmax.f32 %v1880, %v1882
        %v1975 = vmax.f32 %v1974, %v1884
        %v1976 = vmax.f32 %v1975, %v1886
        %v1977 = vrot.slane %v1976, 4
        %v1978 = vmax.f32 %v1976, %v1977
        %v1979 = vrot.slane %v1978, 2
        %v1980 = vmax.f32 %v1978, %v1979
        %v1981 = vrot.slane %v1980, 1
        %v1982 = vmax.f32 %v1980, %v1981
        %v1983 = vmax.f32 %v1881, %v1883
        %v1984 = vmax.f32 %v1983, %v1885
        %v1985 = vmax.f32 %v1984, %v1887
        %v1986 = vrot.slane %v1985, 4
        %v1987 = vmax.f32 %v1985, %v1986
        %v1988 = vrot.slane %v1987, 2
        %v1989 = vmax.f32 %v1987, %v1988
        %v1990 = vrot.slane %v1989, 1
        %v1991 = vmax.f32 %v1989, %v1990
        %v1992 = vmax.f32 %v1888, %v1890
        %v1993 = vmax.f32 %v1992, %v1892
        %v1994 = vmax.f32 %v1993, %v1894
        %v1995 = vrot.slane %v1994, 4
        %v1996 = vmax.f32 %v1994, %v1995
        %v1997 = vrot.slane %v1996, 2
        %v1998 = vmax.f32 %v1996, %v1997
        %v1999 = vrot.slane %v1998, 1
        %v2000 = vmax.f32 %v1998, %v1999
        %v2001 = vmax.f32 %v1889, %v1891
        %v2002 = vmax.f32 %v2001, %v1893
        %v2003 = vmax.f32 %v2002, %v1895
        %v2004 = vrot.slane %v2003, 4
        %v2005 = vmax.f32 %v2003, %v2004
        %v2006 = vrot.slane %v2005, 2
        %v2007 = vmax.f32 %v2005, %v2006
        %v2008 = vrot.slane %v2007, 1
        %v2009 = vmax.f32 %v2007, %v2008
        %v2010 = vmax.f32 %v1896, %v1898
        %v2011 = vmax.f32 %v2010, %v1900
        %v2012 = vmax.f32 %v2011, %v1902
        %v2013 = vrot.slane %v2012, 4
        %v2014 = vmax.f32 %v2012, %v2013
        %v2015 = vrot.slane %v2014, 2
        %v2016 = vmax.f32 %v2014, %v2015
        %v2017 = vrot.slane %v2016, 1
        %v2018 = vmax.f32 %v2016, %v2017
        %v2019 = vmax.f32 %v1897, %v1899
        %v2020 = vmax.f32 %v2019, %v1901
        %v2021 = vmax.f32 %v2020, %v1903
        %v2022 = vrot.slane %v2021, 4
        %v2023 = vmax.f32 %v2021, %v2022
        %v2024 = vrot.slane %v2023, 2
        %v2025 = vmax.f32 %v2023, %v2024
        %v2026 = vrot.slane %v2025, 1
        %v2027 = vmax.f32 %v2025, %v2026
        %v2028 = vmax.f32 %v1904, %v1906
        %v2029 = vmax.f32 %v2028, %v1908
        %v2030 = vmax.f32 %v2029, %v1910
        %v2031 = vrot.slane %v2030, 4
        %v2032 = vmax.f32 %v2030, %v2031
        %v2033 = vrot.slane %v2032, 2
        %v2034 = vmax.f32 %v2032, %v2033
        %v2035 = vrot.slane %v2034, 1
        %v2036 = vmax.f32 %v2034, %v2035
        %v2037 = vmax.f32 %v1905, %v1907
        %v2038 = vmax.f32 %v2037, %v1909
        %v2039 = vmax.f32 %v2038, %v1911
        %v2040 = vrot.slane %v2039, 4
        %v2041 = vmax.f32 %v2039, %v2040
        %v2042 = vrot.slane %v2041, 2
        %v2043 = vmax.f32 %v2041, %v2042
        %v2044 = vrot.slane %v2043, 1
        %v2045 = vmax.f32 %v2043, %v2044
        %v2046 = vmax.f32 %v1912, %v1914
        %v2047 = vmax.f32 %v2046, %v1916
        %v2048 = vmax.f32 %v2047, %v1918
        %v2049 = vrot.slane %v2048, 4
        %v2050 = vmax.f32 %v2048, %v2049
        %v2051 = vrot.slane %v2050, 2
        %v2052 = vmax.f32 %v2050, %v2051
        %v2053 = vrot.slane %v2052, 1
        %v2054 = vmax.f32 %v2052, %v2053
        %v2055 = vmax.f32 %v1913, %v1915
        %v2056 = vmax.f32 %v2055, %v1917
        %v2057 = vmax.f32 %v2056, %v1919
        %v2058 = vrot.slane %v2057, 4
        %v2059 = vmax.f32 %v2057, %v2058
        %v2060 = vrot.slane %v2059, 2
        %v2061 = vmax.f32 %v2059, %v2060
        %v2062 = vrot.slane %v2061, 1
        %v2063 = vmax.f32 %v2061, %v2062
        %v2064 = vpack.c.bf16 %v1937, %v1928
        %v2065 = vpack.c.bf16 %v1955, %v1946
        %v2066 = vpack.c.bf16 %v1973, %v1964
        %v2067 = vpack.c.bf16 %v1991, %v1982
        %v2068 = vpack.c.bf16 %v2009, %v2000
        %v2069 = vpack.c.bf16 %v2027, %v2018
        %v2070 = vpack.c.bf16 %v2045, %v2036
        %v2071 = vpack.c.bf16 %v2063, %v2054
        %p2072 = scmp.eq.s32.totalorder %s42, 0
        // Predicated region
        $region178: #{tpu_custom_call.1} parent=132 // pred_check
          %p2073 = pneg %p2072
        $region179: #{tpu_custom_call.1} parent=132 // pred_check_branch
          %2075 = sbr.rel (%p2073) target = $region181
        $region180: #{tpu_custom_call.1} parent=132 // pred_region
          %2076 = vst [vmem:[#allocation2] sm:$0xff] 0
        $region181: #{tpu_custom_call.1} parent=132 // pred_fallthru
          _
        %v2077 = vld [vmem:[#allocation2] sm:$0xff]
        %v2078 = vunpack.c.l.bf16 %v2077
        %v2079 = vunpack.c.h.bf16 %v2077
        %v2080 = vunpack.c.l.bf16 %v2064
        %v2081 = vunpack.c.h.bf16 %v2064
        %v2082 = vunpack.c.l.bf16 %v2065
        %v2083 = vunpack.c.h.bf16 %v2065
        %v2084 = vunpack.c.l.bf16 %v2066
        %v2085 = vunpack.c.h.bf16 %v2066
        %v2086 = vunpack.c.l.bf16 %v2067
        %v2087 = vunpack.c.h.bf16 %v2067
        %v2088 = vunpack.c.l.bf16 %v2068
        %v2089 = vunpack.c.h.bf16 %v2068
        %v2090 = vunpack.c.l.bf16 %v2069
        %v2091 = vunpack.c.h.bf16 %v2069
        %v2092 = vunpack.c.l.bf16 %v2070
        %v2093 = vunpack.c.h.bf16 %v2070
        %v2094 = vunpack.c.l.bf16 %v2071
        %v2095 = vunpack.c.h.bf16 %v2071
        %vm2112 = vcmask 1041409
        %v2113 = vsel %vm2112, %v2082, %v2080
        %vm2114 = vcmask 1042434
        %v2115 = vsel %vm2114, %v2084, %v2113
        %vm2116 = vcmask 1043459
        %v2117 = vsel %vm2116, %v2086, %v2115
        %vm2118 = vcmask 1044484
        %v2119 = vsel %vm2118, %v2088, %v2117
        %vm2120 = vcmask 1045509
        %v2121 = vsel %vm2120, %v2090, %v2119
        %vm2122 = vcmask 1046534
        %v2123 = vsel %vm2122, %v2092, %v2121
        %vm2124 = vcmask 1047559
        %v2125 = vsel %vm2124, %v2094, %v2123
        %v2126 = vsel %vm2112, %v2083, %v2081
        %v2127 = vsel %vm2114, %v2085, %v2126
        %v2128 = vsel %vm2116, %v2087, %v2127
        %v2129 = vsel %vm2118, %v2089, %v2128
        %v2130 = vsel %vm2120, %v2091, %v2129
        %v2131 = vsel %vm2122, %v2093, %v2130
        %v2132 = vsel %vm2124, %v2095, %v2131
        %v2135 = vmax.f32 %v2078, %v2125
        %v2136 = vmax.f32 %v2079, %v2132
        %v2137 = vpack.c.bf16 %v2136, %v2135
        %2138 = vst [vmem:[#allocation2] sm:$0xff] %v2137
        %p2139 = scmp.eq.s32.totalorder %s42, 2
        // Predicated region
        $region182: #{tpu_custom_call.1} parent=132 // pred_check
          %p2140 = pneg %p2139
        $region183: #{tpu_custom_call.1} parent=132 // pred_check_branch
          %2142 = sbr.rel (%p2140) target = $region185
        $region184: #{tpu_custom_call.1} parent=132 // pred_region
          %v2143 = vld [vmem:[%s953] sm:$0xf]
          %v2144 = vld [vmem:[%s2] sm:$0xf]
          %v2146 = vsel %vm1068, %v2143, 0
          %v2149 = vsel %vm1117, %v2144, 0
          %2151 = vmatpush.bf16.msra.mxu0 0
          %2152 = vmatpush.bf16.msra.mxu0 0
          %2153 = vmatpush.bf16.msra.mxu0 0
          %2154 = vmatpush.bf16.msra.mxu0 0
          %2155 = vmatpush.bf16.msra.mxu0 0
          %2156 = vmatpush.bf16.msra.mxu0 0
          %2157 = vmatpush.bf16.msra.mxu0 0
          %2158 = vmatpush.bf16.msra.mxu0 %v2149
          %2159 = vmatmul.bf16.gmra.mxu0 %v2146
          %v2160 = vpop.f32.mrf.mxu0
          %v2161 = vadd.f32 0.0, %v2160
          %v2162 = vpop.f32.mrf.mxu0
          %2163 = vdwg.mxu0
          %v2164 = vmax.f32 %v2161, 0.0
          %v2165 = vpack.c.bf16 %v2164, %v2164
          %v2166 = vld [vmem:[#allocation4] sm:$0xf]
          %v2167 = vld [vmem:[#allocation4 + $0x4] sm:$0xf]
          %v2168 = vld [vmem:[#allocation4 + $0x8] sm:$0xf]
          %v2169 = vld [vmem:[#allocation4 + $0xc] sm:$0xf]
          %v2170 = vld [vmem:[#allocation7] sm:$0x1]
          %v2172 = vperm.slane %v2170, 0
          %v2178 = vunpack.c.l.b16 %v2166
          %v2179 = vunpack.c.l.b16 %v2167
          %v2180 = vunpack.c.l.b16 %v2168
          %v2181 = vunpack.c.l.b16 %v2169
          %v2182 = vpack.c.b16 %v2179, %v2178
          %v2183 = vpack.c.b16 %v2181, %v2180
          %vm2186 = vcmask 261120
          %v2188 = vsel %vm2186, %v2165, 0
          %2190 = vmatpush.bf16.msra.mxu0 0
          %2191 = vmatpush.bf16.msra.mxu0 0
          %2192 = vmatpush.bf16.msra.mxu0 0
          %2193 = vmatpush.bf16.msra.mxu0 0
          %2194 = vmatpush.bf16.msra.mxu0 0
          %2195 = vmatpush.bf16.msra.mxu0 0
          %2196 = vmatpush.bf16.msra.mxu0 %v2183
          %2197 = vmatpush.bf16.msra.mxu0 %v2182
          %2198 = vmatmul.bf16.gmra.mxu0 %v2188
          %v2199 = vpop.f32.mrf.mxu0
          %v2200 = vadd.f32 %v2172, %v2199
          %v2201 = vpop.f32.mrf.mxu0
          %2202 = vdwg.mxu0
          %v2203 = vmax.f32 %v2200, 0.0
          %v2204 = vpack.c.bf16 %v2203, %v2203
          %v2205 = vld [vmem:[#allocation2] sm:$0xff]
          %v2206 = vld [vmem:[#allocation12] sm:$0xff]
          %v2207 = vld [vmem:[#allocation12 + $0x8] sm:$0xff]
          %v2208 = vld [vmem:[#allocation12 + $0x10] sm:$0xff]
          %v2209 = vld [vmem:[#allocation12 + $0x18] sm:$0xff]
          %v2210 = vld [vmem:[#allocation12 + $0x20] sm:$0xff]
          %v2211 = vld [vmem:[#allocation12 + $0x28] sm:$0xff]
          %v2212 = vld [vmem:[#allocation12 + $0x30] sm:$0xff]
          %v2213 = vld [vmem:[#allocation12 + $0x38] sm:$0xff]
          %v2214 = vld [vmem:[%s11] sm:$0xff]
          %v2215 = vld [vmem:[%s11 + $0x8] sm:$0xff]
          %v2216 = vld [vmem:[%s11 + $0x10] sm:$0xff]
          %v2217 = vld [vmem:[%s11 + $0x18] sm:$0xff]
          %v2218 = vld [vmem:[%s11 + $0x20] sm:$0xff]
          %v2219 = vld [vmem:[%s11 + $0x28] sm:$0xff]
          %v2220 = vld [vmem:[%s11 + $0x30] sm:$0xff]
          %v2221 = vld [vmem:[%s11 + $0x38] sm:$0xff]
          %v2222 = vld [vmem:[%s11 + $0x40] sm:$0xff]
          %v2223 = vld [vmem:[%s11 + $0x48] sm:$0xff]
          %v2224 = vld [vmem:[%s11 + $0x50] sm:$0xff]
          %v2225 = vld [vmem:[%s11 + $0x58] sm:$0xff]
          %v2226 = vld [vmem:[%s11 + $0x60] sm:$0xff]
          %v2227 = vld [vmem:[%s11 + $0x68] sm:$0xff]
          %v2228 = vld [vmem:[%s11 + $0x70] sm:$0xff]
          %v2229 = vld [vmem:[%s11 + $0x78] sm:$0xff]
          %v2230 = vld [vmem:[%s11 + $0x80] sm:$0xff]
          %v2231 = vld [vmem:[%s11 + $0x88] sm:$0xff]
          %v2232 = vld [vmem:[%s11 + $0x90] sm:$0xff]
          %v2233 = vld [vmem:[%s11 + $0x98] sm:$0xff]
          %v2234 = vld [vmem:[%s11 + $0xa0] sm:$0xff]
          %v2235 = vld [vmem:[%s11 + $0xa8] sm:$0xff]
          %v2236 = vld [vmem:[%s11 + $0xb0] sm:$0xff]
          %v2237 = vld [vmem:[%s11 + $0xb8] sm:$0xff]
          %v2238 = vld [vmem:[%s11 + $0xc0] sm:$0xff]
          %v2239 = vld [vmem:[%s11 + $0xc8] sm:$0xff]
          %v2240 = vld [vmem:[%s11 + $0xd0] sm:$0xff]
          %v2241 = vld [vmem:[%s11 + $0xd8] sm:$0xff]
          %v2242 = vld [vmem:[%s11 + $0xe0] sm:$0xff]
          %v2243 = vld [vmem:[%s11 + $0xe8] sm:$0xff]
          %v2244 = vld [vmem:[%s11 + $0xf0] sm:$0xff]
          %v2245 = vld [vmem:[%s11 + $0xf8] sm:$0xff]
          %v2247 = vunpack.c.l.b16 %v2205
          %v2248 = vunpack.c.h.b16 %v2205
          %v2249 = vpack.c.b16 %v2247, %v2247
          %v2250 = vpack.c.b16 %v2248, %v2248
          %v2285 = vunpack.c.l.b16 %v2214
          %v2286 = vunpack.c.h.b16 %v2214
          %v2287 = vunpack.c.l.b16 %v2215
          %v2288 = vunpack.c.h.b16 %v2215
          %v2289 = vunpack.c.l.b16 %v2216
          %v2290 = vunpack.c.h.b16 %v2216
          %v2291 = vunpack.c.l.b16 %v2217
          %v2292 = vunpack.c.h.b16 %v2217
          %v2293 = vunpack.c.l.b16 %v2218
          %v2294 = vunpack.c.h.b16 %v2218
          %v2295 = vunpack.c.l.b16 %v2219
          %v2296 = vunpack.c.h.b16 %v2219
          %v2297 = vunpack.c.l.b16 %v2220
          %v2298 = vunpack.c.h.b16 %v2220
          %v2299 = vunpack.c.l.b16 %v2221
          %v2300 = vunpack.c.h.b16 %v2221
          %v2301 = vunpack.c.l.b16 %v2222
          %v2302 = vunpack.c.h.b16 %v2222
          %v2303 = vunpack.c.l.b16 %v2223
          %v2304 = vunpack.c.h.b16 %v2223
          %v2305 = vunpack.c.l.b16 %v2224
          %v2306 = vunpack.c.h.b16 %v2224
          %v2307 = vunpack.c.l.b16 %v2225
          %v2308 = vunpack.c.h.b16 %v2225
          %v2309 = vunpack.c.l.b16 %v2226
          %v2310 = vunpack.c.h.b16 %v2226
          %v2311 = vunpack.c.l.b16 %v2227
          %v2312 = vunpack.c.h.b16 %v2227
          %v2313 = vunpack.c.l.b16 %v2228
          %v2314 = vunpack.c.h.b16 %v2228
          %v2315 = vunpack.c.l.b16 %v2229
          %v2316 = vunpack.c.h.b16 %v2229
          %v2317 = vunpack.c.l.b16 %v2230
          %v2318 = vunpack.c.h.b16 %v2230
          %v2319 = vunpack.c.l.b16 %v2231
          %v2320 = vunpack.c.h.b16 %v2231
          %v2321 = vunpack.c.l.b16 %v2232
          %v2322 = vunpack.c.h.b16 %v2232
          %v2323 = vunpack.c.l.b16 %v2233
          %v2324 = vunpack.c.h.b16 %v2233
          %v2325 = vunpack.c.l.b16 %v2234
          %v2326 = vunpack.c.h.b16 %v2234
          %v2327 = vunpack.c.l.b16 %v2235
          %v2328 = vunpack.c.h.b16 %v2235
          %v2329 = vunpack.c.l.b16 %v2236
          %v2330 = vunpack.c.h.b16 %v2236
          %v2331 = vunpack.c.l.b16 %v2237
          %v2332 = vunpack.c.h.b16 %v2237
          %v2333 = vunpack.c.l.b16 %v2238
          %v2334 = vunpack.c.h.b16 %v2238
          %v2335 = vunpack.c.l.b16 %v2239
          %v2336 = vunpack.c.h.b16 %v2239
          %v2337 = vunpack.c.l.b16 %v2240
          %v2338 = vunpack.c.h.b16 %v2240
          %v2339 = vunpack.c.l.b16 %v2241
          %v2340 = vunpack.c.h.b16 %v2241
          %v2341 = vunpack.c.l.b16 %v2242
          %v2342 = vunpack.c.h.b16 %v2242
          %v2343 = vunpack.c.l.b16 %v2243
          %v2344 = vunpack.c.h.b16 %v2243
          %v2345 = vunpack.c.l.b16 %v2244
          %v2346 = vunpack.c.h.b16 %v2244
          %v2347 = vunpack.c.l.b16 %v2245
          %v2348 = vunpack.c.h.b16 %v2245
          %v2349 = vpack.c.b16 %v2287, %v2285
          %v2350 = vpack.c.b16 %v2288, %v2286
          %v2351 = vpack.c.b16 %v2291, %v2289
          %v2352 = vpack.c.b16 %v2292, %v2290
          %v2353 = vpack.c.b16 %v2295, %v2293
          %v2354 = vpack.c.b16 %v2296, %v2294
          %v2355 = vpack.c.b16 %v2299, %v2297
          %v2356 = vpack.c.b16 %v2300, %v2298
          %v2357 = vpack.c.b16 %v2303, %v2301
          %v2358 = vpack.c.b16 %v2304, %v2302
          %v2359 = vpack.c.b16 %v2307, %v2305
          %v2360 = vpack.c.b16 %v2308, %v2306
          %v2361 = vpack.c.b16 %v2311, %v2309
          %v2362 = vpack.c.b16 %v2312, %v2310
          %v2363 = vpack.c.b16 %v2315, %v2313
          %v2364 = vpack.c.b16 %v2316, %v2314
          %v2365 = vpack.c.b16 %v2319, %v2317
          %v2366 = vpack.c.b16 %v2320, %v2318
          %v2367 = vpack.c.b16 %v2323, %v2321
          %v2368 = vpack.c.b16 %v2324, %v2322
          %v2369 = vpack.c.b16 %v2327, %v2325
          %v2370 = vpack.c.b16 %v2328, %v2326
          %v2371 = vpack.c.b16 %v2331, %v2329
          %v2372 = vpack.c.b16 %v2332, %v2330
          %v2373 = vpack.c.b16 %v2335, %v2333
          %v2374 = vpack.c.b16 %v2336, %v2334
          %v2375 = vpack.c.b16 %v2339, %v2337
          %v2376 = vpack.c.b16 %v2340, %v2338
          %v2377 = vpack.c.b16 %v2343, %v2341
          %v2378 = vpack.c.b16 %v2344, %v2342
          %v2379 = vpack.c.b16 %v2347, %v2345
          %v2380 = vpack.c.b16 %v2348, %v2346
          %2413 = vmatpush.bf16.msra.mxu0 %v2363
          %2414 = vmatpush.bf16.msra.mxu0 %v2361
          %2415 = vmatpush.bf16.msra.mxu0 %v2359
          %2416 = vmatpush.bf16.msra.mxu0 %v2357
          %2417 = vmatpush.bf16.msra.mxu0 %v2355
          %2418 = vmatpush.bf16.msra.mxu0 %v2353
          %2419 = vmatpush.bf16.msra.mxu0 %v2351
          %2420 = vmatpush.bf16.msra.mxu0 %v2349
          %2421 = vmatmul.bf16.gmra.mxu0 %v2249
          %v2422 = vpop.f32.mrf.mxu0
          %v2423 = vadd.f32 0.0, %v2422
          %v2424 = vpop.f32.mrf.mxu0
          %2425 = vdwg.mxu0
          %2426 = vmatpush.bf16.msra.mxu0 %v2379
          %2427 = vmatpush.bf16.msra.mxu0 %v2377
          %2428 = vmatpush.bf16.msra.mxu0 %v2375
          %2429 = vmatpush.bf16.msra.mxu0 %v2373
          %2430 = vmatpush.bf16.msra.mxu0 %v2371
          %2431 = vmatpush.bf16.msra.mxu0 %v2369
          %2432 = vmatpush.bf16.msra.mxu0 %v2367
          %2433 = vmatpush.bf16.msra.mxu0 %v2365
          %2434 = vmatmul.bf16.gmra.mxu0 %v2250
          %v2435 = vpop.f32.mrf.mxu0
          %v2436 = vadd.f32 %v2423, %v2435
          %v2437 = vpop.f32.mrf.mxu0
          %2438 = vdwg.mxu0
          %2439 = vmatpush.bf16.msra.mxu0 %v2364
          %2440 = vmatpush.bf16.msra.mxu0 %v2362
          %2441 = vmatpush.bf16.msra.mxu0 %v2360
          %2442 = vmatpush.bf16.msra.mxu0 %v2358
          %2443 = vmatpush.bf16.msra.mxu0 %v2356
          %2444 = vmatpush.bf16.msra.mxu0 %v2354
          %2445 = vmatpush.bf16.msra.mxu0 %v2352
          %2446 = vmatpush.bf16.msra.mxu0 %v2350
          %2447 = vmatmul.bf16.gmra.mxu0 %v2249
          %v2448 = vpop.f32.mrf.mxu0
          %v2449 = vadd.f32 0.0, %v2448
          %v2450 = vpop.f32.mrf.mxu0
          %2451 = vdwg.mxu0
          %2452 = vmatpush.bf16.msra.mxu0 %v2380
          %2453 = vmatpush.bf16.msra.mxu0 %v2378
          %2454 = vmatpush.bf16.msra.mxu0 %v2376
          %2455 = vmatpush.bf16.msra.mxu0 %v2374
          %2456 = vmatpush.bf16.msra.mxu0 %v2372
          %2457 = vmatpush.bf16.msra.mxu0 %v2370
          %2458 = vmatpush.bf16.msra.mxu0 %v2368
          %2459 = vmatpush.bf16.msra.mxu0 %v2366
          %2460 = vmatmul.bf16.gmra.mxu0 %v2250
          %v2461 = vpop.f32.mrf.mxu0
          %v2462 = vadd.f32 %v2449, %v2461
          %v2463 = vpop.f32.mrf.mxu0
          %2464 = vdwg.mxu0
          %v2473 = vunpack.c.l.b16 %v2206
          %v2474 = vunpack.c.h.b16 %v2206
          %v2475 = vunpack.c.l.b16 %v2207
          %v2476 = vunpack.c.h.b16 %v2207
          %v2477 = vunpack.c.l.b16 %v2208
          %v2478 = vunpack.c.h.b16 %v2208
          %v2479 = vunpack.c.l.b16 %v2209
          %v2480 = vunpack.c.h.b16 %v2209
          %v2481 = vunpack.c.l.b16 %v2210
          %v2482 = vunpack.c.h.b16 %v2210
          %v2483 = vunpack.c.l.b16 %v2211
          %v2484 = vunpack.c.h.b16 %v2211
          %v2485 = vunpack.c.l.b16 %v2212
          %v2486 = vunpack.c.h.b16 %v2212
          %v2487 = vunpack.c.l.b16 %v2213
          %v2488 = vunpack.c.h.b16 %v2213
          %v2489 = vpack.c.b16 %v2475, %v2473
          %v2490 = vpack.c.b16 %v2476, %v2474
          %v2491 = vpack.c.b16 %v2479, %v2477
          %v2492 = vpack.c.b16 %v2480, %v2478
          %v2493 = vpack.c.b16 %v2483, %v2481
          %v2494 = vpack.c.b16 %v2484, %v2482
          %v2495 = vpack.c.b16 %v2487, %v2485
          %v2496 = vpack.c.b16 %v2488, %v2486
          %v2506 = vsel %vm1294, %v2204, 0
          %2508 = vmatpush.bf16.msra.mxu0 0
          %2509 = vmatpush.bf16.msra.mxu0 0
          %2510 = vmatpush.bf16.msra.mxu0 0
          %2511 = vmatpush.bf16.msra.mxu0 0
          %2512 = vmatpush.bf16.msra.mxu0 %v2495
          %2513 = vmatpush.bf16.msra.mxu0 %v2493
          %2514 = vmatpush.bf16.msra.mxu0 %v2491
          %2515 = vmatpush.bf16.msra.mxu0 %v2489
          %2516 = vmatmul.bf16.gmra.mxu0 %v2506
          %v2517 = vpop.f32.mrf.mxu0
          %v2518 = vadd.f32 %v2436, %v2517
          %v2519 = vpop.f32.mrf.mxu0
          %2520 = vdwg.mxu0
          %2521 = vmatpush.bf16.msra.mxu0 0
          %2522 = vmatpush.bf16.msra.mxu0 0
          %2523 = vmatpush.bf16.msra.mxu0 0
          %2524 = vmatpush.bf16.msra.mxu0 0
          %2525 = vmatpush.bf16.msra.mxu0 %v2496
          %2526 = vmatpush.bf16.msra.mxu0 %v2494
          %2527 = vmatpush.bf16.msra.mxu0 %v2492
          %2528 = vmatpush.bf16.msra.mxu0 %v2490
          %2529 = vmatmul.bf16.gmra.mxu0 %v2506
          %v2530 = vpop.f32.mrf.mxu0
          %v2531 = vadd.f32 %v2462, %v2530
          %v2532 = vpop.f32.mrf.mxu0
          %2533 = vdwg.mxu0
          %v2534 = vld [vmem:[#allocation13] sm:$0x3]
          %v2536 = vperm.slane %v2534, 0
          %v2537 = vperm.slane %v2534, 1
          %v2540 = vadd.f32 %v2518, %v2536
          %v2541 = vadd.f32 %v2531, %v2537
          %v2542 = vmax.f32 %v2540, 0.0
          %v2543 = vmax.f32 %v2541, 0.0
          %v2544 = vpack.c.bf16 %v2542, %v2542
          %v2545 = vpack.c.bf16 %v2543, %v2543
          %v2546 = vld [vmem:[#allocation15] sm:$0xf]
          %v2547 = vld [vmem:[#allocation15 + $0x4] sm:$0xf]
          %v2548 = vld [vmem:[#allocation15 + $0x8] sm:$0xf]
          %v2549 = vld [vmem:[#allocation15 + $0xc] sm:$0xf]
          %v2550 = vld [vmem:[#allocation15 + $0x10] sm:$0xf]
          %v2551 = vld [vmem:[#allocation15 + $0x14] sm:$0xf]
          %v2552 = vld [vmem:[#allocation15 + $0x18] sm:$0xf]
          %v2553 = vld [vmem:[#allocation15 + $0x1c] sm:$0xf]
          %v2554 = vld [vmem:[#allocation15 + $0x20] sm:$0xf]
          %v2555 = vld [vmem:[#allocation15 + $0x24] sm:$0xf]
          %v2556 = vld [vmem:[#allocation15 + $0x28] sm:$0xf]
          %v2557 = vld [vmem:[#allocation15 + $0x2c] sm:$0xf]
          %v2558 = vld [vmem:[#allocation15 + $0x30] sm:$0xf]
          %v2559 = vld [vmem:[#allocation15 + $0x34] sm:$0xf]
          %v2560 = vld [vmem:[#allocation15 + $0x38] sm:$0xf]
          %v2561 = vld [vmem:[#allocation15 + $0x3c] sm:$0xf]
          %v2562 = vld [vmem:[#allocation15 + $0x40] sm:$0xf]
          %v2563 = vld [vmem:[#allocation15 + $0x44] sm:$0xf]
          %v2564 = vld [vmem:[#allocation15 + $0x48] sm:$0xf]
          %v2565 = vld [vmem:[#allocation15 + $0x4c] sm:$0xf]
          %v2566 = vld [vmem:[#allocation15 + $0x50] sm:$0xf]
          %v2567 = vld [vmem:[#allocation15 + $0x54] sm:$0xf]
          %v2568 = vld [vmem:[#allocation15 + $0x58] sm:$0xf]
          %v2569 = vld [vmem:[#allocation15 + $0x5c] sm:$0xf]
          %v2570 = vld [vmem:[#allocation15 + $0x60] sm:$0xf]
          %v2571 = vld [vmem:[#allocation15 + $0x64] sm:$0xf]
          %v2572 = vld [vmem:[#allocation15 + $0x68] sm:$0xf]
          %v2573 = vld [vmem:[#allocation15 + $0x6c] sm:$0xf]
          %v2574 = vld [vmem:[#allocation15 + $0x70] sm:$0xf]
          %v2575 = vld [vmem:[#allocation15 + $0x74] sm:$0xf]
          %v2576 = vld [vmem:[#allocation15 + $0x78] sm:$0xf]
          %v2577 = vld [vmem:[#allocation15 + $0x7c] sm:$0xf]
          %v2578 = vld [vmem:[#allocation16] sm:$0x1]
          %v2580 = vperm.slane %v2578, 0
          %v2614 = vunpack.c.l.b16 %v2546
          %v2615 = vunpack.c.l.b16 %v2547
          %v2616 = vunpack.c.l.b16 %v2548
          %v2617 = vunpack.c.l.b16 %v2549
          %v2618 = vunpack.c.l.b16 %v2550
          %v2619 = vunpack.c.l.b16 %v2551
          %v2620 = vunpack.c.l.b16 %v2552
          %v2621 = vunpack.c.l.b16 %v2553
          %v2622 = vunpack.c.l.b16 %v2554
          %v2623 = vunpack.c.l.b16 %v2555
          %v2624 = vunpack.c.l.b16 %v2556
          %v2625 = vunpack.c.l.b16 %v2557
          %v2626 = vunpack.c.l.b16 %v2558
          %v2627 = vunpack.c.l.b16 %v2559
          %v2628 = vunpack.c.l.b16 %v2560
          %v2629 = vunpack.c.l.b16 %v2561
          %v2630 = vunpack.c.l.b16 %v2562
          %v2631 = vunpack.c.l.b16 %v2563
          %v2632 = vunpack.c.l.b16 %v2564
          %v2633 = vunpack.c.l.b16 %v2565
          %v2634 = vunpack.c.l.b16 %v2566
          %v2635 = vunpack.c.l.b16 %v2567
          %v2636 = vunpack.c.l.b16 %v2568
          %v2637 = vunpack.c.l.b16 %v2569
          %v2638 = vunpack.c.l.b16 %v2570
          %v2639 = vunpack.c.l.b16 %v2571
          %v2640 = vunpack.c.l.b16 %v2572
          %v2641 = vunpack.c.l.b16 %v2573
          %v2642 = vunpack.c.l.b16 %v2574
          %v2643 = vunpack.c.l.b16 %v2575
          %v2644 = vunpack.c.l.b16 %v2576
          %v2645 = vunpack.c.l.b16 %v2577
          %v2646 = vpack.c.b16 %v2615, %v2614
          %v2647 = vpack.c.b16 %v2617, %v2616
          %v2648 = vpack.c.b16 %v2619, %v2618
          %v2649 = vpack.c.b16 %v2621, %v2620
          %v2650 = vpack.c.b16 %v2623, %v2622
          %v2651 = vpack.c.b16 %v2625, %v2624
          %v2652 = vpack.c.b16 %v2627, %v2626
          %v2653 = vpack.c.b16 %v2629, %v2628
          %v2654 = vpack.c.b16 %v2631, %v2630
          %v2655 = vpack.c.b16 %v2633, %v2632
          %v2656 = vpack.c.b16 %v2635, %v2634
          %v2657 = vpack.c.b16 %v2637, %v2636
          %v2658 = vpack.c.b16 %v2639, %v2638
          %v2659 = vpack.c.b16 %v2641, %v2640
          %v2660 = vpack.c.b16 %v2643, %v2642
          %v2661 = vpack.c.b16 %v2645, %v2644
          %2678 = vmatpush.bf16.msra.mxu0 %v2653
          %2679 = vmatpush.bf16.msra.mxu0 %v2652
          %2680 = vmatpush.bf16.msra.mxu0 %v2651
          %2681 = vmatpush.bf16.msra.mxu0 %v2650
          %2682 = vmatpush.bf16.msra.mxu0 %v2649
          %2683 = vmatpush.bf16.msra.mxu0 %v2648
          %2684 = vmatpush.bf16.msra.mxu0 %v2647
          %2685 = vmatpush.bf16.msra.mxu0 %v2646
          %2686 = vmatmul.bf16.gmra.mxu0 %v2544
          %v2687 = vpop.f32.mrf.mxu0
          %v2688 = vadd.f32 %v2580, %v2687
          %v2689 = vpop.f32.mrf.mxu0
          %2690 = vdwg.mxu0
          %2691 = vmatpush.bf16.msra.mxu0 %v2661
          %2692 = vmatpush.bf16.msra.mxu0 %v2660
          %2693 = vmatpush.bf16.msra.mxu0 %v2659
          %2694 = vmatpush.bf16.msra.mxu0 %v2658
          %2695 = vmatpush.bf16.msra.mxu0 %v2657
          %2696 = vmatpush.bf16.msra.mxu0 %v2656
          %2697 = vmatpush.bf16.msra.mxu0 %v2655
          %2698 = vmatpush.bf16.msra.mxu0 %v2654
          %2699 = vmatmul.bf16.gmra.mxu0 %v2545
          %v2700 = vpop.f32.mrf.mxu0
          %v2701 = vadd.f32 %v2688, %v2700
          %v2702 = vpop.f32.mrf.mxu0
          %2703 = vdwg.mxu0
          %v2704 = vmax.f32 %v2701, 0.0
          %v2705 = vpack.c.bf16 %v2704, %v2704
          %v2706 = vld [vmem:[#allocation18] sm:$0xf]
          %v2707 = vld [vmem:[#allocation18 + $0x4] sm:$0xf]
          %v2708 = vld [vmem:[#allocation18 + $0x8] sm:$0xf]
          %v2709 = vld [vmem:[#allocation18 + $0xc] sm:$0xf]
          %v2710 = vld [vmem:[#allocation18 + $0x10] sm:$0xf]
          %v2711 = vld [vmem:[#allocation18 + $0x14] sm:$0xf]
          %v2712 = vld [vmem:[#allocation18 + $0x18] sm:$0xf]
          %v2713 = vld [vmem:[#allocation18 + $0x1c] sm:$0xf]
          %v2714 = vld [vmem:[#allocation18 + $0x20] sm:$0xf]
          %v2715 = vld [vmem:[#allocation18 + $0x24] sm:$0xf]
          %v2716 = vld [vmem:[#allocation18 + $0x28] sm:$0xf]
          %v2717 = vld [vmem:[#allocation18 + $0x2c] sm:$0xf]
          %v2718 = vld [vmem:[#allocation18 + $0x30] sm:$0xf]
          %v2719 = vld [vmem:[#allocation18 + $0x34] sm:$0xf]
          %v2720 = vld [vmem:[#allocation18 + $0x38] sm:$0xf]
          %v2721 = vld [vmem:[#allocation18 + $0x3c] sm:$0xf]
          %v2722 = vld [vmem:[%s16] sm:$0x1]
          %v2724 = vperm.slane %v2722, 0
          %v2742 = vunpack.c.l.b16 %v2706
          %v2743 = vunpack.c.l.b16 %v2707
          %v2744 = vunpack.c.l.b16 %v2708
          %v2745 = vunpack.c.l.b16 %v2709
          %v2746 = vunpack.c.l.b16 %v2710
          %v2747 = vunpack.c.l.b16 %v2711
          %v2748 = vunpack.c.l.b16 %v2712
          %v2749 = vunpack.c.l.b16 %v2713
          %v2750 = vunpack.c.l.b16 %v2714
          %v2751 = vunpack.c.l.b16 %v2715
          %v2752 = vunpack.c.l.b16 %v2716
          %v2753 = vunpack.c.l.b16 %v2717
          %v2754 = vunpack.c.l.b16 %v2718
          %v2755 = vunpack.c.l.b16 %v2719
          %v2756 = vunpack.c.l.b16 %v2720
          %v2757 = vunpack.c.l.b16 %v2721
          %v2758 = vpack.c.b16 %v2743, %v2742
          %v2759 = vpack.c.b16 %v2745, %v2744
          %v2760 = vpack.c.b16 %v2747, %v2746
          %v2761 = vpack.c.b16 %v2749, %v2748
          %v2762 = vpack.c.b16 %v2751, %v2750
          %v2763 = vpack.c.b16 %v2753, %v2752
          %v2764 = vpack.c.b16 %v2755, %v2754
          %v2765 = vpack.c.b16 %v2757, %v2756
          %2774 = vmatpush.bf16.msra.mxu0 %v2765
          %2775 = vmatpush.bf16.msra.mxu0 %v2764
          %2776 = vmatpush.bf16.msra.mxu0 %v2763
          %2777 = vmatpush.bf16.msra.mxu0 %v2762
          %2778 = vmatpush.bf16.msra.mxu0 %v2761
          %2779 = vmatpush.bf16.msra.mxu0 %v2760
          %2780 = vmatpush.bf16.msra.mxu0 %v2759
          %2781 = vmatpush.bf16.msra.mxu0 %v2758
          %2782 = vmatmul.bf16.gmra.mxu0 %v2705
          %v2783 = vpop.f32.mrf.mxu0
          %v2784 = vadd.f32 %v2724, %v2783
          %v2785 = vpop.f32.mrf.mxu0
          %2786 = vdwg.mxu0
          %v2787 = vmax.f32 %v2784, 0.0
          %v2788 = vpack.c.bf16 %v2787, %v2787
          %v2789 = vld [vmem:[#allocation19] sm:$0xf]
          %v2790 = vld [vmem:[#allocation19 + $0x4] sm:$0xf]
          %v2791 = vld [vmem:[#allocation19 + $0x8] sm:$0xf]
          %v2792 = vld [vmem:[#allocation19 + $0xc] sm:$0xf]
          %v2793 = vld [vmem:[#allocation19 + $0x10] sm:$0xf]
          %v2794 = vld [vmem:[#allocation19 + $0x14] sm:$0xf]
          %v2795 = vld [vmem:[#allocation19 + $0x18] sm:$0xf]
          %v2796 = vld [vmem:[#allocation19 + $0x1c] sm:$0xf]
          %v2797 = vld [vmem:[#allocation19 + $0x20] sm:$0xf]
          %v2798 = vld [vmem:[#allocation19 + $0x24] sm:$0xf]
          %v2799 = vld [vmem:[#allocation19 + $0x28] sm:$0xf]
          %v2800 = vld [vmem:[#allocation19 + $0x2c] sm:$0xf]
          %v2801 = vld [vmem:[#allocation19 + $0x30] sm:$0xf]
          %v2802 = vld [vmem:[#allocation19 + $0x34] sm:$0xf]
          %v2803 = vld [vmem:[#allocation19 + $0x38] sm:$0xf]
          %v2804 = vld [vmem:[#allocation19 + $0x3c] sm:$0xf]
          %v2805 = vld [vmem:[%s18] sm:$0x1]
          %v2807 = vperm.slane %v2805, 0
          %v2825 = vunpack.c.l.b16 %v2789
          %v2826 = vunpack.c.l.b16 %v2790
          %v2827 = vunpack.c.l.b16 %v2791
          %v2828 = vunpack.c.l.b16 %v2792
          %v2829 = vunpack.c.l.b16 %v2793
          %v2830 = vunpack.c.l.b16 %v2794
          %v2831 = vunpack.c.l.b16 %v2795
          %v2832 = vunpack.c.l.b16 %v2796
          %v2833 = vunpack.c.l.b16 %v2797
          %v2834 = vunpack.c.l.b16 %v2798
          %v2835 = vunpack.c.l.b16 %v2799
          %v2836 = vunpack.c.l.b16 %v2800
          %v2837 = vunpack.c.l.b16 %v2801
          %v2838 = vunpack.c.l.b16 %v2802
          %v2839 = vunpack.c.l.b16 %v2803
          %v2840 = vunpack.c.l.b16 %v2804
          %v2841 = vpack.c.b16 %v2826, %v2825
          %v2842 = vpack.c.b16 %v2828, %v2827
          %v2843 = vpack.c.b16 %v2830, %v2829
          %v2844 = vpack.c.b16 %v2832, %v2831
          %v2845 = vpack.c.b16 %v2834, %v2833
          %v2846 = vpack.c.b16 %v2836, %v2835
          %v2847 = vpack.c.b16 %v2838, %v2837
          %v2848 = vpack.c.b16 %v2840, %v2839
          %2857 = vmatpush.bf16.msra.mxu0 %v2848
          %2858 = vmatpush.bf16.msra.mxu0 %v2847
          %2859 = vmatpush.bf16.msra.mxu0 %v2846
          %2860 = vmatpush.bf16.msra.mxu0 %v2845
          %2861 = vmatpush.bf16.msra.mxu0 %v2844
          %2862 = vmatpush.bf16.msra.mxu0 %v2843
          %2863 = vmatpush.bf16.msra.mxu0 %v2842
          %2864 = vmatpush.bf16.msra.mxu0 %v2841
          %2865 = vmatmul.bf16.gmra.mxu0 %v2788
          %v2866 = vpop.f32.mrf.mxu0
          %v2867 = vadd.f32 %v2807, %v2866
          %v2868 = vpop.f32.mrf.mxu0
          %2869 = vdwg.mxu0
          %v2870 = vxor.u32 %v2867, 2147483648
          %v2871 = vmul.f32 %v2870, 1.442695
          %v2872 = vpow.pop %v2871
          %v2873 = vadd.f32 %v2872, 1.0
          %v2874 = vrcp.pop %v2873
          %v2875 = vmul.f32 %v2873, %v2874
          %v2876 = vsub.f32 1.0, %v2875
          %v2877 = vmul.f32 %v2874, %v2876
          %v2878 = vadd.f32 %v2874, %v2877
          %vm2879 = vweird.f32 %v2873
          %vm2880 = vweird.f32 %v2874
          %vm2881 = vmor %vm2879, %vm2880
          %v2882 = vsel %vm2881, %v2874, %v2878
          %v2883 = vand.u32 2147483647, %v2873
          %vm2884 = vcmp.eq.f32.partialorder %v2883, 8.507059e+37
          %v2885 = vand.u32 %v2873, 2147483648
          %v2886 = vor.u32 1.1754944e-38, %v2885
          %v2887 = vsel %vm2884, %v2886, %v2882
          %v2888 = vmul.f32 1.0, %v2887
          %2889 = vst [vmem:[#allocation21] sm:$0xff] %v2888
        $region185: #{tpu_custom_call.1} parent=132 // pred_fallthru
          _
        // Predicated region
        $region186: #{tpu_custom_call.1} parent=132 // pred_check
          %p2890 = pneg %p478
        $region187: #{tpu_custom_call.1} parent=132 // pred_check_branch
          %2892 = sbr.rel (%p2890) target = $region189
        $region188: #{tpu_custom_call.1} parent=132 // pred_region
          %2894 = vsyncadd [#allocation6], 0
          %s2895 = smul.addr %s41, 8
          %s2896 = scalar_lea.hbm %s19, %s2895
          %s2898 = sshll.u32 [#allocation21], 4
          %s2899 = int_to_ptr.vmem [resolvable:$true] %s2898
          %s2900 = sshll.u32 %s2896, 4
          %s2901 = int_to_ptr.hbm [resolvable:$true] %s2900
          %2903 = dma.vmem_to_hbm [thread:$0]  %s2899, 128, %s2901, [#allocation6]
        $region189: #{tpu_custom_call.1} parent=132 // pred_fallthru
          _
        // Predicated region
        $region190: #{tpu_custom_call.1} parent=132 // pred_check
          %p2904 = pneg %p478
        $region191: #{tpu_custom_call.1} parent=132 // pred_check_branch
          %2906 = sbr.rel (%p2904) target = $region193
        $region192: #{tpu_custom_call.1} parent=132 // pred_region
          %2908 = dma.done [#allocation6], 128
        $region193: #{tpu_custom_call.1} parent=132 // pred_fallthru
          _
      $region133: #{tpu_custom_call.1} parent=5 // pred_fallthru
        _
      %p2909 = scmp.le.s32.totalorder 2, %s32
      // Predicated region
      $region194: #{tpu_custom_call.1} parent=5 // pred_check
        %p2910 = pneg %p2909
      $region195: #{tpu_custom_call.1} parent=5 // pred_check_branch
        %2912 = sbr.rel (%p2910) target = $region197
      $region196: #{tpu_custom_call.1} parent=5 // pred_region
        %s2913 = ssub.s32 %s32, 2
      $region197: #{tpu_custom_call.1} parent=5 // pred_fallthru
        _
    $region6: #{tpu_custom_call.1} parent=1 // loop_footer
      %s36 = sadd.s32 1, %s32
    $region7: #{tpu_custom_call.1} parent=1 // loop_footer_branch
      %31 = sbr.rel target = $region3
    $region8: #{tpu_custom_call.1} parent=1 // loop_exit
      _
    %2914 = vsyncpa [#allocation5], 1
    %s2915 = scalar_lea.sflag [#allocation5], 1
    %2916 = vsyncpa %s2915, 1
    %2917 = vsyncpa [#allocation8], 1
    %2918 = vsyncpa [#allocation11], 1
    %2919 = vsyncpa [#allocation14], 1
    %2920 = vsyncpa [#allocation17], 1
    %2921 = vsyncpa [#allocation20], 1
    %2922 = vsyncpa [#allocation6], 1
    %s2923 = scalar_lea.sflag [#allocation6], 1
    %2924 = vsyncpa %s2923, 1

</llo_original>
